<compile_context>
chip_gen: v7x
topology: tpu7x:2x2x1
jax: 0.10.0
libtpu: 0.0.40
codegen_flags: <defaults>
</compile_context>

<pallas_src>
import functools

import jax
import jax.numpy as jnp
from jax import lax
from jax.experimental import pallas as pl
from jax.experimental.pallas import tpu as pltpu


# ==================================================================
# Kernel 1: fused transformer (encoder + decoder + fc1/fc2)
# ==================================================================
def _transformer_kernel(
        len_ref, img_ref, emb_ref, pos_ref, fc1_w, fc1_b,
        esa_w, esa_b, esa_wo, esa_bo, eff_w1, eff_b1, eff_w2, eff_b2,
        eln_g, eln_b,
        dsa_w, dsa_b, dsa_wo, dsa_bo, dca_w, dca_b, dca_wo, dca_bo,
        dff_w1, dff_b1, dff_w2, dff_b2, dln_g, dln_b,
        fc2_w, fc2_b, o_ref,
        *, B, S, L, E, nhead):
    f32 = jnp.float32
    Dh = E // nhead
    scale = 1.0 / (Dh ** 0.5)
    NEG = -1e9

    def mm(x, w):
        return jnp.dot(x, w, preferred_element_type=f32)

    def layer_norm(x, g, b):
        mu = jnp.mean(x, axis=-1, keepdims=True)
        var = jnp.mean((x - mu) ** 2, axis=-1, keepdims=True)
        return (x - mu) * lax.rsqrt(var + 1e-5) * g + b

    def softmax_rows(s):
        s = s - jnp.max(s, axis=-1, keepdims=True)
        p = jnp.exp(s)
        return p * pl.reciprocal(jnp.sum(p, axis=-1, keepdims=True), approx=True)

    def block_mask(Lq, Lk, causal, use_pad):
        # Additive mask over the flattened (B*Lq, B*Lk) score matrix:
        # 0 inside each batch's own block (subject to causal / key padding),
        # -1e9 elsewhere.  exp(-1e9 - max) underflows to exactly 0, so
        # cross-batch positions contribute nothing to the softmax.
        qi = lax.broadcasted_iota(jnp.int32, (B * Lq, B * Lk), 0)
        ki = lax.broadcasted_iota(jnp.int32, (B * Lq, B * Lk), 1)
        m = jnp.full((B * Lq, B * Lk), NEG, f32)
        for b in range(B):
            ok = ((qi >= b * Lq) & (qi < (b + 1) * Lq) &
                  (ki >= b * Lk) & (ki < (b + 1) * Lk))
            if causal:
                ok = ok & ((ki - b * Lk) <= (qi - b * Lq))
            if use_pad:
                ok = ok & ((ki - b * Lk) < len_ref[b])
            m = jnp.where(ok, 0.0, m)
        return m

    def mha(xq, xkv, w, bias, wo, bo, mask):
        # w: (3, nhead, E, Dh)  bias: (3, nhead, 1, Dh)
        # wo: (nhead, Dh, E)    bo: (1, E)
        acc = None
        for h in range(nhead):
            qh = mm(xq, w[0, h]) + bias[0, h]
            kh = mm(xkv, w[1, h]) + bias[1, h]
            vh = mm(xkv, w[2, h]) + bias[2, h]
            s = lax.dot_general(qh, kh, (((1,), (1,)), ((), ())),
                                preferred_element_type=f32) * scale + mask
            oh = mm(softmax_rows(s), vh)
            contrib = mm(oh, wo[h])          # == concat_h(o_h) @ Wo, head block h
            acc = contrib if acc is None else acc + contrib
        return acc + bo

    def ffn(x, w1, b1, w2, b2):
        return mm(jnp.maximum(mm(x, w1) + b1, 0.0), w2) + b2

    enc_mask = block_mask(S, S, causal=False, use_pad=False)
    dec_mask = block_mask(L, L, causal=True, use_pad=True)
    crs_mask = block_mask(L, S, causal=False, use_pad=False)

    # ---------------- encoder (1 layer + final norm, post-norm) ----------------
    x = mm(img_ref[...], fc1_w[...]) + fc1_b[...] + pos_ref[...]       # (B*S, E)
    eg, ebeta = eln_g[...], eln_b[...]
    a = mha(x, x, esa_w[...], esa_b[...], esa_wo[...], esa_bo[...], enc_mask)
    x = layer_norm(x + a, eg[0], ebeta[0])
    x = layer_norm(x + ffn(x, eff_w1[...], eff_b1[...], eff_w2[...], eff_b2[...]),
                   eg[1], ebeta[1])
    mem = layer_norm(x, eg[2], ebeta[2])                               # (B*S, E)

    # ---------------- decoder (1 layer + final norm, post-norm) ----------------
    y = emb_ref[...]                                                   # (B*L, E)
    dg, dbeta = dln_g[...], dln_b[...]
    a = mha(y, y, dsa_w[...], dsa_b[...], dsa_wo[...], dsa_bo[...], dec_mask)
    y = layer_norm(y + a, dg[0], dbeta[0])
    a = mha(y, mem, dca_w[...], dca_b[...], dca_wo[...], dca_bo[...], crs_mask)
    y = layer_norm(y + a, dg[1], dbeta[1])
    y = layer_norm(y + ffn(y, dff_w1[...], dff_b1[...], dff_w2[...], dff_b2[...]),
                   dg[2], dbeta[2])
    y = layer_norm(y, dg[3], dbeta[3])

    # Dropout(p=0.5) is identity at inference.
    o_ref[...] = mm(y, fc2_w[...]) + fc2_b[...]                        # (B*L, vocab)


def _transformer_call(lens, img2, emb2, pos2, p, *, B, S, L, E, nhead, vocab):
    enc, dec = p['enc_layer'], p['dec_layer']
    operands = [
        lens, img2, emb2, pos2, p['fc1_w'], p['fc1_b'],
        enc['sa_w'], enc['sa_b'], enc['sa_wo'], enc['sa_bo'],
        enc['ff_w1'], enc['ff_b1'], enc['ff_w2'], enc['ff_b2'],
        enc['ln_g'], enc['ln_b'],
        dec['sa_w'], dec['sa_b'], dec['sa_wo'], dec['sa_bo'],
        dec['ca_w'], dec['ca_b'], dec['ca_wo'], dec['ca_bo'],
        dec['ff_w1'], dec['ff_b1'], dec['ff_w2'], dec['ff_b2'],
        dec['ln_g'], dec['ln_b'],
        p['fc2_w'], p['fc2_b'],
    ]
    kern = functools.partial(_transformer_kernel, B=B, S=S, L=L, E=E, nhead=nhead)
    vmem = pl.BlockSpec(memory_space=pltpu.MemorySpace.VMEM)
    smem = pl.BlockSpec(memory_space=pltpu.MemorySpace.SMEM)
    return pl.pallas_call(
        kern,
        out_shape=jax.ShapeDtypeStruct((B * L, vocab), jnp.float32),
        in_specs=[smem] + [vmem] * (len(operands) - 1),
        out_specs=vmem,
    )(*operands)


# ==================================================================
# Kernel 2: Gumbel-softmax head + one-hot embedding + LSTM + chexpert attns
# ==================================================================
def _chexpert_kernel(len_ref, preds_ref, gum_ref, onehot_w,
                     wih_ref, bih_ref, whh_ref, bhh_ref,
                     va_ref, wc_ref, bc_ref, o_ref,
                     *, B, L, H, n_attn, n_cls, temperature, beta):
    f32 = jnp.float32

    def mm(x, w):
        return jnp.dot(x, w, preferred_element_type=f32)

    def sigmoid(x):
        return 1.0 / (1.0 + jnp.exp(-x))

    preds = preds_ref[...]                                   # (B*L, V)
    gum = gum_ref[...]                                       # (B*L, V)

    # log_softmax over the SEQUENCE axis (dim=1 of (B, L, V)), per batch block.
    row_i = lax.broadcasted_iota(jnp.int32, preds.shape, 0)
    lse_full = jnp.zeros_like(preds)
    for b in range(B):
        blk = preds[b * L:(b + 1) * L, :]                    # aligned sublane slice
        mmax = jnp.max(blk, axis=0, keepdims=True)
        lse = mmax + jnp.log(jnp.sum(jnp.exp(blk - mmax), axis=0, keepdims=True))
        in_blk = (row_i >= b * L) & (row_i < (b + 1) * L)
        lse_full = jnp.where(in_blk, lse, lse_full)
    logp = preds - lse_full

    # TODO(synk): gumbel_softmax() is not defined in the reference file; standard
    # soft Gumbel-softmax with beta-scaled noise over the vocab axis is used.
    z = (logp + beta * gum) * (1.0 / temperature)
    z = z - jnp.max(z, axis=-1, keepdims=True)
    pz = jnp.exp(z)
    one_hot = pz * pl.reciprocal(jnp.sum(pz, axis=-1, keepdims=True), approx=True)

    embs = mm(one_hot, onehot_w[...])                        # (B*L, E)

    wih, bih = wih_ref[...], bih_ref[...]                    # (4, E, H), (4, 1, H)
    whh, bhh = whh_ref[...], bhh_ref[...]                    # (4, H, H), (4, 1, H)
    va, wc, bc = va_ref[...], wc_ref[...], bc_ref[...]

    # Per-gate input projections for all timesteps at once (gate order i, f, g, o).
    xp = [mm(embs, wih[g]) + bih[g] + bhh[g] for g in range(4)]     # each (B*L, H)

    row_lh = lax.broadcasted_iota(jnp.int32, (L, H), 0)
    row_ac = lax.broadcasted_iota(jnp.int32, (n_attn, n_cls), 0)
    t_col = lax.broadcasted_iota(jnp.int32, (L, 1), 0)

    for b in range(B):
        xpb = [xp[g][b * L:(b + 1) * L, :] for g in range(4)]       # aligned (L, H)
        h = jnp.zeros((1, H), f32)
        c = jnp.zeros((1, H), f32)
        ob = jnp.zeros((L, H), f32)
        for t in range(L):                                   # unrolled recurrence
            sel = row_lh == t
            xt = [jnp.sum(jnp.where(sel, xpb[g], 0.0), axis=0, keepdims=True)
                  for g in range(4)]                         # row t of each gate
            i_g = sigmoid(xt[0] + mm(h, whh[0]))
            f_g = sigmoid(xt[1] + mm(h, whh[1]))
            g_g = jnp.tanh(xt[2] + mm(h, whh[2]))
            o_g = sigmoid(xt[3] + mm(h, whh[3]))
            c = f_g * c + i_g * g_g
            h = o_g * jnp.tanh(c)
            ob = jnp.where(sel, h, ob)                       # scatter row t

        lb = len_ref[b]
        yb = jnp.zeros((n_attn, n_cls), f32)
        for a in range(n_attn):                              # all chexpert heads
            sc = jnp.sum(ob * va[a], axis=-1, keepdims=True)         # (L, 1)
            sc = jnp.where(t_col >= lb, -1e9, sc)                    # mask pads
            sc = sc - jnp.max(sc, axis=0, keepdims=True)
            pa = jnp.exp(sc)
            alpha = pa * pl.reciprocal(jnp.sum(pa, axis=0, keepdims=True),
                                       approx=True)
            ctx = jnp.sum(alpha * ob, axis=0, keepdims=True)         # (1, H)
            ya = mm(ctx, wc[a]) + bc[a]                              # (1, n_cls)
            yb = jnp.where(row_ac == a, ya, yb)
        o_ref[b, :, :] = yb


def _chexpert_call(lens, preds2, gum2, onehot_w, cp, *, B, L, temperature, beta):
    H = cp['whh'].shape[-1]
    n_attn = cp['wc'].shape[0]
    n_cls = cp['wc'].shape[-1]
    operands = [lens, preds2, gum2, onehot_w,
                cp['wih'], cp['bih'], cp['whh'], cp['bhh'],
                cp['va'], cp['wc'], cp['bc']]
    kern = functools.partial(_chexpert_kernel, B=B, L=L, H=H, n_attn=n_attn,
                             n_cls=n_cls, temperature=float(temperature),
                             beta=float(beta))
    vmem = pl.BlockSpec(memory_space=pltpu.MemorySpace.VMEM)
    smem = pl.BlockSpec(memory_space=pltpu.MemorySpace.SMEM)
    return pl.pallas_call(
        kern,
        out_shape=jax.ShapeDtypeStruct((B, n_attn, n_cls), jnp.float32),
        in_specs=[smem] + [vmem] * (len(operands) - 1),
        out_specs=vmem,
    )(*operands)


# ==================================================================
# Full forward pass (mirrors TransformerGumbelModel.forward)
# ==================================================================
def forward(params, image, encoded_captions, caption_lengths, gumbel_key,
            temperature, beta, eval=False):
    B = image.shape[0]
    L = encoded_captions.shape[1]
    enc_dim = image.shape[-1]
    E = params['d_model']
    nhead = params['nhead']
    vocab = params['vocab']

    img3 = image.reshape(B, -1, enc_dim)
    S = img3.shape[1]
    img2 = img3.reshape(B * S, enc_dim)

    # embedding gather + decoder positional encoding (plain JAX glue)
    emb = params['embed_weight'][encoded_captions] + params['dec_pos'][:L]
    emb2 = emb.reshape(B * L, E)
    pos2 = jnp.tile(params['enc_pos'], (B, 1))               # (B*S, E)
    lens = caption_lengths.astype(jnp.int32)

    preds2 = _transformer_call(lens, img2, emb2, pos2, params,
                               B=B, S=S, L=L, E=E, nhead=nhead, vocab=vocab)
    preds = preds2.reshape(B, L, vocab)
    if eval:
        return preds

    # Gumbel noise sampled with jax.random (no Pallas equivalent needed here).
    u = jax.random.uniform(gumbel_key, (B * L, vocab), jnp.float32,
                           minval=1e-6, maxval=1.0 - 1e-6)
    gum = -jnp.log(-jnp.log(u))

    chexpert_preds = _chexpert_call(lens, preds2, gum, params['onehot_w'],
                                    params['chexpert'], B=B, L=L,
                                    temperature=temperature, beta=beta)
    return preds, chexpert_preds


# ==================================================================
# Deterministic parameter initialization (weights pre-packed per head / gate)
# ==================================================================
def init_params(key, *, vocab=20, d_model=32, nhead=2, ff=64, enc_dim=64,
                n_pix=16, max_len=8, lstm_h=32, n_attn=4, n_cls=3):
    keys = iter(jax.random.split(key, 64))
    d = d_model
    H = lstm_h

    def nrm(shape, scale=0.1):
        return (scale * jax.random.normal(next(keys), shape)).astype(jnp.float32)

    def zeros(shape):
        return jnp.zeros(shape, jnp.float32)

    def ones(shape):
        return jnp.ones(shape, jnp.float32)

    # --- packing helpers (run once at init, outside the kernels) ---
    def split_cols(w, n):            # (K, n*M) -> (n, K, M)
        M = w.shape[1] // n
        return jnp.stack([w[:, i * M:(i + 1) * M] for i in range(n)], axis=0)

    def split_rows(w, n):            # (n*M, N) -> (n, M, N)
        M = w.shape[0] // n
        return jnp.stack([w[i * M:(i + 1) * M, :] for i in range(n)], axis=0)

    def split_vec(v, n):             # (n*M,) -> (n, 1, M)
        M = v.shape[0] // n
        return jnp.stack([v[i * M:(i + 1) * M].reshape(1, M) for i in range(n)],
                         axis=0)

    def mha_params():
        wq, wk, wv, wo = nrm((d, d)), nrm((d, d)), nrm((d, d)), nrm((d, d))
        bq, bk, bv, bo = zeros((d,)), zeros((d,)), zeros((d,)), zeros((d,))
        w = jnp.stack([split_cols(x, nhead) for x in (wq, wk, wv)], axis=0)
        b = jnp.stack([split_vec(x, nhead) for x in (bq, bk, bv)], axis=0)
        return w, b, split_rows(wo, nhead), bo.reshape(1, d)

    embed_weight = nrm((vocab + 2, d))                        # (V+2, E)

    esa_w, esa_b, esa_wo, esa_bo = mha_params()
    enc_layer = dict(
        sa_w=esa_w, sa_b=esa_b, sa_wo=esa_wo, sa_bo=esa_bo,
        ff_w1=nrm((d, ff)), ff_b1=zeros((1, ff)),
        ff_w2=nrm((ff, d)), ff_b2=zeros((1, d)),
        # [ln1, ln2, final encoder norm]
        ln_g=jnp.stack([ones((1, d))] * 3, axis=0),
        ln_b=jnp.stack([zeros((1, d))] * 3, axis=0))

    dsa_w, dsa_b, dsa_wo, dsa_bo = mha_params()
    dca_w, dca_b, dca_wo, dca_bo = mha_params()
    dec_layer = dict(
        sa_w=dsa_w, sa_b=dsa_b, sa_wo=dsa_wo, sa_bo=dsa_bo,
        ca_w=dca_w, ca_b=dca_b, ca_wo=dca_wo, ca_bo=dca_bo,
        ff_w1=nrm((d, ff)), ff_b1=zeros((1, ff)),
        ff_w2=nrm((ff, d)), ff_b2=zeros((1, d)),
        # [ln1, ln2, ln3, final decoder norm]
        ln_g=jnp.stack([ones((1, d))] * 4, axis=0),
        ln_b=jnp.stack([zeros((1, d))] * 4, axis=0))

    w_ih, w_hh = nrm((d, 4 * H)), nrm((H, 4 * H))
    b_ih, b_hh = zeros((4 * H,)), zeros((4 * H,))
    chexpert = dict(
        wih=split_cols(w_ih, 4),            # (4, E, H)   gate order i, f, g, o
        bih=split_vec(b_ih, 4),             # (4, 1, H)
        whh=split_cols(w_hh, 4),            # (4, H, H)
        bhh=split_vec(b_hh, 4),             # (4, 1, H)
        va=jnp.stack([nrm((1, H)) for _ in range(n_attn)], axis=0),      # (A,1,H)
        wc=jnp.stack([nrm((H, n_cls)) for _ in range(n_attn)], axis=0),  # (A,H,C)
        bc=zeros((n_attn, 1, n_cls)))

    params = dict(
        d_model=d, nhead=nhead, vocab=vocab,
        embed_weight=embed_weight,
        # onehot_embedding: x @ (embed_weight.T[:, :-2]).T == x @ embed_weight[:-2]
        onehot_w=embed_weight[:-2, :],
        dec_pos=nrm((max_len, d)),
        enc_pos=nrm((n_pix, d)),
        fc1_w=nrm((enc_dim, d)), fc1_b=zeros((1, d)),
        fc2_w=nrm((d, vocab)), fc2_b=zeros((1, vocab)),
        enc_layer=enc_layer, dec_layer=dec_layer,
        chexpert=chexpert)
    return params


# ==================================================================
if __name__ == "__main__":
    B, Hs, Ws, enc_dim = 2, 4, 4, 64
    max_len, vocab = 8, 20
    n_attn, n_cls = 4, 3

    key = jax.random.PRNGKey(0)
    k_img, k_cap, k_param, k_gumbel = jax.random.split(key, 4)

    # layout: image (B, Hs, Ws, encoder_dim) -> viewed as (B, S, encoder_dim)
    image = jax.random.normal(k_img, (B, Hs, Ws, enc_dim), jnp.float32)
    encoded_captions = jax.random.randint(k_cap, (B, max_len), 0, vocab + 2,
                                          dtype=jnp.int32)
    caption_lengths = jnp.array([max_len, 5], dtype=jnp.int32)

    params = init_params(k_param, vocab=vocab, d_model=32, nhead=2, ff=64,
                         enc_dim=enc_dim, n_pix=Hs * Ws, max_len=max_len,
                         lstm_h=32, n_attn=n_attn, n_cls=n_cls)

    preds, chexpert_preds = forward(params, image, encoded_captions,
                                    caption_lengths, k_gumbel,
                                    temperature=1.0, beta=1.0)
    jax.block_until_ready((preds, chexpert_preds))

    assert preds.shape == (B, max_len, vocab)
    assert chexpert_preds.shape == (B, n_attn, n_cls)
    assert bool(jnp.all(jnp.isfinite(preds)))
    assert bool(jnp.all(jnp.isfinite(chexpert_preds)))
    print("KERNEL_OK")
</pallas_src>

<mosaic_0001>
module attributes {stable_mosaic.version = 11 : i64} {
  func.func @_transformer_kernel(%arg0: memref<2xi32, #tpu.memory_space<smem>>, %arg1: memref<32x64xf32, #tpu.memory_space<vmem>>, %arg2: memref<16x32xf32, #tpu.memory_space<vmem>>, %arg3: memref<32x32xf32, #tpu.memory_space<vmem>>, %arg4: memref<64x32xf32, #tpu.memory_space<vmem>>, %arg5: memref<1x32xf32, #tpu.memory_space<vmem>>, %arg6: memref<3x2x32x16xf32, #tpu.memory_space<vmem>>, %arg7: memref<3x2x1x16xf32, #tpu.memory_space<vmem>>, %arg8: memref<2x16x32xf32, #tpu.memory_space<vmem>>, %arg9: memref<1x32xf32, #tpu.memory_space<vmem>>, %arg10: memref<32x64xf32, #tpu.memory_space<vmem>>, %arg11: memref<1x64xf32, #tpu.memory_space<vmem>>, %arg12: memref<64x32xf32, #tpu.memory_space<vmem>>, %arg13: memref<1x32xf32, #tpu.memory_space<vmem>>, %arg14: memref<3x1x32xf32, #tpu.memory_space<vmem>>, %arg15: memref<3x1x32xf32, #tpu.memory_space<vmem>>, %arg16: memref<3x2x32x16xf32, #tpu.memory_space<vmem>>, %arg17: memref<3x2x1x16xf32, #tpu.memory_space<vmem>>, %arg18: memref<2x16x32xf32, #tpu.memory_space<vmem>>, %arg19: memref<1x32xf32, #tpu.memory_space<vmem>>, %arg20: memref<3x2x32x16xf32, #tpu.memory_space<vmem>>, %arg21: memref<3x2x1x16xf32, #tpu.memory_space<vmem>>, %arg22: memref<2x16x32xf32, #tpu.memory_space<vmem>>, %arg23: memref<1x32xf32, #tpu.memory_space<vmem>>, %arg24: memref<32x64xf32, #tpu.memory_space<vmem>>, %arg25: memref<1x64xf32, #tpu.memory_space<vmem>>, %arg26: memref<64x32xf32, #tpu.memory_space<vmem>>, %arg27: memref<1x32xf32, #tpu.memory_space<vmem>>, %arg28: memref<4x1x32xf32, #tpu.memory_space<vmem>>, %arg29: memref<4x1x32xf32, #tpu.memory_space<vmem>>, %arg30: memref<32x20xf32, #tpu.memory_space<vmem>>, %arg31: memref<1x20xf32, #tpu.memory_space<vmem>>, %arg32: memref<16x20xf32, #tpu.memory_space<vmem>>) attributes {dimension_semantics = [], scalar_prefetch = 0 : i64, scratch_operands = 0 : i64, tpu.core_type = #tpu.core_type<tc>} {
    %0 = tpu.iota {dimensions = array<i32: 0>} : vector<32x32xi32>
    %1 = tpu.iota {dimensions = array<i32: 1>} : vector<32x32xi32>
    %cst = arith.constant -1.000000e+09 : f32
    %2 = vector.broadcast %cst : f32 to vector<32x32xf32>
    %c0_i32 = arith.constant 0 : i32
    %3 = vector.broadcast %c0_i32 : i32 to vector<32x32xi32>
    %4 = arith.cmpi sge, %0, %3 : vector<32x32xi32>
    %c16_i32 = arith.constant 16 : i32
    %5 = vector.broadcast %c16_i32 : i32 to vector<32x32xi32>
    %6 = arith.cmpi slt, %0, %5 : vector<32x32xi32>
    %7 = arith.andi %4, %6 : vector<32x32xi1>
    %c0_i32_0 = arith.constant 0 : i32
    %8 = vector.broadcast %c0_i32_0 : i32 to vector<32x32xi32>
    %9 = arith.cmpi sge, %1, %8 : vector<32x32xi32>
    %10 = arith.andi %7, %9 : vector<32x32xi1>
    %c16_i32_1 = arith.constant 16 : i32
    %11 = vector.broadcast %c16_i32_1 : i32 to vector<32x32xi32>
    %12 = arith.cmpi slt, %1, %11 : vector<32x32xi32>
    %13 = arith.andi %10, %12 : vector<32x32xi1>
    %cst_2 = arith.constant 0.000000e+00 : f32
    %14 = vector.broadcast %cst_2 : f32 to vector<32x32xf32>
    %15 = arith.select %13, %14, %2 : vector<32x32xi1>, vector<32x32xf32>
    %c16_i32_3 = arith.constant 16 : i32
    %16 = vector.broadcast %c16_i32_3 : i32 to vector<32x32xi32>
    %17 = arith.cmpi sge, %0, %16 : vector<32x32xi32>
    %c32_i32 = arith.constant 32 : i32
    %18 = vector.broadcast %c32_i32 : i32 to vector<32x32xi32>
    %19 = arith.cmpi slt, %0, %18 : vector<32x32xi32>
    %20 = arith.andi %17, %19 : vector<32x32xi1>
    %c16_i32_4 = arith.constant 16 : i32
    %21 = vector.broadcast %c16_i32_4 : i32 to vector<32x32xi32>
    %22 = arith.cmpi sge, %1, %21 : vector<32x32xi32>
    %23 = arith.andi %20, %22 : vector<32x32xi1>
    %c32_i32_5 = arith.constant 32 : i32
    %24 = vector.broadcast %c32_i32_5 : i32 to vector<32x32xi32>
    %25 = arith.cmpi slt, %1, %24 : vector<32x32xi32>
    %26 = arith.andi %23, %25 : vector<32x32xi1>
    %cst_6 = arith.constant 0.000000e+00 : f32
    %27 = vector.broadcast %cst_6 : f32 to vector<32x32xf32>
    %28 = arith.select %26, %27, %15 : vector<32x32xi1>, vector<32x32xf32>
    %29 = tpu.iota {dimensions = array<i32: 0>} : vector<16x16xi32>
    %30 = tpu.iota {dimensions = array<i32: 1>} : vector<16x16xi32>
    %cst_7 = arith.constant -1.000000e+09 : f32
    %31 = vector.broadcast %cst_7 : f32 to vector<16x16xf32>
    %c0_i32_8 = arith.constant 0 : i32
    %32 = vector.broadcast %c0_i32_8 : i32 to vector<16x16xi32>
    %33 = arith.cmpi sge, %29, %32 : vector<16x16xi32>
    %c8_i32 = arith.constant 8 : i32
    %34 = vector.broadcast %c8_i32 : i32 to vector<16x16xi32>
    %35 = arith.cmpi slt, %29, %34 : vector<16x16xi32>
    %36 = arith.andi %33, %35 : vector<16x16xi1>
    %c0_i32_9 = arith.constant 0 : i32
    %37 = vector.broadcast %c0_i32_9 : i32 to vector<16x16xi32>
    %38 = arith.cmpi sge, %30, %37 : vector<16x16xi32>
    %39 = arith.andi %36, %38 : vector<16x16xi1>
    %c8_i32_10 = arith.constant 8 : i32
    %40 = vector.broadcast %c8_i32_10 : i32 to vector<16x16xi32>
    %41 = arith.cmpi slt, %30, %40 : vector<16x16xi32>
    %42 = arith.andi %39, %41 : vector<16x16xi1>
    %c0_i32_11 = arith.constant 0 : i32
    %43 = vector.broadcast %c0_i32_11 : i32 to vector<16x16xi32>
    %44 = arith.subi %30, %43 : vector<16x16xi32>
    %c0_i32_12 = arith.constant 0 : i32
    %45 = vector.broadcast %c0_i32_12 : i32 to vector<16x16xi32>
    %46 = arith.subi %29, %45 : vector<16x16xi32>
    %47 = arith.cmpi sle, %44, %46 : vector<16x16xi32>
    %48 = arith.andi %42, %47 : vector<16x16xi1>
    %c0_i32_13 = arith.constant 0 : i32
    %49 = vector.broadcast %c0_i32_13 : i32 to vector<16x16xi32>
    %50 = arith.subi %30, %49 : vector<16x16xi32>
    %c0 = arith.constant 0 : index
    %51 = memref.load %arg0[%c0] : memref<2xi32, #tpu.memory_space<smem>>
    %52 = vector.broadcast %51 : i32 to vector<16x16xi32>
    %53 = arith.cmpi slt, %50, %52 : vector<16x16xi32>
    %54 = arith.andi %48, %53 : vector<16x16xi1>
    %cst_14 = arith.constant 0.000000e+00 : f32
    %55 = vector.broadcast %cst_14 : f32 to vector<16x16xf32>
    %56 = arith.select %54, %55, %31 : vector<16x16xi1>, vector<16x16xf32>
    %c8_i32_15 = arith.constant 8 : i32
    %57 = vector.broadcast %c8_i32_15 : i32 to vector<16x16xi32>
    %58 = arith.cmpi sge, %29, %57 : vector<16x16xi32>
    %c16_i32_16 = arith.constant 16 : i32
    %59 = vector.broadcast %c16_i32_16 : i32 to vector<16x16xi32>
    %60 = arith.cmpi slt, %29, %59 : vector<16x16xi32>
    %61 = arith.andi %58, %60 : vector<16x16xi1>
    %c8_i32_17 = arith.constant 8 : i32
    %62 = vector.broadcast %c8_i32_17 : i32 to vector<16x16xi32>
    %63 = arith.cmpi sge, %30, %62 : vector<16x16xi32>
    %64 = arith.andi %61, %63 : vector<16x16xi1>
    %c16_i32_18 = arith.constant 16 : i32
    %65 = vector.broadcast %c16_i32_18 : i32 to vector<16x16xi32>
    %66 = arith.cmpi slt, %30, %65 : vector<16x16xi32>
    %67 = arith.andi %64, %66 : vector<16x16xi1>
    %c8_i32_19 = arith.constant 8 : i32
    %68 = vector.broadcast %c8_i32_19 : i32 to vector<16x16xi32>
    %69 = arith.subi %30, %68 : vector<16x16xi32>
    %c8_i32_20 = arith.constant 8 : i32
    %70 = vector.broadcast %c8_i32_20 : i32 to vector<16x16xi32>
    %71 = arith.subi %29, %70 : vector<16x16xi32>
    %72 = arith.cmpi sle, %69, %71 : vector<16x16xi32>
    %73 = arith.andi %67, %72 : vector<16x16xi1>
    %c8_i32_21 = arith.constant 8 : i32
    %74 = vector.broadcast %c8_i32_21 : i32 to vector<16x16xi32>
    %75 = arith.subi %30, %74 : vector<16x16xi32>
    %c1 = arith.constant 1 : index
    %76 = memref.load %arg0[%c1] : memref<2xi32, #tpu.memory_space<smem>>
    %77 = vector.broadcast %76 : i32 to vector<16x16xi32>
    %78 = arith.cmpi slt, %75, %77 : vector<16x16xi32>
    %79 = arith.andi %73, %78 : vector<16x16xi1>
    %cst_22 = arith.constant 0.000000e+00 : f32
    %80 = vector.broadcast %cst_22 : f32 to vector<16x16xf32>
    %81 = arith.select %79, %80, %56 : vector<16x16xi1>, vector<16x16xf32>
    %82 = tpu.iota {dimensions = array<i32: 0>} : vector<16x32xi32>
    %83 = tpu.iota {dimensions = array<i32: 1>} : vector<16x32xi32>
    %cst_23 = arith.constant -1.000000e+09 : f32
    %84 = vector.broadcast %cst_23 : f32 to vector<16x32xf32>
    %c0_i32_24 = arith.constant 0 : i32
    %85 = vector.broadcast %c0_i32_24 : i32 to vector<16x32xi32>
    %86 = arith.cmpi sge, %82, %85 : vector<16x32xi32>
    %c8_i32_25 = arith.constant 8 : i32
    %87 = vector.broadcast %c8_i32_25 : i32 to vector<16x32xi32>
    %88 = arith.cmpi slt, %82, %87 : vector<16x32xi32>
    %89 = arith.andi %86, %88 : vector<16x32xi1>
    %c0_i32_26 = arith.constant 0 : i32
    %90 = vector.broadcast %c0_i32_26 : i32 to vector<16x32xi32>
    %91 = arith.cmpi sge, %83, %90 : vector<16x32xi32>
    %92 = arith.andi %89, %91 : vector<16x32xi1>
    %c16_i32_27 = arith.constant 16 : i32
    %93 = vector.broadcast %c16_i32_27 : i32 to vector<16x32xi32>
    %94 = arith.cmpi slt, %83, %93 : vector<16x32xi32>
    %95 = arith.andi %92, %94 : vector<16x32xi1>
    %cst_28 = arith.constant 0.000000e+00 : f32
    %96 = vector.broadcast %cst_28 : f32 to vector<16x32xf32>
    %97 = arith.select %95, %96, %84 : vector<16x32xi1>, vector<16x32xf32>
    %c8_i32_29 = arith.constant 8 : i32
    %98 = vector.broadcast %c8_i32_29 : i32 to vector<16x32xi32>
    %99 = arith.cmpi sge, %82, %98 : vector<16x32xi32>
    %c16_i32_30 = arith.constant 16 : i32
    %100 = vector.broadcast %c16_i32_30 : i32 to vector<16x32xi32>
    %101 = arith.cmpi slt, %82, %100 : vector<16x32xi32>
    %102 = arith.andi %99, %101 : vector<16x32xi1>
    %c16_i32_31 = arith.constant 16 : i32
    %103 = vector.broadcast %c16_i32_31 : i32 to vector<16x32xi32>
    %104 = arith.cmpi sge, %83, %103 : vector<16x32xi32>
    %105 = arith.andi %102, %104 : vector<16x32xi1>
    %c32_i32_32 = arith.constant 32 : i32
    %106 = vector.broadcast %c32_i32_32 : i32 to vector<16x32xi32>
    %107 = arith.cmpi slt, %83, %106 : vector<16x32xi32>
    %108 = arith.andi %105, %107 : vector<16x32xi1>
    %cst_33 = arith.constant 0.000000e+00 : f32
    %109 = vector.broadcast %cst_33 : f32 to vector<16x32xf32>
    %110 = arith.select %108, %109, %97 : vector<16x32xi1>, vector<16x32xf32>
    %c0_34 = arith.constant 0 : index
    %c0_35 = arith.constant 0 : index
    %111 = vector.load %arg1[%c0_34, %c0_35] : memref<32x64xf32, #tpu.memory_space<vmem>>, vector<32x64xf32>
    %c0_36 = arith.constant 0 : index
    %c0_37 = arith.constant 0 : index
    %112 = vector.load %arg4[%c0_36, %c0_37] : memref<64x32xf32, #tpu.memory_space<vmem>>, vector<64x32xf32>
    %cst_38 = arith.constant dense<0.000000e+00> : vector<32x32xf32>
    %113 = tpu.matmul %111, %112, %cst_38 {dimension_numbers = #tpu.dot_dimension_numbers<[1], [0], [0], [1], [0, 0, 1, 1], [], []>} : vector<32x64xf32>, vector<64x32xf32>, vector<32x32xf32> -> vector<32x32xf32>
    %c0_39 = arith.constant 0 : index
    %c0_40 = arith.constant 0 : index
    %114 = vector.load %arg5[%c0_39, %c0_40] : memref<1x32xf32, #tpu.memory_space<vmem>>, vector<1x32xf32>
    %115 = vector.broadcast %114 : vector<1x32xf32> to vector<32x32xf32>
    %116 = arith.addf %113, %115 : vector<32x32xf32>
    %c0_41 = arith.constant 0 : index
    %c0_42 = arith.constant 0 : index
    %117 = vector.load %arg3[%c0_41, %c0_42] : memref<32x32xf32, #tpu.memory_space<vmem>>, vector<32x32xf32>
    %118 = arith.addf %116, %117 : vector<32x32xf32>
    %c0_43 = arith.constant 0 : index
    %c0_44 = arith.constant 0 : index
    %c0_45 = arith.constant 0 : index
    %119 = vector.load %arg14[%c0_43, %c0_44, %c0_45] : memref<3x1x32xf32, #tpu.memory_space<vmem>>, vector<3x1x32xf32>
    %c0_46 = arith.constant 0 : index
    %c0_47 = arith.constant 0 : index
    %c0_48 = arith.constant 0 : index
    %120 = vector.load %arg15[%c0_46, %c0_47, %c0_48] : memref<3x1x32xf32, #tpu.memory_space<vmem>>, vector<3x1x32xf32>
    %c0_49 = arith.constant 0 : index
    %c0_50 = arith.constant 0 : index
    %c0_51 = arith.constant 0 : index
    %c0_52 = arith.constant 0 : index
    %121 = vector.load %arg6[%c0_49, %c0_50, %c0_51, %c0_52] : memref<3x2x32x16xf32, #tpu.memory_space<vmem>>, vector<3x2x32x16xf32>
    %c0_53 = arith.constant 0 : index
    %c0_54 = arith.constant 0 : index
    %c0_55 = arith.constant 0 : index
    %c0_56 = arith.constant 0 : index
    %122 = vector.load %arg7[%c0_53, %c0_54, %c0_55, %c0_56] : memref<3x2x1x16xf32, #tpu.memory_space<vmem>>, vector<3x2x1x16xf32>
    %c0_57 = arith.constant 0 : index
    %c0_58 = arith.constant 0 : index
    %c0_59 = arith.constant 0 : index
    %123 = vector.load %arg8[%c0_57, %c0_58, %c0_59] : memref<2x16x32xf32, #tpu.memory_space<vmem>>, vector<2x16x32xf32>
    %c0_60 = arith.constant 0 : index
    %c0_61 = arith.constant 0 : index
    %124 = vector.load %arg9[%c0_60, %c0_61] : memref<1x32xf32, #tpu.memory_space<vmem>>, vector<1x32xf32>
    %125 = vector.extract_strided_slice %121 {offsets = [0, 0, 0, 0], sizes = [1, 1, 32, 16], strides = [1, 1, 1, 1]} : vector<3x2x32x16xf32> to vector<1x1x32x16xf32>
    %126 = vector.shape_cast %125 : vector<1x1x32x16xf32> to vector<32x16xf32>
    %cst_62 = arith.constant dense<0.000000e+00> : vector<32x16xf32>
    %127 = tpu.matmul %118, %126, %cst_62 {dimension_numbers = #tpu.dot_dimension_numbers<[1], [0], [0], [1], [0, 0, 1, 1], [], []>} : vector<32x32xf32>, vector<32x16xf32>, vector<32x16xf32> -> vector<32x16xf32>
    %128 = vector.extract_strided_slice %122 {offsets = [0, 0, 0, 0], sizes = [1, 1, 1, 16], strides = [1, 1, 1, 1]} : vector<3x2x1x16xf32> to vector<1x1x1x16xf32>
    %129 = vector.shape_cast %128 : vector<1x1x1x16xf32> to vector<1x16xf32>
    %130 = vector.broadcast %129 : vector<1x16xf32> to vector<32x16xf32>
    %131 = arith.addf %127, %130 : vector<32x16xf32>
    %132 = vector.extract_strided_slice %121 {offsets = [1, 0, 0, 0], sizes = [1, 1, 32, 16], strides = [1, 1, 1, 1]} : vector<3x2x32x16xf32> to vector<1x1x32x16xf32>
    %133 = vector.shape_cast %132 : vector<1x1x32x16xf32> to vector<32x16xf32>
    %cst_63 = arith.constant dense<0.000000e+00> : vector<32x16xf32>
    %134 = tpu.matmul %118, %133, %cst_63 {dimension_numbers = #tpu.dot_dimension_numbers<[1], [0], [0], [1], [0, 0, 1, 1], [], []>} : vector<32x32xf32>, vector<32x16xf32>, vector<32x16xf32> -> vector<32x16xf32>
    %135 = vector.extract_strided_slice %122 {offsets = [1, 0, 0, 0], sizes = [1, 1, 1, 16], strides = [1, 1, 1, 1]} : vector<3x2x1x16xf32> to vector<1x1x1x16xf32>
    %136 = vector.shape_cast %135 : vector<1x1x1x16xf32> to vector<1x16xf32>
    %137 = vector.broadcast %136 : vector<1x16xf32> to vector<32x16xf32>
    %138 = arith.addf %134, %137 : vector<32x16xf32>
    %139 = vector.extract_strided_slice %121 {offsets = [2, 0, 0, 0], sizes = [1, 1, 32, 16], strides = [1, 1, 1, 1]} : vector<3x2x32x16xf32> to vector<1x1x32x16xf32>
    %140 = vector.shape_cast %139 : vector<1x1x32x16xf32> to vector<32x16xf32>
    %cst_64 = arith.constant dense<0.000000e+00> : vector<32x16xf32>
    %141 = tpu.matmul %118, %140, %cst_64 {dimension_numbers = #tpu.dot_dimension_numbers<[1], [0], [0], [1], [0, 0, 1, 1], [], []>} : vector<32x32xf32>, vector<32x16xf32>, vector<32x16xf32> -> vector<32x16xf32>
    %142 = vector.extract_strided_slice %122 {offsets = [2, 0, 0, 0], sizes = [1, 1, 1, 16], strides = [1, 1, 1, 1]} : vector<3x2x1x16xf32> to vector<1x1x1x16xf32>
    %143 = vector.shape_cast %142 : vector<1x1x1x16xf32> to vector<1x16xf32>
    %144 = vector.broadcast %143 : vector<1x16xf32> to vector<32x16xf32>
    %145 = arith.addf %141, %144 : vector<32x16xf32>
    %cst_65 = arith.constant dense<0.000000e+00> : vector<32x32xf32>
    %146 = tpu.matmul %131, %138, %cst_65 {dimension_numbers = #tpu.dot_dimension_numbers<[1], [1], [0], [0], [0, 0, 1, 0], [], []>} : vector<32x16xf32>, vector<32x16xf32>, vector<32x32xf32> -> vector<32x32xf32>
    %cst_66 = arith.constant 2.500000e-01 : f32
    %147 = vector.broadcast %cst_66 : f32 to vector<32x32xf32>
    %148 = arith.mulf %146, %147 : vector<32x32xf32>
    %149 = arith.addf %148, %28 : vector<32x32xf32>
    %cst_67 = arith.constant dense<0xFF800000> : vector<32xf32>
    %150 = vector.multi_reduction <maximumf>, %149, %cst_67 [1] : vector<32x32xf32> to vector<32xf32>
    %151 = vector.shape_cast %150 : vector<32xf32> to vector<32x1xf32>
    %152 = vector.broadcast %151 : vector<32x1xf32> to vector<32x32xf32>
    %153 = arith.subf %149, %152 : vector<32x32xf32>
    %154 = math.exp %153 : vector<32x32xf32>
    %cst_68 = arith.constant dense<0.000000e+00> : vector<32xf32>
    %155 = vector.multi_reduction <add>, %154, %cst_68 [1] : vector<32x32xf32> to vector<32xf32>
    %156 = vector.shape_cast %155 : vector<32xf32> to vector<32x1xf32>
    %157 = tpu.reciprocal %156 {approx = true} : vector<32x1xf32> -> vector<32x1xf32>
    %158 = vector.broadcast %157 : vector<32x1xf32> to vector<32x32xf32>
    %159 = arith.mulf %154, %158 : vector<32x32xf32>
    %cst_69 = arith.constant dense<0.000000e+00> : vector<32x16xf32>
    %160 = tpu.matmul %159, %145, %cst_69 {dimension_numbers = #tpu.dot_dimension_numbers<[1], [0], [0], [1], [0, 0, 1, 1], [], []>} : vector<32x32xf32>, vector<32x16xf32>, vector<32x16xf32> -> vector<32x16xf32>
    %161 = vector.extract_strided_slice %123 {offsets = [0, 0, 0], sizes = [1, 16, 32], strides = [1, 1, 1]} : vector<2x16x32xf32> to vector<1x16x32xf32>
    %162 = vector.shape_cast %161 : vector<1x16x32xf32> to vector<16x32xf32>
    %cst_70 = arith.constant dense<0.000000e+00> : vector<32x32xf32>
    %163 = tpu.matmul %160, %162, %cst_70 {dimension_numbers = #tpu.dot_dimension_numbers<[1], [0], [0], [1], [0, 0, 1, 1], [], []>} : vector<32x16xf32>, vector<16x32xf32>, vector<32x32xf32> -> vector<32x32xf32>
    %164 = vector.extract_strided_slice %121 {offsets = [0, 1, 0, 0], sizes = [1, 1, 32, 16], strides = [1, 1, 1, 1]} : vector<3x2x32x16xf32> to vector<1x1x32x16xf32>
    %165 = vector.shape_cast %164 : vector<1x1x32x16xf32> to vector<32x16xf32>
    %cst_71 = arith.constant dense<0.000000e+00> : vector<32x16xf32>
    %166 = tpu.matmul %118, %165, %cst_71 {dimension_numbers = #tpu.dot_dimension_numbers<[1], [0], [0], [1], [0, 0, 1, 1], [], []>} : vector<32x32xf32>, vector<32x16xf32>, vector<32x16xf32> -> vector<32x16xf32>
    %167 = vector.extract_strided_slice %122 {offsets = [0, 1, 0, 0], sizes = [1, 1, 1, 16], strides = [1, 1, 1, 1]} : vector<3x2x1x16xf32> to vector<1x1x1x16xf32>
    %168 = vector.shape_cast %167 : vector<1x1x1x16xf32> to vector<1x16xf32>
    %169 = vector.broadcast %168 : vector<1x16xf32> to vector<32x16xf32>
    %170 = arith.addf %166, %169 : vector<32x16xf32>
    %171 = vector.extract_strided_slice %121 {offsets = [1, 1, 0, 0], sizes = [1, 1, 32, 16], strides = [1, 1, 1, 1]} : vector<3x2x32x16xf32> to vector<1x1x32x16xf32>
    %172 = vector.shape_cast %171 : vector<1x1x32x16xf32> to vector<32x16xf32>
    %cst_72 = arith.constant dense<0.000000e+00> : vector<32x16xf32>
    %173 = tpu.matmul %118, %172, %cst_72 {dimension_numbers = #tpu.dot_dimension_numbers<[1], [0], [0], [1], [0, 0, 1, 1], [], []>} : vector<32x32xf32>, vector<32x16xf32>, vector<32x16xf32> -> vector<32x16xf32>
    %174 = vector.extract_strided_slice %122 {offsets = [1, 1, 0, 0], sizes = [1, 1, 1, 16], strides = [1, 1, 1, 1]} : vector<3x2x1x16xf32> to vector<1x1x1x16xf32>
    %175 = vector.shape_cast %174 : vector<1x1x1x16xf32> to vector<1x16xf32>
    %176 = vector.broadcast %175 : vector<1x16xf32> to vector<32x16xf32>
    %177 = arith.addf %173, %176 : vector<32x16xf32>
    %178 = vector.extract_strided_slice %121 {offsets = [2, 1, 0, 0], sizes = [1, 1, 32, 16], strides = [1, 1, 1, 1]} : vector<3x2x32x16xf32> to vector<1x1x32x16xf32>
    %179 = vector.shape_cast %178 : vector<1x1x32x16xf32> to vector<32x16xf32>
    %cst_73 = arith.constant dense<0.000000e+00> : vector<32x16xf32>
    %180 = tpu.matmul %118, %179, %cst_73 {dimension_numbers = #tpu.dot_dimension_numbers<[1], [0], [0], [1], [0, 0, 1, 1], [], []>} : vector<32x32xf32>, vector<32x16xf32>, vector<32x16xf32> -> vector<32x16xf32>
    %181 = vector.extract_strided_slice %122 {offsets = [2, 1, 0, 0], sizes = [1, 1, 1, 16], strides = [1, 1, 1, 1]} : vector<3x2x1x16xf32> to vector<1x1x1x16xf32>
    %182 = vector.shape_cast %181 : vector<1x1x1x16xf32> to vector<1x16xf32>
    %183 = vector.broadcast %182 : vector<1x16xf32> to vector<32x16xf32>
    %184 = arith.addf %180, %183 : vector<32x16xf32>
    %cst_74 = arith.constant dense<0.000000e+00> : vector<32x32xf32>
    %185 = tpu.matmul %170, %177, %cst_74 {dimension_numbers = #tpu.dot_dimension_numbers<[1], [1], [0], [0], [0, 0, 1, 0], [], []>} : vector<32x16xf32>, vector<32x16xf32>, vector<32x32xf32> -> vector<32x32xf32>
    %cst_75 = arith.constant 2.500000e-01 : f32
    %186 = vector.broadcast %cst_75 : f32 to vector<32x32xf32>
    %187 = arith.mulf %185, %186 : vector<32x32xf32>
    %188 = arith.addf %187, %28 : vector<32x32xf32>
    %cst_76 = arith.constant dense<0xFF800000> : vector<32xf32>
    %189 = vector.multi_reduction <maximumf>, %188, %cst_76 [1] : vector<32x32xf32> to vector<32xf32>
    %190 = vector.shape_cast %189 : vector<32xf32> to vector<32x1xf32>
    %191 = vector.broadcast %190 : vector<32x1xf32> to vector<32x32xf32>
    %192 = arith.subf %188, %191 : vector<32x32xf32>
    %193 = math.exp %192 : vector<32x32xf32>
    %cst_77 = arith.constant dense<0.000000e+00> : vector<32xf32>
    %194 = vector.multi_reduction <add>, %193, %cst_77 [1] : vector<32x32xf32> to vector<32xf32>
    %195 = vector.shape_cast %194 : vector<32xf32> to vector<32x1xf32>
    %196 = tpu.reciprocal %195 {approx = true} : vector<32x1xf32> -> vector<32x1xf32>
    %197 = vector.broadcast %196 : vector<32x1xf32> to vector<32x32xf32>
    %198 = arith.mulf %193, %197 : vector<32x32xf32>
    %cst_78 = arith.constant dense<0.000000e+00> : vector<32x16xf32>
    %199 = tpu.matmul %198, %184, %cst_78 {dimension_numbers = #tpu.dot_dimension_numbers<[1], [0], [0], [1], [0, 0, 1, 1], [], []>} : vector<32x32xf32>, vector<32x16xf32>, vector<32x16xf32> -> vector<32x16xf32>
    %200 = vector.extract_strided_slice %123 {offsets = [1, 0, 0], sizes = [1, 16, 32], strides = [1, 1, 1]} : vector<2x16x32xf32> to vector<1x16x32xf32>
    %201 = vector.shape_cast %200 : vector<1x16x32xf32> to vector<16x32xf32>
    %cst_79 = arith.constant dense<0.000000e+00> : vector<32x32xf32>
    %202 = tpu.matmul %199, %201, %cst_79 {dimension_numbers = #tpu.dot_dimension_numbers<[1], [0], [0], [1], [0, 0, 1, 1], [], []>} : vector<32x16xf32>, vector<16x32xf32>, vector<32x32xf32> -> vector<32x32xf32>
    %203 = arith.addf %163, %202 : vector<32x32xf32>
    %204 = vector.broadcast %124 : vector<1x32xf32> to vector<32x32xf32>
    %205 = arith.addf %203, %204 : vector<32x32xf32>
    %206 = arith.addf %118, %205 : vector<32x32xf32>
    %207 = vector.extract_strided_slice %119 {offsets = [0, 0, 0], sizes = [1, 1, 32], strides = [1, 1, 1]} : vector<3x1x32xf32> to vector<1x1x32xf32>
    %208 = vector.shape_cast %207 : vector<1x1x32xf32> to vector<1x32xf32>
    %209 = vector.extract_strided_slice %120 {offsets = [0, 0, 0], sizes = [1, 1, 32], strides = [1, 1, 1]} : vector<3x1x32xf32> to vector<1x1x32xf32>
    %210 = vector.shape_cast %209 : vector<1x1x32xf32> to vector<1x32xf32>
    %cst_80 = arith.constant dense<0.000000e+00> : vector<32xf32>
    %211 = vector.multi_reduction <add>, %206, %cst_80 [1] : vector<32x32xf32> to vector<32xf32>
    %212 = vector.shape_cast %211 : vector<32xf32> to vector<32x1xf32>
    %cst_81 = arith.constant 3.200000e+01 : f32
    %213 = vector.broadcast %cst_81 : f32 to vector<32x1xf32>
    %214 = arith.divf %212, %213 : vector<32x1xf32>
    %215 = vector.broadcast %214 : vector<32x1xf32> to vector<32x32xf32>
    %216 = arith.subf %206, %215 : vector<32x32xf32>
    %217 = arith.mulf %216, %216 : vector<32x32xf32>
    %cst_82 = arith.constant dense<0.000000e+00> : vector<32xf32>
    %218 = vector.multi_reduction <add>, %217, %cst_82 [1] : vector<32x32xf32> to vector<32xf32>
    %219 = vector.shape_cast %218 : vector<32xf32> to vector<32x1xf32>
    %cst_83 = arith.constant 3.200000e+01 : f32
    %220 = vector.broadcast %cst_83 : f32 to vector<32x1xf32>
    %221 = arith.divf %219, %220 : vector<32x1xf32>
    %222 = vector.broadcast %214 : vector<32x1xf32> to vector<32x32xf32>
    %223 = arith.subf %206, %222 : vector<32x32xf32>
    %cst_84 = arith.constant 9.99999974E-6 : f32
    %224 = vector.broadcast %cst_84 : f32 to vector<32x1xf32>
    %225 = arith.addf %221, %224 : vector<32x1xf32>
    %226 = math.rsqrt %225 : vector<32x1xf32>
    %227 = vector.broadcast %226 : vector<32x1xf32> to vector<32x32xf32>
    %228 = arith.mulf %223, %227 : vector<32x32xf32>
    %229 = vector.broadcast %208 : vector<1x32xf32> to vector<32x32xf32>
    %230 = arith.mulf %228, %229 : vector<32x32xf32>
    %231 = vector.broadcast %210 : vector<1x32xf32> to vector<32x32xf32>
    %232 = arith.addf %230, %231 : vector<32x32xf32>
    %c0_85 = arith.constant 0 : index
    %c0_86 = arith.constant 0 : index
    %233 = vector.load %arg10[%c0_85, %c0_86] : memref<32x64xf32, #tpu.memory_space<vmem>>, vector<32x64xf32>
    %c0_87 = arith.constant 0 : index
    %c0_88 = arith.constant 0 : index
    %234 = vector.load %arg11[%c0_87, %c0_88] : memref<1x64xf32, #tpu.memory_space<vmem>>, vector<1x64xf32>
    %c0_89 = arith.constant 0 : index
    %c0_90 = arith.constant 0 : index
    %235 = vector.load %arg12[%c0_89, %c0_90] : memref<64x32xf32, #tpu.memory_space<vmem>>, vector<64x32xf32>
    %c0_91 = arith.constant 0 : index
    %c0_92 = arith.constant 0 : index
    %236 = vector.load %arg13[%c0_91, %c0_92] : memref<1x32xf32, #tpu.memory_space<vmem>>, vector<1x32xf32>
    %cst_93 = arith.constant dense<0.000000e+00> : vector<32x64xf32>
    %237 = tpu.matmul %232, %233, %cst_93 {dimension_numbers = #tpu.dot_dimension_numbers<[1], [0], [0], [1], [0, 0, 1, 1], [], []>} : vector<32x32xf32>, vector<32x64xf32>, vector<32x64xf32> -> vector<32x64xf32>
    %238 = vector.broadcast %234 : vector<1x64xf32> to vector<32x64xf32>
    %239 = arith.addf %237, %238 : vector<32x64xf32>
    %cst_94 = arith.constant 0.000000e+00 : f32
    %240 = vector.broadcast %cst_94 : f32 to vector<32x64xf32>
    %241 = arith.maximumf %239, %240 : vector<32x64xf32>
    %cst_95 = arith.constant dense<0.000000e+00> : vector<32x32xf32>
    %242 = tpu.matmul %241, %235, %cst_95 {dimension_numbers = #tpu.dot_dimension_numbers<[1], [0], [0], [1], [0, 0, 1, 1], [], []>} : vector<32x64xf32>, vector<64x32xf32>, vector<32x32xf32> -> vector<32x32xf32>
    %243 = vector.broadcast %236 : vector<1x32xf32> to vector<32x32xf32>
    %244 = arith.addf %242, %243 : vector<32x32xf32>
    %245 = arith.addf %232, %244 : vector<32x32xf32>
    %246 = vector.extract_strided_slice %119 {offsets = [1, 0, 0], sizes = [1, 1, 32], strides = [1, 1, 1]} : vector<3x1x32xf32> to vector<1x1x32xf32>
    %247 = vector.shape_cast %246 : vector<1x1x32xf32> to vector<1x32xf32>
    %248 = vector.extract_strided_slice %120 {offsets = [1, 0, 0], sizes = [1, 1, 32], strides = [1, 1, 1]} : vector<3x1x32xf32> to vector<1x1x32xf32>
    %249 = vector.shape_cast %248 : vector<1x1x32xf32> to vector<1x32xf32>
    %cst_96 = arith.constant dense<0.000000e+00> : vector<32xf32>
    %250 = vector.multi_reduction <add>, %245, %cst_96 [1] : vector<32x32xf32> to vector<32xf32>
    %251 = vector.shape_cast %250 : vector<32xf32> to vector<32x1xf32>
    %cst_97 = arith.constant 3.200000e+01 : f32
    %252 = vector.broadcast %cst_97 : f32 to vector<32x1xf32>
    %253 = arith.divf %251, %252 : vector<32x1xf32>
    %254 = vector.broadcast %253 : vector<32x1xf32> to vector<32x32xf32>
    %255 = arith.subf %245, %254 : vector<32x32xf32>
    %256 = arith.mulf %255, %255 : vector<32x32xf32>
    %cst_98 = arith.constant dense<0.000000e+00> : vector<32xf32>
    %257 = vector.multi_reduction <add>, %256, %cst_98 [1] : vector<32x32xf32> to vector<32xf32>
    %258 = vector.shape_cast %257 : vector<32xf32> to vector<32x1xf32>
    %cst_99 = arith.constant 3.200000e+01 : f32
    %259 = vector.broadcast %cst_99 : f32 to vector<32x1xf32>
    %260 = arith.divf %258, %259 : vector<32x1xf32>
    %261 = vector.broadcast %253 : vector<32x1xf32> to vector<32x32xf32>
    %262 = arith.subf %245, %261 : vector<32x32xf32>
    %cst_100 = arith.constant 9.99999974E-6 : f32
    %263 = vector.broadcast %cst_100 : f32 to vector<32x1xf32>
    %264 = arith.addf %260, %263 : vector<32x1xf32>
    %265 = math.rsqrt %264 : vector<32x1xf32>
    %266 = vector.broadcast %265 : vector<32x1xf32> to vector<32x32xf32>
    %267 = arith.mulf %262, %266 : vector<32x32xf32>
    %268 = vector.broadcast %247 : vector<1x32xf32> to vector<32x32xf32>
    %269 = arith.mulf %267, %268 : vector<32x32xf32>
    %270 = vector.broadcast %249 : vector<1x32xf32> to vector<32x32xf32>
    %271 = arith.addf %269, %270 : vector<32x32xf32>
    %272 = vector.extract_strided_slice %119 {offsets = [2, 0, 0], sizes = [1, 1, 32], strides = [1, 1, 1]} : vector<3x1x32xf32> to vector<1x1x32xf32>
    %273 = vector.shape_cast %272 : vector<1x1x32xf32> to vector<1x32xf32>
    %274 = vector.extract_strided_slice %120 {offsets = [2, 0, 0], sizes = [1, 1, 32], strides = [1, 1, 1]} : vector<3x1x32xf32> to vector<1x1x32xf32>
    %275 = vector.shape_cast %274 : vector<1x1x32xf32> to vector<1x32xf32>
    %cst_101 = arith.constant dense<0.000000e+00> : vector<32xf32>
    %276 = vector.multi_reduction <add>, %271, %cst_101 [1] : vector<32x32xf32> to vector<32xf32>
    %277 = vector.shape_cast %276 : vector<32xf32> to vector<32x1xf32>
    %cst_102 = arith.constant 3.200000e+01 : f32
    %278 = vector.broadcast %cst_102 : f32 to vector<32x1xf32>
    %279 = arith.divf %277, %278 : vector<32x1xf32>
    %280 = vector.broadcast %279 : vector<32x1xf32> to vector<32x32xf32>
    %281 = arith.subf %271, %280 : vector<32x32xf32>
    %282 = arith.mulf %281, %281 : vector<32x32xf32>
    %cst_103 = arith.constant dense<0.000000e+00> : vector<32xf32>
    %283 = vector.multi_reduction <add>, %282, %cst_103 [1] : vector<32x32xf32> to vector<32xf32>
    %284 = vector.shape_cast %283 : vector<32xf32> to vector<32x1xf32>
    %cst_104 = arith.constant 3.200000e+01 : f32
    %285 = vector.broadcast %cst_104 : f32 to vector<32x1xf32>
    %286 = arith.divf %284, %285 : vector<32x1xf32>
    %287 = vector.broadcast %279 : vector<32x1xf32> to vector<32x32xf32>
    %288 = arith.subf %271, %287 : vector<32x32xf32>
    %cst_105 = arith.constant 9.99999974E-6 : f32
    %289 = vector.broadcast %cst_105 : f32 to vector<32x1xf32>
    %290 = arith.addf %286, %289 : vector<32x1xf32>
    %291 = math.rsqrt %290 : vector<32x1xf32>
    %292 = vector.broadcast %291 : vector<32x1xf32> to vector<32x32xf32>
    %293 = arith.mulf %288, %292 : vector<32x32xf32>
    %294 = vector.broadcast %273 : vector<1x32xf32> to vector<32x32xf32>
    %295 = arith.mulf %293, %294 : vector<32x32xf32>
    %296 = vector.broadcast %275 : vector<1x32xf32> to vector<32x32xf32>
    %297 = arith.addf %295, %296 : vector<32x32xf32>
    %c0_106 = arith.constant 0 : index
    %c0_107 = arith.constant 0 : index
    %298 = vector.load %arg2[%c0_106, %c0_107] : memref<16x32xf32, #tpu.memory_space<vmem>>, vector<16x32xf32>
    %c0_108 = arith.constant 0 : index
    %c0_109 = arith.constant 0 : index
    %c0_110 = arith.constant 0 : index
    %299 = vector.load %arg28[%c0_108, %c0_109, %c0_110] : memref<4x1x32xf32, #tpu.memory_space<vmem>>, vector<4x1x32xf32>
    %c0_111 = arith.constant 0 : index
    %c0_112 = arith.constant 0 : index
    %c0_113 = arith.constant 0 : index
    %300 = vector.load %arg29[%c0_111, %c0_112, %c0_113] : memref<4x1x32xf32, #tpu.memory_space<vmem>>, vector<4x1x32xf32>
    %c0_114 = arith.constant 0 : index
    %c0_115 = arith.constant 0 : index
    %c0_116 = arith.constant 0 : index
    %c0_117 = arith.constant 0 : index
    %301 = vector.load %arg16[%c0_114, %c0_115, %c0_116, %c0_117] : memref<3x2x32x16xf32, #tpu.memory_space<vmem>>, vector<3x2x32x16xf32>
    %c0_118 = arith.constant 0 : index
    %c0_119 = arith.constant 0 : index
    %c0_120 = arith.constant 0 : index
    %c0_121 = arith.constant 0 : index
    %302 = vector.load %arg17[%c0_118, %c0_119, %c0_120, %c0_121] : memref<3x2x1x16xf32, #tpu.memory_space<vmem>>, vector<3x2x1x16xf32>
    %c0_122 = arith.constant 0 : index
    %c0_123 = arith.constant 0 : index
    %c0_124 = arith.constant 0 : index
    %303 = vector.load %arg18[%c0_122, %c0_123, %c0_124] : memref<2x16x32xf32, #tpu.memory_space<vmem>>, vector<2x16x32xf32>
    %c0_125 = arith.constant 0 : index
    %c0_126 = arith.constant 0 : index
    %304 = vector.load %arg19[%c0_125, %c0_126] : memref<1x32xf32, #tpu.memory_space<vmem>>, vector<1x32xf32>
    %305 = vector.extract_strided_slice %301 {offsets = [0, 0, 0, 0], sizes = [1, 1, 32, 16], strides = [1, 1, 1, 1]} : vector<3x2x32x16xf32> to vector<1x1x32x16xf32>
    %306 = vector.shape_cast %305 : vector<1x1x32x16xf32> to vector<32x16xf32>
    %cst_127 = arith.constant dense<0.000000e+00> : vector<16x16xf32>
    %307 = tpu.matmul %298, %306, %cst_127 {dimension_numbers = #tpu.dot_dimension_numbers<[1], [0], [0], [1], [0, 0, 1, 1], [], []>} : vector<16x32xf32>, vector<32x16xf32>, vector<16x16xf32> -> vector<16x16xf32>
    %308 = vector.extract_strided_slice %302 {offsets = [0, 0, 0, 0], sizes = [1, 1, 1, 16], strides = [1, 1, 1, 1]} : vector<3x2x1x16xf32> to vector<1x1x1x16xf32>
    %309 = vector.shape_cast %308 : vector<1x1x1x16xf32> to vector<1x16xf32>
    %310 = vector.broadcast %309 : vector<1x16xf32> to vector<16x16xf32>
    %311 = arith.addf %307, %310 : vector<16x16xf32>
    %312 = vector.extract_strided_slice %301 {offsets = [1, 0, 0, 0], sizes = [1, 1, 32, 16], strides = [1, 1, 1, 1]} : vector<3x2x32x16xf32> to vector<1x1x32x16xf32>
    %313 = vector.shape_cast %312 : vector<1x1x32x16xf32> to vector<32x16xf32>
    %cst_128 = arith.constant dense<0.000000e+00> : vector<16x16xf32>
    %314 = tpu.matmul %298, %313, %cst_128 {dimension_numbers = #tpu.dot_dimension_numbers<[1], [0], [0], [1], [0, 0, 1, 1], [], []>} : vector<16x32xf32>, vector<32x16xf32>, vector<16x16xf32> -> vector<16x16xf32>
    %315 = vector.extract_strided_slice %302 {offsets = [1, 0, 0, 0], sizes = [1, 1, 1, 16], strides = [1, 1, 1, 1]} : vector<3x2x1x16xf32> to vector<1x1x1x16xf32>
    %316 = vector.shape_cast %315 : vector<1x1x1x16xf32> to vector<1x16xf32>
    %317 = vector.broadcast %316 : vector<1x16xf32> to vector<16x16xf32>
    %318 = arith.addf %314, %317 : vector<16x16xf32>
    %319 = vector.extract_strided_slice %301 {offsets = [2, 0, 0, 0], sizes = [1, 1, 32, 16], strides = [1, 1, 1, 1]} : vector<3x2x32x16xf32> to vector<1x1x32x16xf32>
    %320 = vector.shape_cast %319 : vector<1x1x32x16xf32> to vector<32x16xf32>
    %cst_129 = arith.constant dense<0.000000e+00> : vector<16x16xf32>
    %321 = tpu.matmul %298, %320, %cst_129 {dimension_numbers = #tpu.dot_dimension_numbers<[1], [0], [0], [1], [0, 0, 1, 1], [], []>} : vector<16x32xf32>, vector<32x16xf32>, vector<16x16xf32> -> vector<16x16xf32>
    %322 = vector.extract_strided_slice %302 {offsets = [2, 0, 0, 0], sizes = [1, 1, 1, 16], strides = [1, 1, 1, 1]} : vector<3x2x1x16xf32> to vector<1x1x1x16xf32>
    %323 = vector.shape_cast %322 : vector<1x1x1x16xf32> to vector<1x16xf32>
    %324 = vector.broadcast %323 : vector<1x16xf32> to vector<16x16xf32>
    %325 = arith.addf %321, %324 : vector<16x16xf32>
    %cst_130 = arith.constant dense<0.000000e+00> : vector<16x16xf32>
    %326 = tpu.matmul %311, %318, %cst_130 {dimension_numbers = #tpu.dot_dimension_numbers<[1], [1], [0], [0], [0, 0, 1, 0], [], []>} : vector<16x16xf32>, vector<16x16xf32>, vector<16x16xf32> -> vector<16x16xf32>
    %cst_131 = arith.constant 2.500000e-01 : f32
    %327 = vector.broadcast %cst_131 : f32 to vector<16x16xf32>
    %328 = arith.mulf %326, %327 : vector<16x16xf32>
    %329 = arith.addf %328, %81 : vector<16x16xf32>
    %cst_132 = arith.constant dense<0xFF800000> : vector<16xf32>
    %330 = vector.multi_reduction <maximumf>, %329, %cst_132 [1] : vector<16x16xf32> to vector<16xf32>
    %331 = vector.shape_cast %330 : vector<16xf32> to vector<16x1xf32>
    %332 = vector.broadcast %331 : vector<16x1xf32> to vector<16x16xf32>
    %333 = arith.subf %329, %332 : vector<16x16xf32>
    %334 = math.exp %333 : vector<16x16xf32>
    %cst_133 = arith.constant dense<0.000000e+00> : vector<16xf32>
    %335 = vector.multi_reduction <add>, %334, %cst_133 [1] : vector<16x16xf32> to vector<16xf32>
    %336 = vector.shape_cast %335 : vector<16xf32> to vector<16x1xf32>
    %337 = tpu.reciprocal %336 {approx = true} : vector<16x1xf32> -> vector<16x1xf32>
    %338 = vector.broadcast %337 : vector<16x1xf32> to vector<16x16xf32>
    %339 = arith.mulf %334, %338 : vector<16x16xf32>
    %cst_134 = arith.constant dense<0.000000e+00> : vector<16x16xf32>
    %340 = tpu.matmul %339, %325, %cst_134 {dimension_numbers = #tpu.dot_dimension_numbers<[1], [0], [0], [1], [0, 0, 1, 1], [], []>} : vector<16x16xf32>, vector<16x16xf32>, vector<16x16xf32> -> vector<16x16xf32>
    %341 = vector.extract_strided_slice %303 {offsets = [0, 0, 0], sizes = [1, 16, 32], strides = [1, 1, 1]} : vector<2x16x32xf32> to vector<1x16x32xf32>
    %342 = vector.shape_cast %341 : vector<1x16x32xf32> to vector<16x32xf32>
    %cst_135 = arith.constant dense<0.000000e+00> : vector<16x32xf32>
    %343 = tpu.matmul %340, %342, %cst_135 {dimension_numbers = #tpu.dot_dimension_numbers<[1], [0], [0], [1], [0, 0, 1, 1], [], []>} : vector<16x16xf32>, vector<16x32xf32>, vector<16x32xf32> -> vector<16x32xf32>
    %344 = vector.extract_strided_slice %301 {offsets = [0, 1, 0, 0], sizes = [1, 1, 32, 16], strides = [1, 1, 1, 1]} : vector<3x2x32x16xf32> to vector<1x1x32x16xf32>
    %345 = vector.shape_cast %344 : vector<1x1x32x16xf32> to vector<32x16xf32>
    %cst_136 = arith.constant dense<0.000000e+00> : vector<16x16xf32>
    %346 = tpu.matmul %298, %345, %cst_136 {dimension_numbers = #tpu.dot_dimension_numbers<[1], [0], [0], [1], [0, 0, 1, 1], [], []>} : vector<16x32xf32>, vector<32x16xf32>, vector<16x16xf32> -> vector<16x16xf32>
    %347 = vector.extract_strided_slice %302 {offsets = [0, 1, 0, 0], sizes = [1, 1, 1, 16], strides = [1, 1, 1, 1]} : vector<3x2x1x16xf32> to vector<1x1x1x16xf32>
    %348 = vector.shape_cast %347 : vector<1x1x1x16xf32> to vector<1x16xf32>
    %349 = vector.broadcast %348 : vector<1x16xf32> to vector<16x16xf32>
    %350 = arith.addf %346, %349 : vector<16x16xf32>
    %351 = vector.extract_strided_slice %301 {offsets = [1, 1, 0, 0], sizes = [1, 1, 32, 16], strides = [1, 1, 1, 1]} : vector<3x2x32x16xf32> to vector<1x1x32x16xf32>
    %352 = vector.shape_cast %351 : vector<1x1x32x16xf32> to vector<32x16xf32>
    %cst_137 = arith.constant dense<0.000000e+00> : vector<16x16xf32>
    %353 = tpu.matmul %298, %352, %cst_137 {dimension_numbers = #tpu.dot_dimension_numbers<[1], [0], [0], [1], [0, 0, 1, 1], [], []>} : vector<16x32xf32>, vector<32x16xf32>, vector<16x16xf32> -> vector<16x16xf32>
    %354 = vector.extract_strided_slice %302 {offsets = [1, 1, 0, 0], sizes = [1, 1, 1, 16], strides = [1, 1, 1, 1]} : vector<3x2x1x16xf32> to vector<1x1x1x16xf32>
    %355 = vector.shape_cast %354 : vector<1x1x1x16xf32> to vector<1x16xf32>
    %356 = vector.broadcast %355 : vector<1x16xf32> to vector<16x16xf32>
    %357 = arith.addf %353, %356 : vector<16x16xf32>
    %358 = vector.extract_strided_slice %301 {offsets = [2, 1, 0, 0], sizes = [1, 1, 32, 16], strides = [1, 1, 1, 1]} : vector<3x2x32x16xf32> to vector<1x1x32x16xf32>
    %359 = vector.shape_cast %358 : vector<1x1x32x16xf32> to vector<32x16xf32>
    %cst_138 = arith.constant dense<0.000000e+00> : vector<16x16xf32>
    %360 = tpu.matmul %298, %359, %cst_138 {dimension_numbers = #tpu.dot_dimension_numbers<[1], [0], [0], [1], [0, 0, 1, 1], [], []>} : vector<16x32xf32>, vector<32x16xf32>, vector<16x16xf32> -> vector<16x16xf32>
    %361 = vector.extract_strided_slice %302 {offsets = [2, 1, 0, 0], sizes = [1, 1, 1, 16], strides = [1, 1, 1, 1]} : vector<3x2x1x16xf32> to vector<1x1x1x16xf32>
    %362 = vector.shape_cast %361 : vector<1x1x1x16xf32> to vector<1x16xf32>
    %363 = vector.broadcast %362 : vector<1x16xf32> to vector<16x16xf32>
    %364 = arith.addf %360, %363 : vector<16x16xf32>
    %cst_139 = arith.constant dense<0.000000e+00> : vector<16x16xf32>
    %365 = tpu.matmul %350, %357, %cst_139 {dimension_numbers = #tpu.dot_dimension_numbers<[1], [1], [0], [0], [0, 0, 1, 0], [], []>} : vector<16x16xf32>, vector<16x16xf32>, vector<16x16xf32> -> vector<16x16xf32>
    %cst_140 = arith.constant 2.500000e-01 : f32
    %366 = vector.broadcast %cst_140 : f32 to vector<16x16xf32>
    %367 = arith.mulf %365, %366 : vector<16x16xf32>
    %368 = arith.addf %367, %81 : vector<16x16xf32>
    %cst_141 = arith.constant dense<0xFF800000> : vector<16xf32>
    %369 = vector.multi_reduction <maximumf>, %368, %cst_141 [1] : vector<16x16xf32> to vector<16xf32>
    %370 = vector.shape_cast %369 : vector<16xf32> to vector<16x1xf32>
    %371 = vector.broadcast %370 : vector<16x1xf32> to vector<16x16xf32>
    %372 = arith.subf %368, %371 : vector<16x16xf32>
    %373 = math.exp %372 : vector<16x16xf32>
    %cst_142 = arith.constant dense<0.000000e+00> : vector<16xf32>
    %374 = vector.multi_reduction <add>, %373, %cst_142 [1] : vector<16x16xf32> to vector<16xf32>
    %375 = vector.shape_cast %374 : vector<16xf32> to vector<16x1xf32>
    %376 = tpu.reciprocal %375 {approx = true} : vector<16x1xf32> -> vector<16x1xf32>
    %377 = vector.broadcast %376 : vector<16x1xf32> to vector<16x16xf32>
    %378 = arith.mulf %373, %377 : vector<16x16xf32>
    %cst_143 = arith.constant dense<0.000000e+00> : vector<16x16xf32>
    %379 = tpu.matmul %378, %364, %cst_143 {dimension_numbers = #tpu.dot_dimension_numbers<[1], [0], [0], [1], [0, 0, 1, 1], [], []>} : vector<16x16xf32>, vector<16x16xf32>, vector<16x16xf32> -> vector<16x16xf32>
    %380 = vector.extract_strided_slice %303 {offsets = [1, 0, 0], sizes = [1, 16, 32], strides = [1, 1, 1]} : vector<2x16x32xf32> to vector<1x16x32xf32>
    %381 = vector.shape_cast %380 : vector<1x16x32xf32> to vector<16x32xf32>
    %cst_144 = arith.constant dense<0.000000e+00> : vector<16x32xf32>
    %382 = tpu.matmul %379, %381, %cst_144 {dimension_numbers = #tpu.dot_dimension_numbers<[1], [0], [0], [1], [0, 0, 1, 1], [], []>} : vector<16x16xf32>, vector<16x32xf32>, vector<16x32xf32> -> vector<16x32xf32>
    %383 = arith.addf %343, %382 : vector<16x32xf32>
    %384 = vector.broadcast %304 : vector<1x32xf32> to vector<16x32xf32>
    %385 = arith.addf %383, %384 : vector<16x32xf32>
    %386 = arith.addf %298, %385 : vector<16x32xf32>
    %387 = vector.extract_strided_slice %299 {offsets = [0, 0, 0], sizes = [1, 1, 32], strides = [1, 1, 1]} : vector<4x1x32xf32> to vector<1x1x32xf32>
    %388 = vector.shape_cast %387 : vector<1x1x32xf32> to vector<1x32xf32>
    %389 = vector.extract_strided_slice %300 {offsets = [0, 0, 0], sizes = [1, 1, 32], strides = [1, 1, 1]} : vector<4x1x32xf32> to vector<1x1x32xf32>
    %390 = vector.shape_cast %389 : vector<1x1x32xf32> to vector<1x32xf32>
    %cst_145 = arith.constant dense<0.000000e+00> : vector<16xf32>
    %391 = vector.multi_reduction <add>, %386, %cst_145 [1] : vector<16x32xf32> to vector<16xf32>
    %392 = vector.shape_cast %391 : vector<16xf32> to vector<16x1xf32>
    %cst_146 = arith.constant 3.200000e+01 : f32
    %393 = vector.broadcast %cst_146 : f32 to vector<16x1xf32>
    %394 = arith.divf %392, %393 : vector<16x1xf32>
    %395 = vector.broadcast %394 : vector<16x1xf32> to vector<16x32xf32>
    %396 = arith.subf %386, %395 : vector<16x32xf32>
    %397 = arith.mulf %396, %396 : vector<16x32xf32>
    %cst_147 = arith.constant dense<0.000000e+00> : vector<16xf32>
    %398 = vector.multi_reduction <add>, %397, %cst_147 [1] : vector<16x32xf32> to vector<16xf32>
    %399 = vector.shape_cast %398 : vector<16xf32> to vector<16x1xf32>
    %cst_148 = arith.constant 3.200000e+01 : f32
    %400 = vector.broadcast %cst_148 : f32 to vector<16x1xf32>
    %401 = arith.divf %399, %400 : vector<16x1xf32>
    %402 = vector.broadcast %394 : vector<16x1xf32> to vector<16x32xf32>
    %403 = arith.subf %386, %402 : vector<16x32xf32>
    %cst_149 = arith.constant 9.99999974E-6 : f32
    %404 = vector.broadcast %cst_149 : f32 to vector<16x1xf32>
    %405 = arith.addf %401, %404 : vector<16x1xf32>
    %406 = math.rsqrt %405 : vector<16x1xf32>
    %407 = vector.broadcast %406 : vector<16x1xf32> to vector<16x32xf32>
    %408 = arith.mulf %403, %407 : vector<16x32xf32>
    %409 = vector.broadcast %388 : vector<1x32xf32> to vector<16x32xf32>
    %410 = arith.mulf %408, %409 : vector<16x32xf32>
    %411 = vector.broadcast %390 : vector<1x32xf32> to vector<16x32xf32>
    %412 = arith.addf %410, %411 : vector<16x32xf32>
    %c0_150 = arith.constant 0 : index
    %c0_151 = arith.constant 0 : index
    %c0_152 = arith.constant 0 : index
    %c0_153 = arith.constant 0 : index
    %413 = vector.load %arg20[%c0_150, %c0_151, %c0_152, %c0_153] : memref<3x2x32x16xf32, #tpu.memory_space<vmem>>, vector<3x2x32x16xf32>
    %c0_154 = arith.constant 0 : index
    %c0_155 = arith.constant 0 : index
    %c0_156 = arith.constant 0 : index
    %c0_157 = arith.constant 0 : index
    %414 = vector.load %arg21[%c0_154, %c0_155, %c0_156, %c0_157] : memref<3x2x1x16xf32, #tpu.memory_space<vmem>>, vector<3x2x1x16xf32>
    %c0_158 = arith.constant 0 : index
    %c0_159 = arith.constant 0 : index
    %c0_160 = arith.constant 0 : index
    %415 = vector.load %arg22[%c0_158, %c0_159, %c0_160] : memref<2x16x32xf32, #tpu.memory_space<vmem>>, vector<2x16x32xf32>
    %c0_161 = arith.constant 0 : index
    %c0_162 = arith.constant 0 : index
    %416 = vector.load %arg23[%c0_161, %c0_162] : memref<1x32xf32, #tpu.memory_space<vmem>>, vector<1x32xf32>
    %417 = vector.extract_strided_slice %413 {offsets = [0, 0, 0, 0], sizes = [1, 1, 32, 16], strides = [1, 1, 1, 1]} : vector<3x2x32x16xf32> to vector<1x1x32x16xf32>
    %418 = vector.shape_cast %417 : vector<1x1x32x16xf32> to vector<32x16xf32>
    %cst_163 = arith.constant dense<0.000000e+00> : vector<16x16xf32>
    %419 = tpu.matmul %412, %418, %cst_163 {dimension_numbers = #tpu.dot_dimension_numbers<[1], [0], [0], [1], [0, 0, 1, 1], [], []>} : vector<16x32xf32>, vector<32x16xf32>, vector<16x16xf32> -> vector<16x16xf32>
    %420 = vector.extract_strided_slice %414 {offsets = [0, 0, 0, 0], sizes = [1, 1, 1, 16], strides = [1, 1, 1, 1]} : vector<3x2x1x16xf32> to vector<1x1x1x16xf32>
    %421 = vector.shape_cast %420 : vector<1x1x1x16xf32> to vector<1x16xf32>
    %422 = vector.broadcast %421 : vector<1x16xf32> to vector<16x16xf32>
    %423 = arith.addf %419, %422 : vector<16x16xf32>
    %424 = vector.extract_strided_slice %413 {offsets = [1, 0, 0, 0], sizes = [1, 1, 32, 16], strides = [1, 1, 1, 1]} : vector<3x2x32x16xf32> to vector<1x1x32x16xf32>
    %425 = vector.shape_cast %424 : vector<1x1x32x16xf32> to vector<32x16xf32>
    %cst_164 = arith.constant dense<0.000000e+00> : vector<32x16xf32>
    %426 = tpu.matmul %297, %425, %cst_164 {dimension_numbers = #tpu.dot_dimension_numbers<[1], [0], [0], [1], [0, 0, 1, 1], [], []>} : vector<32x32xf32>, vector<32x16xf32>, vector<32x16xf32> -> vector<32x16xf32>
    %427 = vector.extract_strided_slice %414 {offsets = [1, 0, 0, 0], sizes = [1, 1, 1, 16], strides = [1, 1, 1, 1]} : vector<3x2x1x16xf32> to vector<1x1x1x16xf32>
    %428 = vector.shape_cast %427 : vector<1x1x1x16xf32> to vector<1x16xf32>
    %429 = vector.broadcast %428 : vector<1x16xf32> to vector<32x16xf32>
    %430 = arith.addf %426, %429 : vector<32x16xf32>
    %431 = vector.extract_strided_slice %413 {offsets = [2, 0, 0, 0], sizes = [1, 1, 32, 16], strides = [1, 1, 1, 1]} : vector<3x2x32x16xf32> to vector<1x1x32x16xf32>
    %432 = vector.shape_cast %431 : vector<1x1x32x16xf32> to vector<32x16xf32>
    %cst_165 = arith.constant dense<0.000000e+00> : vector<32x16xf32>
    %433 = tpu.matmul %297, %432, %cst_165 {dimension_numbers = #tpu.dot_dimension_numbers<[1], [0], [0], [1], [0, 0, 1, 1], [], []>} : vector<32x32xf32>, vector<32x16xf32>, vector<32x16xf32> -> vector<32x16xf32>
    %434 = vector.extract_strided_slice %414 {offsets = [2, 0, 0, 0], sizes = [1, 1, 1, 16], strides = [1, 1, 1, 1]} : vector<3x2x1x16xf32> to vector<1x1x1x16xf32>
    %435 = vector.shape_cast %434 : vector<1x1x1x16xf32> to vector<1x16xf32>
    %436 = vector.broadcast %435 : vector<1x16xf32> to vector<32x16xf32>
    %437 = arith.addf %433, %436 : vector<32x16xf32>
    %cst_166 = arith.constant dense<0.000000e+00> : vector<16x32xf32>
    %438 = tpu.matmul %423, %430, %cst_166 {dimension_numbers = #tpu.dot_dimension_numbers<[1], [1], [0], [0], [0, 0, 1, 0], [], []>} : vector<16x16xf32>, vector<32x16xf32>, vector<16x32xf32> -> vector<16x32xf32>
    %cst_167 = arith.constant 2.500000e-01 : f32
    %439 = vector.broadcast %cst_167 : f32 to vector<16x32xf32>
    %440 = arith.mulf %438, %439 : vector<16x32xf32>
    %441 = arith.addf %440, %110 : vector<16x32xf32>
    %cst_168 = arith.constant dense<0xFF800000> : vector<16xf32>
    %442 = vector.multi_reduction <maximumf>, %441, %cst_168 [1] : vector<16x32xf32> to vector<16xf32>
    %443 = vector.shape_cast %442 : vector<16xf32> to vector<16x1xf32>
    %444 = vector.broadcast %443 : vector<16x1xf32> to vector<16x32xf32>
    %445 = arith.subf %441, %444 : vector<16x32xf32>
    %446 = math.exp %445 : vector<16x32xf32>
    %cst_169 = arith.constant dense<0.000000e+00> : vector<16xf32>
    %447 = vector.multi_reduction <add>, %446, %cst_169 [1] : vector<16x32xf32> to vector<16xf32>
    %448 = vector.shape_cast %447 : vector<16xf32> to vector<16x1xf32>
    %449 = tpu.reciprocal %448 {approx = true} : vector<16x1xf32> -> vector<16x1xf32>
    %450 = vector.broadcast %449 : vector<16x1xf32> to vector<16x32xf32>
    %451 = arith.mulf %446, %450 : vector<16x32xf32>
    %cst_170 = arith.constant dense<0.000000e+00> : vector<16x16xf32>
    %452 = tpu.matmul %451, %437, %cst_170 {dimension_numbers = #tpu.dot_dimension_numbers<[1], [0], [0], [1], [0, 0, 1, 1], [], []>} : vector<16x32xf32>, vector<32x16xf32>, vector<16x16xf32> -> vector<16x16xf32>
    %453 = vector.extract_strided_slice %415 {offsets = [0, 0, 0], sizes = [1, 16, 32], strides = [1, 1, 1]} : vector<2x16x32xf32> to vector<1x16x32xf32>
    %454 = vector.shape_cast %453 : vector<1x16x32xf32> to vector<16x32xf32>
    %cst_171 = arith.constant dense<0.000000e+00> : vector<16x32xf32>
    %455 = tpu.matmul %452, %454, %cst_171 {dimension_numbers = #tpu.dot_dimension_numbers<[1], [0], [0], [1], [0, 0, 1, 1], [], []>} : vector<16x16xf32>, vector<16x32xf32>, vector<16x32xf32> -> vector<16x32xf32>
    %456 = vector.extract_strided_slice %413 {offsets = [0, 1, 0, 0], sizes = [1, 1, 32, 16], strides = [1, 1, 1, 1]} : vector<3x2x32x16xf32> to vector<1x1x32x16xf32>
    %457 = vector.shape_cast %456 : vector<1x1x32x16xf32> to vector<32x16xf32>
    %cst_172 = arith.constant dense<0.000000e+00> : vector<16x16xf32>
    %458 = tpu.matmul %412, %457, %cst_172 {dimension_numbers = #tpu.dot_dimension_numbers<[1], [0], [0], [1], [0, 0, 1, 1], [], []>} : vector<16x32xf32>, vector<32x16xf32>, vector<16x16xf32> -> vector<16x16xf32>
    %459 = vector.extract_strided_slice %414 {offsets = [0, 1, 0, 0], sizes = [1, 1, 1, 16], strides = [1, 1, 1, 1]} : vector<3x2x1x16xf32> to vector<1x1x1x16xf32>
    %460 = vector.shape_cast %459 : vector<1x1x1x16xf32> to vector<1x16xf32>
    %461 = vector.broadcast %460 : vector<1x16xf32> to vector<16x16xf32>
    %462 = arith.addf %458, %461 : vector<16x16xf32>
    %463 = vector.extract_strided_slice %413 {offsets = [1, 1, 0, 0], sizes = [1, 1, 32, 16], strides = [1, 1, 1, 1]} : vector<3x2x32x16xf32> to vector<1x1x32x16xf32>
    %464 = vector.shape_cast %463 : vector<1x1x32x16xf32> to vector<32x16xf32>
    %cst_173 = arith.constant dense<0.000000e+00> : vector<32x16xf32>
    %465 = tpu.matmul %297, %464, %cst_173 {dimension_numbers = #tpu.dot_dimension_numbers<[1], [0], [0], [1], [0, 0, 1, 1], [], []>} : vector<32x32xf32>, vector<32x16xf32>, vector<32x16xf32> -> vector<32x16xf32>
    %466 = vector.extract_strided_slice %414 {offsets = [1, 1, 0, 0], sizes = [1, 1, 1, 16], strides = [1, 1, 1, 1]} : vector<3x2x1x16xf32> to vector<1x1x1x16xf32>
    %467 = vector.shape_cast %466 : vector<1x1x1x16xf32> to vector<1x16xf32>
    %468 = vector.broadcast %467 : vector<1x16xf32> to vector<32x16xf32>
    %469 = arith.addf %465, %468 : vector<32x16xf32>
    %470 = vector.extract_strided_slice %413 {offsets = [2, 1, 0, 0], sizes = [1, 1, 32, 16], strides = [1, 1, 1, 1]} : vector<3x2x32x16xf32> to vector<1x1x32x16xf32>
    %471 = vector.shape_cast %470 : vector<1x1x32x16xf32> to vector<32x16xf32>
    %cst_174 = arith.constant dense<0.000000e+00> : vector<32x16xf32>
    %472 = tpu.matmul %297, %471, %cst_174 {dimension_numbers = #tpu.dot_dimension_numbers<[1], [0], [0], [1], [0, 0, 1, 1], [], []>} : vector<32x32xf32>, vector<32x16xf32>, vector<32x16xf32> -> vector<32x16xf32>
    %473 = vector.extract_strided_slice %414 {offsets = [2, 1, 0, 0], sizes = [1, 1, 1, 16], strides = [1, 1, 1, 1]} : vector<3x2x1x16xf32> to vector<1x1x1x16xf32>
    %474 = vector.shape_cast %473 : vector<1x1x1x16xf32> to vector<1x16xf32>
    %475 = vector.broadcast %474 : vector<1x16xf32> to vector<32x16xf32>
    %476 = arith.addf %472, %475 : vector<32x16xf32>
    %cst_175 = arith.constant dense<0.000000e+00> : vector<16x32xf32>
    %477 = tpu.matmul %462, %469, %cst_175 {dimension_numbers = #tpu.dot_dimension_numbers<[1], [1], [0], [0], [0, 0, 1, 0], [], []>} : vector<16x16xf32>, vector<32x16xf32>, vector<16x32xf32> -> vector<16x32xf32>
    %cst_176 = arith.constant 2.500000e-01 : f32
    %478 = vector.broadcast %cst_176 : f32 to vector<16x32xf32>
    %479 = arith.mulf %477, %478 : vector<16x32xf32>
    %480 = arith.addf %479, %110 : vector<16x32xf32>
    %cst_177 = arith.constant dense<0xFF800000> : vector<16xf32>
    %481 = vector.multi_reduction <maximumf>, %480, %cst_177 [1] : vector<16x32xf32> to vector<16xf32>
    %482 = vector.shape_cast %481 : vector<16xf32> to vector<16x1xf32>
    %483 = vector.broadcast %482 : vector<16x1xf32> to vector<16x32xf32>
    %484 = arith.subf %480, %483 : vector<16x32xf32>
    %485 = math.exp %484 : vector<16x32xf32>
    %cst_178 = arith.constant dense<0.000000e+00> : vector<16xf32>
    %486 = vector.multi_reduction <add>, %485, %cst_178 [1] : vector<16x32xf32> to vector<16xf32>
    %487 = vector.shape_cast %486 : vector<16xf32> to vector<16x1xf32>
    %488 = tpu.reciprocal %487 {approx = true} : vector<16x1xf32> -> vector<16x1xf32>
    %489 = vector.broadcast %488 : vector<16x1xf32> to vector<16x32xf32>
    %490 = arith.mulf %485, %489 : vector<16x32xf32>
    %cst_179 = arith.constant dense<0.000000e+00> : vector<16x16xf32>
    %491 = tpu.matmul %490, %476, %cst_179 {dimension_numbers = #tpu.dot_dimension_numbers<[1], [0], [0], [1], [0, 0, 1, 1], [], []>} : vector<16x32xf32>, vector<32x16xf32>, vector<16x16xf32> -> vector<16x16xf32>
    %492 = vector.extract_strided_slice %415 {offsets = [1, 0, 0], sizes = [1, 16, 32], strides = [1, 1, 1]} : vector<2x16x32xf32> to vector<1x16x32xf32>
    %493 = vector.shape_cast %492 : vector<1x16x32xf32> to vector<16x32xf32>
    %cst_180 = arith.constant dense<0.000000e+00> : vector<16x32xf32>
    %494 = tpu.matmul %491, %493, %cst_180 {dimension_numbers = #tpu.dot_dimension_numbers<[1], [0], [0], [1], [0, 0, 1, 1], [], []>} : vector<16x16xf32>, vector<16x32xf32>, vector<16x32xf32> -> vector<16x32xf32>
    %495 = arith.addf %455, %494 : vector<16x32xf32>
    %496 = vector.broadcast %416 : vector<1x32xf32> to vector<16x32xf32>
    %497 = arith.addf %495, %496 : vector<16x32xf32>
    %498 = arith.addf %412, %497 : vector<16x32xf32>
    %499 = vector.extract_strided_slice %299 {offsets = [1, 0, 0], sizes = [1, 1, 32], strides = [1, 1, 1]} : vector<4x1x32xf32> to vector<1x1x32xf32>
    %500 = vector.shape_cast %499 : vector<1x1x32xf32> to vector<1x32xf32>
    %501 = vector.extract_strided_slice %300 {offsets = [1, 0, 0], sizes = [1, 1, 32], strides = [1, 1, 1]} : vector<4x1x32xf32> to vector<1x1x32xf32>
    %502 = vector.shape_cast %501 : vector<1x1x32xf32> to vector<1x32xf32>
    %cst_181 = arith.constant dense<0.000000e+00> : vector<16xf32>
    %503 = vector.multi_reduction <add>, %498, %cst_181 [1] : vector<16x32xf32> to vector<16xf32>
    %504 = vector.shape_cast %503 : vector<16xf32> to vector<16x1xf32>
    %cst_182 = arith.constant 3.200000e+01 : f32
    %505 = vector.broadcast %cst_182 : f32 to vector<16x1xf32>
    %506 = arith.divf %504, %505 : vector<16x1xf32>
    %507 = vector.broadcast %506 : vector<16x1xf32> to vector<16x32xf32>
    %508 = arith.subf %498, %507 : vector<16x32xf32>
    %509 = arith.mulf %508, %508 : vector<16x32xf32>
    %cst_183 = arith.constant dense<0.000000e+00> : vector<16xf32>
    %510 = vector.multi_reduction <add>, %509, %cst_183 [1] : vector<16x32xf32> to vector<16xf32>
    %511 = vector.shape_cast %510 : vector<16xf32> to vector<16x1xf32>
    %cst_184 = arith.constant 3.200000e+01 : f32
    %512 = vector.broadcast %cst_184 : f32 to vector<16x1xf32>
    %513 = arith.divf %511, %512 : vector<16x1xf32>
    %514 = vector.broadcast %506 : vector<16x1xf32> to vector<16x32xf32>
    %515 = arith.subf %498, %514 : vector<16x32xf32>
    %cst_185 = arith.constant 9.99999974E-6 : f32
    %516 = vector.broadcast %cst_185 : f32 to vector<16x1xf32>
    %517 = arith.addf %513, %516 : vector<16x1xf32>
    %518 = math.rsqrt %517 : vector<16x1xf32>
    %519 = vector.broadcast %518 : vector<16x1xf32> to vector<16x32xf32>
    %520 = arith.mulf %515, %519 : vector<16x32xf32>
    %521 = vector.broadcast %500 : vector<1x32xf32> to vector<16x32xf32>
    %522 = arith.mulf %520, %521 : vector<16x32xf32>
    %523 = vector.broadcast %502 : vector<1x32xf32> to vector<16x32xf32>
    %524 = arith.addf %522, %523 : vector<16x32xf32>
    %c0_186 = arith.constant 0 : index
    %c0_187 = arith.constant 0 : index
    %525 = vector.load %arg24[%c0_186, %c0_187] : memref<32x64xf32, #tpu.memory_space<vmem>>, vector<32x64xf32>
    %c0_188 = arith.constant 0 : index
    %c0_189 = arith.constant 0 : index
    %526 = vector.load %arg25[%c0_188, %c0_189] : memref<1x64xf32, #tpu.memory_space<vmem>>, vector<1x64xf32>
    %c0_190 = arith.constant 0 : index
    %c0_191 = arith.constant 0 : index
    %527 = vector.load %arg26[%c0_190, %c0_191] : memref<64x32xf32, #tpu.memory_space<vmem>>, vector<64x32xf32>
    %c0_192 = arith.constant 0 : index
    %c0_193 = arith.constant 0 : index
    %528 = vector.load %arg27[%c0_192, %c0_193] : memref<1x32xf32, #tpu.memory_space<vmem>>, vector<1x32xf32>
    %cst_194 = arith.constant dense<0.000000e+00> : vector<16x64xf32>
    %529 = tpu.matmul %524, %525, %cst_194 {dimension_numbers = #tpu.dot_dimension_numbers<[1], [0], [0], [1], [0, 0, 1, 1], [], []>} : vector<16x32xf32>, vector<32x64xf32>, vector<16x64xf32> -> vector<16x64xf32>
    %530 = vector.broadcast %526 : vector<1x64xf32> to vector<16x64xf32>
    %531 = arith.addf %529, %530 : vector<16x64xf32>
    %cst_195 = arith.constant 0.000000e+00 : f32
    %532 = vector.broadcast %cst_195 : f32 to vector<16x64xf32>
    %533 = arith.maximumf %531, %532 : vector<16x64xf32>
    %cst_196 = arith.constant dense<0.000000e+00> : vector<16x32xf32>
    %534 = tpu.matmul %533, %527, %cst_196 {dimension_numbers = #tpu.dot_dimension_numbers<[1], [0], [0], [1], [0, 0, 1, 1], [], []>} : vector<16x64xf32>, vector<64x32xf32>, vector<16x32xf32> -> vector<16x32xf32>
    %535 = vector.broadcast %528 : vector<1x32xf32> to vector<16x32xf32>
    %536 = arith.addf %534, %535 : vector<16x32xf32>
    %537 = arith.addf %524, %536 : vector<16x32xf32>
    %538 = vector.extract_strided_slice %299 {offsets = [2, 0, 0], sizes = [1, 1, 32], strides = [1, 1, 1]} : vector<4x1x32xf32> to vector<1x1x32xf32>
    %539 = vector.shape_cast %538 : vector<1x1x32xf32> to vector<1x32xf32>
    %540 = vector.extract_strided_slice %300 {offsets = [2, 0, 0], sizes = [1, 1, 32], strides = [1, 1, 1]} : vector<4x1x32xf32> to vector<1x1x32xf32>
    %541 = vector.shape_cast %540 : vector<1x1x32xf32> to vector<1x32xf32>
    %cst_197 = arith.constant dense<0.000000e+00> : vector<16xf32>
    %542 = vector.multi_reduction <add>, %537, %cst_197 [1] : vector<16x32xf32> to vector<16xf32>
    %543 = vector.shape_cast %542 : vector<16xf32> to vector<16x1xf32>
    %cst_198 = arith.constant 3.200000e+01 : f32
    %544 = vector.broadcast %cst_198 : f32 to vector<16x1xf32>
    %545 = arith.divf %543, %544 : vector<16x1xf32>
    %546 = vector.broadcast %545 : vector<16x1xf32> to vector<16x32xf32>
    %547 = arith.subf %537, %546 : vector<16x32xf32>
    %548 = arith.mulf %547, %547 : vector<16x32xf32>
    %cst_199 = arith.constant dense<0.000000e+00> : vector<16xf32>
    %549 = vector.multi_reduction <add>, %548, %cst_199 [1] : vector<16x32xf32> to vector<16xf32>
    %550 = vector.shape_cast %549 : vector<16xf32> to vector<16x1xf32>
    %cst_200 = arith.constant 3.200000e+01 : f32
    %551 = vector.broadcast %cst_200 : f32 to vector<16x1xf32>
    %552 = arith.divf %550, %551 : vector<16x1xf32>
    %553 = vector.broadcast %545 : vector<16x1xf32> to vector<16x32xf32>
    %554 = arith.subf %537, %553 : vector<16x32xf32>
    %cst_201 = arith.constant 9.99999974E-6 : f32
    %555 = vector.broadcast %cst_201 : f32 to vector<16x1xf32>
    %556 = arith.addf %552, %555 : vector<16x1xf32>
    %557 = math.rsqrt %556 : vector<16x1xf32>
    %558 = vector.broadcast %557 : vector<16x1xf32> to vector<16x32xf32>
    %559 = arith.mulf %554, %558 : vector<16x32xf32>
    %560 = vector.broadcast %539 : vector<1x32xf32> to vector<16x32xf32>
    %561 = arith.mulf %559, %560 : vector<16x32xf32>
    %562 = vector.broadcast %541 : vector<1x32xf32> to vector<16x32xf32>
    %563 = arith.addf %561, %562 : vector<16x32xf32>
    %564 = vector.extract_strided_slice %299 {offsets = [3, 0, 0], sizes = [1, 1, 32], strides = [1, 1, 1]} : vector<4x1x32xf32> to vector<1x1x32xf32>
    %565 = vector.shape_cast %564 : vector<1x1x32xf32> to vector<1x32xf32>
    %566 = vector.extract_strided_slice %300 {offsets = [3, 0, 0], sizes = [1, 1, 32], strides = [1, 1, 1]} : vector<4x1x32xf32> to vector<1x1x32xf32>
    %567 = vector.shape_cast %566 : vector<1x1x32xf32> to vector<1x32xf32>
    %cst_202 = arith.constant dense<0.000000e+00> : vector<16xf32>
    %568 = vector.multi_reduction <add>, %563, %cst_202 [1] : vector<16x32xf32> to vector<16xf32>
    %569 = vector.shape_cast %568 : vector<16xf32> to vector<16x1xf32>
    %cst_203 = arith.constant 3.200000e+01 : f32
    %570 = vector.broadcast %cst_203 : f32 to vector<16x1xf32>
    %571 = arith.divf %569, %570 : vector<16x1xf32>
    %572 = vector.broadcast %571 : vector<16x1xf32> to vector<16x32xf32>
    %573 = arith.subf %563, %572 : vector<16x32xf32>
    %574 = arith.mulf %573, %573 : vector<16x32xf32>
    %cst_204 = arith.constant dense<0.000000e+00> : vector<16xf32>
    %575 = vector.multi_reduction <add>, %574, %cst_204 [1] : vector<16x32xf32> to vector<16xf32>
    %576 = vector.shape_cast %575 : vector<16xf32> to vector<16x1xf32>
    %cst_205 = arith.constant 3.200000e+01 : f32
    %577 = vector.broadcast %cst_205 : f32 to vector<16x1xf32>
    %578 = arith.divf %576, %577 : vector<16x1xf32>
    %579 = vector.broadcast %571 : vector<16x1xf32> to vector<16x32xf32>
    %580 = arith.subf %563, %579 : vector<16x32xf32>
    %cst_206 = arith.constant 9.99999974E-6 : f32
    %581 = vector.broadcast %cst_206 : f32 to vector<16x1xf32>
    %582 = arith.addf %578, %581 : vector<16x1xf32>
    %583 = math.rsqrt %582 : vector<16x1xf32>
    %584 = vector.broadcast %583 : vector<16x1xf32> to vector<16x32xf32>
    %585 = arith.mulf %580, %584 : vector<16x32xf32>
    %586 = vector.broadcast %565 : vector<1x32xf32> to vector<16x32xf32>
    %587 = arith.mulf %585, %586 : vector<16x32xf32>
    %588 = vector.broadcast %567 : vector<1x32xf32> to vector<16x32xf32>
    %589 = arith.addf %587, %588 : vector<16x32xf32>
    %c0_207 = arith.constant 0 : index
    %c0_208 = arith.constant 0 : index
    %590 = vector.load %arg30[%c0_207, %c0_208] : memref<32x20xf32, #tpu.memory_space<vmem>>, vector<32x20xf32>
    %cst_209 = arith.constant dense<0.000000e+00> : vector<16x20xf32>
    %591 = tpu.matmul %589, %590, %cst_209 {dimension_numbers = #tpu.dot_dimension_numbers<[1], [0], [0], [1], [0, 0, 1, 1], [], []>} : vector<16x32xf32>, vector<32x20xf32>, vector<16x20xf32> -> vector<16x20xf32>
    %c0_210 = arith.constant 0 : index
    %c0_211 = arith.constant 0 : index
    %592 = vector.load %arg31[%c0_210, %c0_211] : memref<1x20xf32, #tpu.memory_space<vmem>>, vector<1x20xf32>
    %593 = vector.broadcast %592 : vector<1x20xf32> to vector<16x20xf32>
    %594 = arith.addf %591, %593 : vector<16x20xf32>
    %c0_212 = arith.constant 0 : index
    %c0_213 = arith.constant 0 : index
    %595 = vector.load %arg32[%c0_212, %c0_213] : memref<16x20xf32, #tpu.memory_space<vmem>>, vector<16x20xf32>
    tpu.vector_store %arg32[%c0_212, %c0_213], %594 {strides = array<i32>} : memref<16x20xf32, #tpu.memory_space<vmem>>, vector<16x20xf32>,
    return
  }
}

</mosaic_0001>

<llo_original>
// kernel: tpu_custom_call.1
$region0: #{tpu_custom_call.1}
  #allocation0 [shape = 'u32[]', space=smem, size = 0x4, offset = 0x4, fixed_abs, tag = 'smem constant byte address 0x4 - core index']
  #allocation1 [shape = 'u32[144,128]{1,0:T(1,128)}', space=vmem, size = 0x12000, scoped, tag = 'internal scratch']
  %s0 = inlined_call_operand.smem [shape: u32[33], index: -1, kind: input, shape index: {}]
  %s1 = sld [smem:[%s0]]
  %s2 = scalar_lea.smem %s0, 1
  %s3 = sld [smem:[%s2]]
  %s4 = scalar_lea.smem %s0, 2
  %s5 = sld [smem:[%s4]]
  %s6 = scalar_lea.smem %s0, 3
  %s7 = sld [smem:[%s6]]
  %s8 = scalar_lea.smem %s0, 4
  %s9 = sld [smem:[%s8]]
  %s10 = scalar_lea.smem %s0, 5
  %s11 = sld [smem:[%s10]]
  %s12 = scalar_lea.smem %s0, 6
  %s13 = sld [smem:[%s12]]
  %s14 = scalar_lea.smem %s0, 7
  %s15 = sld [smem:[%s14]]
  %s16 = scalar_lea.smem %s0, 8
  %s17 = sld [smem:[%s16]]
  %s18 = scalar_lea.smem %s0, 9
  %s19 = sld [smem:[%s18]]
  %s20 = scalar_lea.smem %s0, 10
  %s21 = sld [smem:[%s20]]
  %s22 = scalar_lea.smem %s0, 11
  %s23 = sld [smem:[%s22]]
  %s24 = scalar_lea.smem %s0, 12
  %s25 = sld [smem:[%s24]]
  %s26 = scalar_lea.smem %s0, 13
  %s27 = sld [smem:[%s26]]
  %s28 = scalar_lea.smem %s0, 14
  %s29 = sld [smem:[%s28]]
  %s30 = scalar_lea.smem %s0, 15
  %s31 = sld [smem:[%s30]]
  %s32 = scalar_lea.smem %s0, 16
  %s33 = sld [smem:[%s32]]
  %s34 = scalar_lea.smem %s0, 17
  %s35 = sld [smem:[%s34]]
  %s36 = scalar_lea.smem %s0, 18
  %s37 = sld [smem:[%s36]]
  %s38 = scalar_lea.smem %s0, 19
  %s39 = sld [smem:[%s38]]
  %s40 = scalar_lea.smem %s0, 20
  %s41 = sld [smem:[%s40]]
  %s42 = scalar_lea.smem %s0, 21
  %s43 = sld [smem:[%s42]]
  %s44 = scalar_lea.smem %s0, 22
  %s45 = sld [smem:[%s44]]
  %s46 = scalar_lea.smem %s0, 23
  %s47 = sld [smem:[%s46]]
  %s48 = scalar_lea.smem %s0, 24
  %s49 = sld [smem:[%s48]]
  %s50 = scalar_lea.smem %s0, 25
  %s51 = sld [smem:[%s50]]
  %s52 = scalar_lea.smem %s0, 26
  %s53 = sld [smem:[%s52]]
  %s54 = scalar_lea.smem %s0, 27
  %s55 = sld [smem:[%s54]]
  %s56 = scalar_lea.smem %s0, 28
  %s57 = sld [smem:[%s56]]
  %s58 = scalar_lea.smem %s0, 29
  %s59 = sld [smem:[%s58]]
  %s60 = scalar_lea.smem %s0, 30
  %s61 = sld [smem:[%s60]]
  %s62 = scalar_lea.smem %s0, 31
  %s63 = sld [smem:[%s62]]
  %s64 = scalar_lea.smem %s0, 32
  %s65 = sld [smem:[%s64]]
  %s66 = sld [smem:[#allocation0]]
  $region142: #{tpu_custom_call.1} parent=0
    _
  %s68 = ssub.s32 1, %s66
  %s69 = scalar_select 0, %s68, %s66
  $region1: #{tpu_custom_call.1} parent=0
    #allocation2 [shape = 'u8[512]{0}', space=smem, size = 0x200, scoped, tag = 'input window, operand 0, single buffered']
    #allocation3 [shape = 's32[1]{0}', space=sflag, size = 0x4, scoped, tag = 'scoped memory for tpu_custom_call.1']
    #allocation4 [shape = 's32[1]{0}', space=sflag, size = 0x4, scoped, tag = 'scoped memory for tpu_custom_call.1']
    #allocation5 [shape = 'u8[8192]{0}', space=vmem, size = 0x2000, scoped, tag = 'output window, operand 0, single buffered']
    %70 = vsyncpa [#allocation4], 0
    %71 = vsyncpa [#allocation3], 0
    // Predicated region
    $region2: #{tpu_custom_call.1} parent=1 // pred_check
      _
    $region3: #{tpu_custom_call.1} parent=1 // pred_check_branch
      %73 = sbr.rel (0) target = $region5
    $region4: #{tpu_custom_call.1} parent=1 // pred_region
      %s75 = ssub.s32 16, 16
      %76 = vsyncadd [#allocation4], %s75
      %s78 = sshll.u32 %s1, 4
      %s79 = int_to_ptr.vmem [resolvable:$true] %s78
      %81 = dma.vmem_to_smem %s79, 16, [#allocation2], [#allocation4]
    $region5: #{tpu_custom_call.1} parent=1 // pred_fallthru
      _
    // Predicated region
    $region6: #{tpu_custom_call.1} parent=1 // pred_check
      _
    $region7: #{tpu_custom_call.1} parent=1 // pred_check_branch
      %83 = sbr.rel (0) target = $region9
    $region8: #{tpu_custom_call.1} parent=1 // pred_region
      _
    $region9: #{tpu_custom_call.1} parent=1 // pred_fallthru
      _
    // Predicated region
    $region10: #{tpu_custom_call.1} parent=1 // pred_check
      _
    $region11: #{tpu_custom_call.1} parent=1 // pred_check_branch
      %85 = sbr.rel (0) target = $region13
    $region12: #{tpu_custom_call.1} parent=1 // pred_region
      _
    $region13: #{tpu_custom_call.1} parent=1 // pred_fallthru
      _
    // Predicated region
    $region14: #{tpu_custom_call.1} parent=1 // pred_check
      _
    $region15: #{tpu_custom_call.1} parent=1 // pred_check_branch
      %87 = sbr.rel (0) target = $region17
    $region16: #{tpu_custom_call.1} parent=1 // pred_region
      _
    $region17: #{tpu_custom_call.1} parent=1 // pred_fallthru
      _
    // Predicated region
    $region18: #{tpu_custom_call.1} parent=1 // pred_check
      _
    $region19: #{tpu_custom_call.1} parent=1 // pred_check_branch
      %89 = sbr.rel (0) target = $region21
    $region20: #{tpu_custom_call.1} parent=1 // pred_region
      _
    $region21: #{tpu_custom_call.1} parent=1 // pred_fallthru
      _
    // Predicated region
    $region22: #{tpu_custom_call.1} parent=1 // pred_check
      _
    $region23: #{tpu_custom_call.1} parent=1 // pred_check_branch
      %91 = sbr.rel (0) target = $region25
    $region24: #{tpu_custom_call.1} parent=1 // pred_region
      _
    $region25: #{tpu_custom_call.1} parent=1 // pred_fallthru
      _
    // Predicated region
    $region26: #{tpu_custom_call.1} parent=1 // pred_check
      _
    $region27: #{tpu_custom_call.1} parent=1 // pred_check_branch
      %93 = sbr.rel (0) target = $region29
    $region28: #{tpu_custom_call.1} parent=1 // pred_region
      _
    $region29: #{tpu_custom_call.1} parent=1 // pred_fallthru
      _
    // Predicated region
    $region30: #{tpu_custom_call.1} parent=1 // pred_check
      _
    $region31: #{tpu_custom_call.1} parent=1 // pred_check_branch
      %95 = sbr.rel (0) target = $region33
    $region32: #{tpu_custom_call.1} parent=1 // pred_region
      _
    $region33: #{tpu_custom_call.1} parent=1 // pred_fallthru
      _
    // Predicated region
    $region34: #{tpu_custom_call.1} parent=1 // pred_check
      _
    $region35: #{tpu_custom_call.1} parent=1 // pred_check_branch
      %97 = sbr.rel (0) target = $region37
    $region36: #{tpu_custom_call.1} parent=1 // pred_region
      _
    $region37: #{tpu_custom_call.1} parent=1 // pred_fallthru
      _
    // Predicated region
    $region38: #{tpu_custom_call.1} parent=1 // pred_check
      _
    $region39: #{tpu_custom_call.1} parent=1 // pred_check_branch
      %99 = sbr.rel (0) target = $region41
    $region40: #{tpu_custom_call.1} parent=1 // pred_region
      _
    $region41: #{tpu_custom_call.1} parent=1 // pred_fallthru
      _
    // Predicated region
    $region42: #{tpu_custom_call.1} parent=1 // pred_check
      _
    $region43: #{tpu_custom_call.1} parent=1 // pred_check_branch
      %101 = sbr.rel (0) target = $region45
    $region44: #{tpu_custom_call.1} parent=1 // pred_region
      _
    $region45: #{tpu_custom_call.1} parent=1 // pred_fallthru
      _
    // Predicated region
    $region46: #{tpu_custom_call.1} parent=1 // pred_check
      _
    $region47: #{tpu_custom_call.1} parent=1 // pred_check_branch
      %103 = sbr.rel (0) target = $region49
    $region48: #{tpu_custom_call.1} parent=1 // pred_region
      _
    $region49: #{tpu_custom_call.1} parent=1 // pred_fallthru
      _
    // Predicated region
    $region50: #{tpu_custom_call.1} parent=1 // pred_check
      _
    $region51: #{tpu_custom_call.1} parent=1 // pred_check_branch
      %105 = sbr.rel (0) target = $region53
    $region52: #{tpu_custom_call.1} parent=1 // pred_region
      _
    $region53: #{tpu_custom_call.1} parent=1 // pred_fallthru
      _
    // Predicated region
    $region54: #{tpu_custom_call.1} parent=1 // pred_check
      _
    $region55: #{tpu_custom_call.1} parent=1 // pred_check_branch
      %107 = sbr.rel (0) target = $region57
    $region56: #{tpu_custom_call.1} parent=1 // pred_region
      _
    $region57: #{tpu_custom_call.1} parent=1 // pred_fallthru
      _
    // Predicated region
    $region58: #{tpu_custom_call.1} parent=1 // pred_check
      _
    $region59: #{tpu_custom_call.1} parent=1 // pred_check_branch
      %109 = sbr.rel (0) target = $region61
    $region60: #{tpu_custom_call.1} parent=1 // pred_region
      _
    $region61: #{tpu_custom_call.1} parent=1 // pred_fallthru
      _
    // Predicated region
    $region62: #{tpu_custom_call.1} parent=1 // pred_check
      _
    $region63: #{tpu_custom_call.1} parent=1 // pred_check_branch
      %111 = sbr.rel (0) target = $region65
    $region64: #{tpu_custom_call.1} parent=1 // pred_region
      _
    $region65: #{tpu_custom_call.1} parent=1 // pred_fallthru
      _
    // Predicated region
    $region66: #{tpu_custom_call.1} parent=1 // pred_check
      _
    $region67: #{tpu_custom_call.1} parent=1 // pred_check_branch
      %113 = sbr.rel (0) target = $region69
    $region68: #{tpu_custom_call.1} parent=1 // pred_region
      _
    $region69: #{tpu_custom_call.1} parent=1 // pred_fallthru
      _
    // Predicated region
    $region70: #{tpu_custom_call.1} parent=1 // pred_check
      _
    $region71: #{tpu_custom_call.1} parent=1 // pred_check_branch
      %115 = sbr.rel (0) target = $region73
    $region72: #{tpu_custom_call.1} parent=1 // pred_region
      _
    $region73: #{tpu_custom_call.1} parent=1 // pred_fallthru
      _
    // Predicated region
    $region74: #{tpu_custom_call.1} parent=1 // pred_check
      _
    $region75: #{tpu_custom_call.1} parent=1 // pred_check_branch
      %117 = sbr.rel (0) target = $region77
    $region76: #{tpu_custom_call.1} parent=1 // pred_region
      _
    $region77: #{tpu_custom_call.1} parent=1 // pred_fallthru
      _
    // Predicated region
    $region78: #{tpu_custom_call.1} parent=1 // pred_check
      _
    $region79: #{tpu_custom_call.1} parent=1 // pred_check_branch
      %119 = sbr.rel (0) target = $region81
    $region80: #{tpu_custom_call.1} parent=1 // pred_region
      _
    $region81: #{tpu_custom_call.1} parent=1 // pred_fallthru
      _
    // Predicated region
    $region82: #{tpu_custom_call.1} parent=1 // pred_check
      _
    $region83: #{tpu_custom_call.1} parent=1 // pred_check_branch
      %121 = sbr.rel (0) target = $region85
    $region84: #{tpu_custom_call.1} parent=1 // pred_region
      _
    $region85: #{tpu_custom_call.1} parent=1 // pred_fallthru
      _
    // Predicated region
    $region86: #{tpu_custom_call.1} parent=1 // pred_check
      _
    $region87: #{tpu_custom_call.1} parent=1 // pred_check_branch
      %123 = sbr.rel (0) target = $region89
    $region88: #{tpu_custom_call.1} parent=1 // pred_region
      _
    $region89: #{tpu_custom_call.1} parent=1 // pred_fallthru
      _
    // Predicated region
    $region90: #{tpu_custom_call.1} parent=1 // pred_check
      _
    $region91: #{tpu_custom_call.1} parent=1 // pred_check_branch
      %125 = sbr.rel (0) target = $region93
    $region92: #{tpu_custom_call.1} parent=1 // pred_region
      _
    $region93: #{tpu_custom_call.1} parent=1 // pred_fallthru
      _
    // Predicated region
    $region94: #{tpu_custom_call.1} parent=1 // pred_check
      _
    $region95: #{tpu_custom_call.1} parent=1 // pred_check_branch
      %127 = sbr.rel (0) target = $region97
    $region96: #{tpu_custom_call.1} parent=1 // pred_region
      _
    $region97: #{tpu_custom_call.1} parent=1 // pred_fallthru
      _
    // Predicated region
    $region98: #{tpu_custom_call.1} parent=1 // pred_check
      _
    $region99: #{tpu_custom_call.1} parent=1 // pred_check_branch
      %129 = sbr.rel (0) target = $region101
    $region100: #{tpu_custom_call.1} parent=1 // pred_region
      _
    $region101: #{tpu_custom_call.1} parent=1 // pred_fallthru
      _
    // Predicated region
    $region102: #{tpu_custom_call.1} parent=1 // pred_check
      _
    $region103: #{tpu_custom_call.1} parent=1 // pred_check_branch
      %131 = sbr.rel (0) target = $region105
    $region104: #{tpu_custom_call.1} parent=1 // pred_region
      _
    $region105: #{tpu_custom_call.1} parent=1 // pred_fallthru
      _
    // Predicated region
    $region106: #{tpu_custom_call.1} parent=1 // pred_check
      _
    $region107: #{tpu_custom_call.1} parent=1 // pred_check_branch
      %133 = sbr.rel (0) target = $region109
    $region108: #{tpu_custom_call.1} parent=1 // pred_region
      _
    $region109: #{tpu_custom_call.1} parent=1 // pred_fallthru
      _
    // Predicated region
    $region110: #{tpu_custom_call.1} parent=1 // pred_check
      _
    $region111: #{tpu_custom_call.1} parent=1 // pred_check_branch
      %135 = sbr.rel (0) target = $region113
    $region112: #{tpu_custom_call.1} parent=1 // pred_region
      _
    $region113: #{tpu_custom_call.1} parent=1 // pred_fallthru
      _
    // Predicated region
    $region114: #{tpu_custom_call.1} parent=1 // pred_check
      _
    $region115: #{tpu_custom_call.1} parent=1 // pred_check_branch
      %137 = sbr.rel (0) target = $region117
    $region116: #{tpu_custom_call.1} parent=1 // pred_region
      _
    $region117: #{tpu_custom_call.1} parent=1 // pred_fallthru
      _
    // Predicated region
    $region118: #{tpu_custom_call.1} parent=1 // pred_check
      _
    $region119: #{tpu_custom_call.1} parent=1 // pred_check_branch
      %139 = sbr.rel (0) target = $region121
    $region120: #{tpu_custom_call.1} parent=1 // pred_region
      _
    $region121: #{tpu_custom_call.1} parent=1 // pred_fallthru
      _
    // Predicated region
    $region122: #{tpu_custom_call.1} parent=1 // pred_check
      _
    $region123: #{tpu_custom_call.1} parent=1 // pred_check_branch
      %141 = sbr.rel (0) target = $region125
    $region124: #{tpu_custom_call.1} parent=1 // pred_region
      _
    $region125: #{tpu_custom_call.1} parent=1 // pred_fallthru
      _
    // Predicated region
    $region126: #{tpu_custom_call.1} parent=1 // pred_check
      _
    $region127: #{tpu_custom_call.1} parent=1 // pred_check_branch
      %143 = sbr.rel (0) target = $region129
    $region128: #{tpu_custom_call.1} parent=1 // pred_region
      _
    $region129: #{tpu_custom_call.1} parent=1 // pred_fallthru
      _
    // Predicated region
    $region130: #{tpu_custom_call.1} parent=1 // pred_check
      _
    $region131: #{tpu_custom_call.1} parent=1 // pred_check_branch
      %145 = sbr.rel (0) target = $region133
    $region132: #{tpu_custom_call.1} parent=1 // pred_region
      %146 = dma.done [#allocation4], 16
    $region133: #{tpu_custom_call.1} parent=1 // pred_fallthru
      _
    %147 = sfence
    %v148 = vlaneseq
    %v149 = vshrl.u32 %v148, 7
    %v150 = vadd.s32 %v149, 8
    %v151 = vadd.s32 %v149, 16
    %v152 = vadd.s32 %v149, 24
    %v153 = vlaneseq
    %v154 = vand.u32 %v153, 127
    %vm155 = vcmp.ge.s32.totalorder %v149, 0
    %vm156 = vcmp.ge.s32.totalorder %v150, 0
    %vm157 = vcmp.ge.s32.totalorder %v151, 0
    %vm158 = vcmp.ge.s32.totalorder %v152, 0
    %vm159 = vcmp.lt.s32.totalorder %v149, 16
    %vm160 = vcmp.lt.s32.totalorder %v150, 16
    %vm161 = vcmp.lt.s32.totalorder %v151, 16
    %vm162 = vcmp.lt.s32.totalorder %v152, 16
    %vm163 = vmand %vm155, %vm159
    %vm164 = vmand %vm156, %vm160
    %vm165 = vmand %vm157, %vm161
    %vm166 = vmand %vm158, %vm162
    %vm167 = vcmp.ge.s32.totalorder %v154, 0
    %vm168 = vmand %vm163, %vm167
    %vm169 = vmand %vm164, %vm167
    %vm170 = vmand %vm165, %vm167
    %vm171 = vmand %vm166, %vm167
    %vm172 = vcmp.lt.s32.totalorder %v154, 16
    %vm173 = vmand %vm168, %vm172
    %vm174 = vmand %vm169, %vm172
    %vm175 = vmand %vm170, %vm172
    %vm176 = vmand %vm171, %vm172
    %v177 = vsel %vm173, 0.0, -1e+09
    %v178 = vsel %vm174, 0.0, -1e+09
    %v179 = vsel %vm175, 0.0, -1e+09
    %v180 = vsel %vm176, 0.0, -1e+09
    %vm181 = vcmp.ge.s32.totalorder %v149, 16
    %vm182 = vcmp.ge.s32.totalorder %v150, 16
    %vm183 = vcmp.ge.s32.totalorder %v151, 16
    %vm184 = vcmp.ge.s32.totalorder %v152, 16
    %vm185 = vcmp.lt.s32.totalorder %v149, 32
    %vm186 = vcmp.lt.s32.totalorder %v150, 32
    %vm187 = vcmp.lt.s32.totalorder %v151, 32
    %vm188 = vcmp.lt.s32.totalorder %v152, 32
    %vm189 = vmand %vm181, %vm185
    %vm190 = vmand %vm182, %vm186
    %vm191 = vmand %vm183, %vm187
    %vm192 = vmand %vm184, %vm188
    %vm193 = vcmp.ge.s32.totalorder %v154, 16
    %vm194 = vmand %vm189, %vm193
    %vm195 = vmand %vm190, %vm193
    %vm196 = vmand %vm191, %vm193
    %vm197 = vmand %vm192, %vm193
    %vm198 = vcmp.lt.s32.totalorder %v154, 32
    %vm199 = vmand %vm194, %vm198
    %vm200 = vmand %vm195, %vm198
    %vm201 = vmand %vm196, %vm198
    %vm202 = vmand %vm197, %vm198
    %v203 = vsel %vm199, 0.0, %v177
    %v204 = vsel %vm200, 0.0, %v178
    %v205 = vsel %vm201, 0.0, %v179
    %v206 = vsel %vm202, 0.0, %v180
    %vm207 = vcmp.lt.s32.totalorder %v149, 8
    %vm208 = vcmp.lt.s32.totalorder %v150, 8
    %vm209 = vmand %vm155, %vm207
    %vm210 = vmand %vm156, %vm208
    %vm211 = vmand %vm209, %vm167
    %vm212 = vmand %vm210, %vm167
    %vm213 = vcmp.lt.s32.totalorder %v154, 8
    %vm214 = vmand %vm211, %vm213
    %vm215 = vmand %vm212, %vm213
    %vm216 = vcmp.le.s32.totalorder %v154, %v149
    %vm217 = vcmp.le.s32.totalorder %v154, %v150
    %vm218 = vmand %vm214, %vm216
    %vm219 = vmand %vm215, %vm217
    %s220 = sld [smem:[#allocation2]]
    %v221 = vstv %s220
    %vm222 = vcmp.lt.s32.totalorder %v154, %v221
    %vm223 = vmand %vm218, %vm222
    %vm224 = vmand %vm219, %vm222
    %v225 = vsel %vm223, 0.0, -1e+09
    %v226 = vsel %vm224, 0.0, -1e+09
    %vm227 = vcmp.ge.s32.totalorder %v149, 8
    %vm228 = vcmp.ge.s32.totalorder %v150, 8
    %vm229 = vmand %vm227, %vm159
    %vm230 = vmand %vm228, %vm160
    %vm231 = vcmp.ge.s32.totalorder %v154, 8
    %vm232 = vmand %vm229, %vm231
    %vm233 = vmand %vm230, %vm231
    %vm234 = vmand %vm232, %vm172
    %vm235 = vmand %vm233, %vm172
    %v236 = vsub.s32 %v154, 8
    %v237 = vsub.s32 %v149, 8
    %vm238 = vcmp.le.s32.totalorder %v236, %v237
    %vm239 = vcmp.le.s32.totalorder %v236, %v149
    %vm240 = vmand %vm234, %vm238
    %vm241 = vmand %vm235, %vm239
    %s242 = sld [smem:[#allocation2 + $0x1]]
    %v243 = vstv %s242
    %vm244 = vcmp.lt.s32.totalorder %v236, %v243
    %vm245 = vmand %vm240, %vm244
    %vm246 = vmand %vm241, %vm244
    %v247 = vsel %vm245, 0.0, %v225
    %v248 = vsel %vm246, 0.0, %v226
    %vm249 = vmand %vm211, %vm172
    %vm250 = vmand %vm212, %vm172
    %v251 = vsel %vm249, 0.0, -1e+09
    %v252 = vsel %vm250, 0.0, -1e+09
    %vm253 = vmand %vm229, %vm193
    %vm254 = vmand %vm230, %vm193
    %vm255 = vmand %vm253, %vm198
    %vm256 = vmand %vm254, %vm198
    %v257 = vsel %vm255, 0.0, %v251
    %v258 = vsel %vm256, 0.0, %v252
    %v259 = vld [vmem:[%s3] sm:$0xff]
    %v260 = vld [vmem:[%s3 + $0x8] sm:$0xff]
    %v261 = vld [vmem:[%s3 + $0x10] sm:$0xff]
    %v262 = vld [vmem:[%s3 + $0x18] sm:$0xff]
    %v263 = vld [vmem:[%s9] sm:$0xff]
    %v264 = vld [vmem:[%s9 + $0x8] sm:$0xff]
    %v265 = vld [vmem:[%s9 + $0x10] sm:$0xff]
    %v266 = vld [vmem:[%s9 + $0x18] sm:$0xff]
    %v267 = vld [vmem:[%s9 + $0x20] sm:$0xff]
    %v268 = vld [vmem:[%s9 + $0x28] sm:$0xff]
    %v269 = vld [vmem:[%s9 + $0x30] sm:$0xff]
    %v270 = vld [vmem:[%s9 + $0x38] sm:$0xff]
    %v271 = vld [vmem:[%s11] sm:$0x1]
    %v273 = vlaneseq
    %v274 = vshrl.u32 %v273, 7
    %v275 = vsub.s32 0, %v274
    %v276 = vrot.slane %v271, %v275
    %vm278 = vcmask 523264
    %v280 = vsel %vm278, %v259, 0
    %v283 = vsel %vm278, %v260, 0
    %v286 = vsel %vm278, %v261, 0
    %v289 = vsel %vm278, %v262, 0
    %291 = vmatprep.subr.mxu0 0.0
    %292 = vmatpush1.msra.mxu0 %v263
    %293 = vmatprep.subr.mxu0 0.0
    %294 = vmatpush1.msra.mxu0 %v264
    %295 = vmatprep.subr.mxu0 0.0
    %296 = vmatpush1.msra.mxu0 %v265
    %297 = vmatprep.subr.mxu0 0.0
    %298 = vmatpush1.msra.mxu0 %v266
    %299 = vmatprep.subr.mxu0 0.0
    %300 = vmatpush1.msra.mxu0 %v267
    %301 = vmatprep.subr.mxu0 0.0
    %302 = vmatpush1.msra.mxu0 %v268
    %303 = vmatprep.subr.mxu0 0.0
    %304 = vmatpush1.msra.mxu0 %v269
    %305 = vmatprep.subr.mxu0 0.0
    %306 = vmatpush1.msra.mxu0 %v270
    %307 = vmatprep.subr.mxu0 0.0
    %308 = vmatpush1.msra.mxu0 0.0
    %309 = vmatprep.subr.mxu0 0.0
    %310 = vmatpush1.msra.mxu0 0.0
    %311 = vmatprep.subr.mxu0 0.0
    %312 = vmatpush1.msra.mxu0 0.0
    %313 = vmatprep.subr.mxu0 0.0
    %314 = vmatpush1.msra.mxu0 0.0
    %315 = vmatprep.subr.mxu0 0.0
    %316 = vmatpush1.msra.mxu0 0.0
    %317 = vmatprep.subr.mxu0 0.0
    %318 = vmatpush1.msra.mxu0 0.0
    %319 = vmatprep.subr.mxu0 0.0
    %320 = vmatpush1.msra.mxu0 0.0
    %321 = vmatprep.subr.mxu0 0.0
    %322 = vmatpush1.msra.mxu0 0.0
    %323 = vmatprep.subr.mxu0 0.0
    %324 = vmatpush1.msra.mxu0 0.0
    %325 = vmatprep.subr.mxu0 0.0
    %326 = vmatpush1.msra.mxu0 0.0
    %327 = vmatprep.subr.mxu0 0.0
    %328 = vmatpush1.msra.mxu0 0.0
    %329 = vmatprep.subr.mxu0 0.0
    %330 = vmatpush1.msra.mxu0 0.0
    %331 = vmatprep.subr.mxu0 0.0
    %332 = vmatpush1.msra.mxu0 0.0
    %333 = vmatprep.subr.mxu0 0.0
    %334 = vmatpush1.msra.mxu0 0.0
    %335 = vmatprep.subr.mxu0 0.0
    %336 = vmatpush1.msra.mxu0 0.0
    %337 = vmatprep.subr.mxu0 0.0
    %338 = vmatpush1.msra.mxu0 0.0
    %339 = vmatprep.subr.mxu0 0.0
    %340 = vmatpush1.msra.mxu0 0.0
    %341 = vmatprep.subr.mxu0 0.0
    %342 = vmatpush1.msra.mxu0 0.0
    %343 = vmatprep.subr.mxu0 0.0
    %344 = vmatpush1.msra.mxu0 0.0
    %345 = vmatprep.subr.mxu0 0.0
    %346 = vmatpush1.msra.mxu0 0.0
    %347 = vmatprep.subr.mxu0 0.0
    %348 = vmatpush1.msra.mxu0 0.0
    %349 = vmatprep.subr.mxu0 0.0
    %350 = vmatpush1.msra.mxu0 0.0
    %351 = vmatprep.subr.mxu0 0.0
    %352 = vmatpush1.msra.mxu0 0.0
    %353 = vmatprep.subr.mxu0 0.0
    %354 = vmatpush1.msra.mxu0 0.0
    %355 = vmatprep.mubr.f32.mxu0 0.0
    %356 = vmatmul.mubr.f32.gmra.mrb[0].mxu0 %v280
    %v357 = vpop.f32.mrb[0].mxu0
    %v358 = vadd.f32 %v276, %v357
    %v359 = vpop.f32.mrb[0].mxu0
    %360 = vmatprep.mubr.f32.mxu0 0.0
    %361 = vmatmul.mubr.f32.gmra.mrb[0].mxu0 %v283
    %v362 = vpop.f32.mrb[0].mxu0
    %v363 = vadd.f32 %v276, %v362
    %v364 = vpop.f32.mrb[0].mxu0
    %365 = vmatprep.mubr.f32.mxu0 0.0
    %366 = vmatmul.mubr.f32.gmra.mrb[0].mxu0 %v286
    %v367 = vpop.f32.mrb[0].mxu0
    %v368 = vadd.f32 %v276, %v367
    %v369 = vpop.f32.mrb[0].mxu0
    %370 = vmatprep.mubr.f32.mxu0 0.0
    %371 = vmatmul.mubr.f32.gmra.mrb[0].mxu0 %v289
    %v372 = vpop.f32.mrb[0].mxu0
    %v373 = vadd.f32 %v276, %v372
    %v374 = vpop.f32.mrb[0].mxu0
    %375 = vdwg.mxu0
    %v376 = vld [vmem:[%s7] sm:$0xff]
    %v377 = vld [vmem:[%s7 + $0x8] sm:$0xff]
    %v378 = vld [vmem:[%s7 + $0x10] sm:$0xff]
    %v379 = vld [vmem:[%s7 + $0x18] sm:$0xff]
    %v380 = vadd.f32 %v358, %v376
    %v381 = vadd.f32 %v363, %v377
    %v382 = vadd.f32 %v368, %v378
    %v383 = vadd.f32 %v373, %v379
    %v384 = vld [vmem:[%s29] sm:$0x1]
    %v385 = vld [vmem:[%s29 + $0x1] sm:$0x1]
    %v386 = vld [vmem:[%s29 + $0x2] sm:$0x1]
    %v387 = vld [vmem:[%s31] sm:$0x1]
    %v388 = vld [vmem:[%s31 + $0x1] sm:$0x1]
    %v389 = vld [vmem:[%s31 + $0x2] sm:$0x1]
    %v390 = vld [vmem:[%s13] sm:$0xff]
    %v391 = vld [vmem:[%s13 + $0x8] sm:$0xff]
    %v392 = vld [vmem:[%s13 + $0x10] sm:$0xff]
    %v393 = vld [vmem:[%s13 + $0x18] sm:$0xff]
    %v394 = vld [vmem:[%s13 + $0x20] sm:$0xff]
    %v395 = vld [vmem:[%s13 + $0x28] sm:$0xff]
    %v396 = vld [vmem:[%s13 + $0x30] sm:$0xff]
    %v397 = vld [vmem:[%s13 + $0x38] sm:$0xff]
    %v398 = vld [vmem:[%s13 + $0x40] sm:$0xff]
    %v399 = vld [vmem:[%s13 + $0x48] sm:$0xff]
    %v400 = vld [vmem:[%s13 + $0x50] sm:$0xff]
    %v401 = vld [vmem:[%s13 + $0x58] sm:$0xff]
    %v402 = vld [vmem:[%s13 + $0x60] sm:$0xff]
    %v403 = vld [vmem:[%s13 + $0x68] sm:$0xff]
    %v404 = vld [vmem:[%s13 + $0x70] sm:$0xff]
    %v405 = vld [vmem:[%s13 + $0x78] sm:$0xff]
    %v406 = vld [vmem:[%s13 + $0x80] sm:$0xff]
    %v407 = vld [vmem:[%s13 + $0x88] sm:$0xff]
    %v408 = vld [vmem:[%s13 + $0x90] sm:$0xff]
    %v409 = vld [vmem:[%s13 + $0x98] sm:$0xff]
    %v410 = vld [vmem:[%s13 + $0xa0] sm:$0xff]
    %v411 = vld [vmem:[%s13 + $0xa8] sm:$0xff]
    %v412 = vld [vmem:[%s13 + $0xb0] sm:$0xff]
    %v413 = vld [vmem:[%s13 + $0xb8] sm:$0xff]
    %v414 = vld [vmem:[%s15] sm:$0x1]
    %v415 = vld [vmem:[%s15 + $0x1] sm:$0x1]
    %v416 = vld [vmem:[%s15 + $0x2] sm:$0x1]
    %v417 = vld [vmem:[%s15 + $0x3] sm:$0x1]
    %v418 = vld [vmem:[%s15 + $0x4] sm:$0x1]
    %v419 = vld [vmem:[%s15 + $0x5] sm:$0x1]
    %v420 = vld [vmem:[%s17] sm:$0xff]
    %v421 = vld [vmem:[%s17 + $0x8] sm:$0xff]
    %v422 = vld [vmem:[%s17 + $0x10] sm:$0xff]
    %v423 = vld [vmem:[%s17 + $0x18] sm:$0xff]
    %v424 = vld [vmem:[%s19] sm:$0x1]
    %v426 = vlaneseq
    %v427 = vshrl.u32 %v426, 7
    %v428 = vsub.s32 0, %v427
    %v429 = vrot.slane %v414, %v428
    %vm431 = vcmask 261120
    %v433 = vsel %vm431, %v380, 0
    %v436 = vsel %vm431, %v381, 0
    %v439 = vsel %vm431, %v382, 0
    %v442 = vsel %vm431, %v383, 0
    %444 = vmatprep.subr.mxu0 0.0
    %445 = vmatpush1.msra.mxu0 %v390
    %446 = vmatprep.subr.mxu0 0.0
    %447 = vmatpush1.msra.mxu0 %v391
    %448 = vmatprep.subr.mxu0 0.0
    %449 = vmatpush1.msra.mxu0 %v392
    %450 = vmatprep.subr.mxu0 0.0
    %451 = vmatpush1.msra.mxu0 %v393
    %452 = vmatprep.subr.mxu0 0.0
    %453 = vmatpush1.msra.mxu0 0.0
    %454 = vmatprep.subr.mxu0 0.0
    %455 = vmatpush1.msra.mxu0 0.0
    %456 = vmatprep.subr.mxu0 0.0
    %457 = vmatpush1.msra.mxu0 0.0
    %458 = vmatprep.subr.mxu0 0.0
    %459 = vmatpush1.msra.mxu0 0.0
    %460 = vmatprep.subr.mxu0 0.0
    %461 = vmatpush1.msra.mxu0 0.0
    %462 = vmatprep.subr.mxu0 0.0
    %463 = vmatpush1.msra.mxu0 0.0
    %464 = vmatprep.subr.mxu0 0.0
    %465 = vmatpush1.msra.mxu0 0.0
    %466 = vmatprep.subr.mxu0 0.0
    %467 = vmatpush1.msra.mxu0 0.0
    %468 = vmatprep.subr.mxu0 0.0
    %469 = vmatpush1.msra.mxu0 0.0
    %470 = vmatprep.subr.mxu0 0.0
    %471 = vmatpush1.msra.mxu0 0.0
    %472 = vmatprep.subr.mxu0 0.0
    %473 = vmatpush1.msra.mxu0 0.0
    %474 = vmatprep.subr.mxu0 0.0
    %475 = vmatpush1.msra.mxu0 0.0
    %476 = vmatprep.subr.mxu0 0.0
    %477 = vmatpush1.msra.mxu0 0.0
    %478 = vmatprep.subr.mxu0 0.0
    %479 = vmatpush1.msra.mxu0 0.0
    %480 = vmatprep.subr.mxu0 0.0
    %481 = vmatpush1.msra.mxu0 0.0
    %482 = vmatprep.subr.mxu0 0.0
    %483 = vmatpush1.msra.mxu0 0.0
    %484 = vmatprep.subr.mxu0 0.0
    %485 = vmatpush1.msra.mxu0 0.0
    %486 = vmatprep.subr.mxu0 0.0
    %487 = vmatpush1.msra.mxu0 0.0
    %488 = vmatprep.subr.mxu0 0.0
    %489 = vmatpush1.msra.mxu0 0.0
    %490 = vmatprep.subr.mxu0 0.0
    %491 = vmatpush1.msra.mxu0 0.0
    %492 = vmatprep.subr.mxu0 0.0
    %493 = vmatpush1.msra.mxu0 0.0
    %494 = vmatprep.subr.mxu0 0.0
    %495 = vmatpush1.msra.mxu0 0.0
    %496 = vmatprep.subr.mxu0 0.0
    %497 = vmatpush1.msra.mxu0 0.0
    %498 = vmatprep.subr.mxu0 0.0
    %499 = vmatpush1.msra.mxu0 0.0
    %500 = vmatprep.subr.mxu0 0.0
    %501 = vmatpush1.msra.mxu0 0.0
    %502 = vmatprep.subr.mxu0 0.0
    %503 = vmatpush1.msra.mxu0 0.0
    %504 = vmatprep.subr.mxu0 0.0
    %505 = vmatpush1.msra.mxu0 0.0
    %506 = vmatprep.subr.mxu0 0.0
    %507 = vmatpush1.msra.mxu0 0.0
    %508 = vmatprep.mubr.f32.mxu0 0.0
    %509 = vmatmul.mubr.f32.gmra.mrb[0].mxu0 %v433
    %v510 = vpop.f32.mrb[0].mxu0
    %v511 = vadd.f32 %v429, %v510
    %v512 = vpop.f32.mrb[0].mxu0
    %513 = vmatprep.mubr.f32.mxu0 0.0
    %514 = vmatmul.mubr.f32.gmra.mrb[0].mxu0 %v436
    %v515 = vpop.f32.mrb[0].mxu0
    %v516 = vadd.f32 %v429, %v515
    %v517 = vpop.f32.mrb[0].mxu0
    %518 = vmatprep.mubr.f32.mxu0 0.0
    %519 = vmatmul.mubr.f32.gmra.mrb[0].mxu0 %v439
    %v520 = vpop.f32.mrb[0].mxu0
    %v521 = vadd.f32 %v429, %v520
    %v522 = vpop.f32.mrb[0].mxu0
    %523 = vmatprep.mubr.f32.mxu0 0.0
    %524 = vmatmul.mubr.f32.gmra.mrb[0].mxu0 %v442
    %v525 = vpop.f32.mrb[0].mxu0
    %v526 = vadd.f32 %v429, %v525
    %v527 = vpop.f32.mrb[0].mxu0
    %528 = vdwg.mxu0
    %v530 = vlaneseq
    %v531 = vshrl.u32 %v530, 7
    %v532 = vsub.s32 0, %v531
    %v533 = vrot.slane %v416, %v532
    %535 = vmatprep.subr.mxu0 0.0
    %536 = vmatpush1.msra.mxu0 %v398
    %537 = vmatprep.subr.mxu0 0.0
    %538 = vmatpush1.msra.mxu0 %v399
    %539 = vmatprep.subr.mxu0 0.0
    %540 = vmatpush1.msra.mxu0 %v400
    %541 = vmatprep.subr.mxu0 0.0
    %542 = vmatpush1.msra.mxu0 %v401
    %543 = vmatprep.subr.mxu0 0.0
    %544 = vmatpush1.msra.mxu0 0.0
    %545 = vmatprep.subr.mxu0 0.0
    %546 = vmatpush1.msra.mxu0 0.0
    %547 = vmatprep.subr.mxu0 0.0
    %548 = vmatpush1.msra.mxu0 0.0
    %549 = vmatprep.subr.mxu0 0.0
    %550 = vmatpush1.msra.mxu0 0.0
    %551 = vmatprep.subr.mxu0 0.0
    %552 = vmatpush1.msra.mxu0 0.0
    %553 = vmatprep.subr.mxu0 0.0
    %554 = vmatpush1.msra.mxu0 0.0
    %555 = vmatprep.subr.mxu0 0.0
    %556 = vmatpush1.msra.mxu0 0.0
    %557 = vmatprep.subr.mxu0 0.0
    %558 = vmatpush1.msra.mxu0 0.0
    %559 = vmatprep.subr.mxu0 0.0
    %560 = vmatpush1.msra.mxu0 0.0
    %561 = vmatprep.subr.mxu0 0.0
    %562 = vmatpush1.msra.mxu0 0.0
    %563 = vmatprep.subr.mxu0 0.0
    %564 = vmatpush1.msra.mxu0 0.0
    %565 = vmatprep.subr.mxu0 0.0
    %566 = vmatpush1.msra.mxu0 0.0
    %567 = vmatprep.subr.mxu0 0.0
    %568 = vmatpush1.msra.mxu0 0.0
    %569 = vmatprep.subr.mxu0 0.0
    %570 = vmatpush1.msra.mxu0 0.0
    %571 = vmatprep.subr.mxu0 0.0
    %572 = vmatpush1.msra.mxu0 0.0
    %573 = vmatprep.subr.mxu0 0.0
    %574 = vmatpush1.msra.mxu0 0.0
    %575 = vmatprep.subr.mxu0 0.0
    %576 = vmatpush1.msra.mxu0 0.0
    %577 = vmatprep.subr.mxu0 0.0
    %578 = vmatpush1.msra.mxu0 0.0
    %579 = vmatprep.subr.mxu0 0.0
    %580 = vmatpush1.msra.mxu0 0.0
    %581 = vmatprep.subr.mxu0 0.0
    %582 = vmatpush1.msra.mxu0 0.0
    %583 = vmatprep.subr.mxu0 0.0
    %584 = vmatpush1.msra.mxu0 0.0
    %585 = vmatprep.subr.mxu0 0.0
    %586 = vmatpush1.msra.mxu0 0.0
    %587 = vmatprep.subr.mxu0 0.0
    %588 = vmatpush1.msra.mxu0 0.0
    %589 = vmatprep.subr.mxu0 0.0
    %590 = vmatpush1.msra.mxu0 0.0
    %591 = vmatprep.subr.mxu0 0.0
    %592 = vmatpush1.msra.mxu0 0.0
    %593 = vmatprep.subr.mxu0 0.0
    %594 = vmatpush1.msra.mxu0 0.0
    %595 = vmatprep.subr.mxu0 0.0
    %596 = vmatpush1.msra.mxu0 0.0
    %597 = vmatprep.subr.mxu0 0.0
    %598 = vmatpush1.msra.mxu0 0.0
    %599 = vmatprep.mubr.f32.mxu0 0.0
    %600 = vmatmul.mubr.f32.gmra.mrb[0].mxu0 %v433
    %v601 = vpop.f32.mrb[0].mxu0
    %v602 = vadd.f32 %v533, %v601
    %v603 = vpop.f32.mrb[0].mxu0
    %604 = vmatprep.mubr.f32.mxu0 0.0
    %605 = vmatmul.mubr.f32.gmra.mrb[0].mxu0 %v436
    %v606 = vpop.f32.mrb[0].mxu0
    %v607 = vadd.f32 %v533, %v606
    %v608 = vpop.f32.mrb[0].mxu0
    %609 = vmatprep.mubr.f32.mxu0 0.0
    %610 = vmatmul.mubr.f32.gmra.mrb[0].mxu0 %v439
    %v611 = vpop.f32.mrb[0].mxu0
    %v612 = vadd.f32 %v533, %v611
    %v613 = vpop.f32.mrb[0].mxu0
    %614 = vmatprep.mubr.f32.mxu0 0.0
    %615 = vmatmul.mubr.f32.gmra.mrb[0].mxu0 %v442
    %v616 = vpop.f32.mrb[0].mxu0
    %v617 = vadd.f32 %v533, %v616
    %v618 = vpop.f32.mrb[0].mxu0
    %619 = vdwg.mxu0
    %v621 = vlaneseq
    %v622 = vshrl.u32 %v621, 7
    %v623 = vsub.s32 0, %v622
    %v624 = vrot.slane %v418, %v623
    %626 = vmatprep.subr.mxu0 0.0
    %627 = vmatpush1.msra.mxu0 %v406
    %628 = vmatprep.subr.mxu0 0.0
    %629 = vmatpush1.msra.mxu0 %v407
    %630 = vmatprep.subr.mxu0 0.0
    %631 = vmatpush1.msra.mxu0 %v408
    %632 = vmatprep.subr.mxu0 0.0
    %633 = vmatpush1.msra.mxu0 %v409
    %634 = vmatprep.subr.mxu0 0.0
    %635 = vmatpush1.msra.mxu0 0.0
    %636 = vmatprep.subr.mxu0 0.0
    %637 = vmatpush1.msra.mxu0 0.0
    %638 = vmatprep.subr.mxu0 0.0
    %639 = vmatpush1.msra.mxu0 0.0
    %640 = vmatprep.subr.mxu0 0.0
    %641 = vmatpush1.msra.mxu0 0.0
    %642 = vmatprep.subr.mxu0 0.0
    %643 = vmatpush1.msra.mxu0 0.0
    %644 = vmatprep.subr.mxu0 0.0
    %645 = vmatpush1.msra.mxu0 0.0
    %646 = vmatprep.subr.mxu0 0.0
    %647 = vmatpush1.msra.mxu0 0.0
    %648 = vmatprep.subr.mxu0 0.0
    %649 = vmatpush1.msra.mxu0 0.0
    %650 = vmatprep.subr.mxu0 0.0
    %651 = vmatpush1.msra.mxu0 0.0
    %652 = vmatprep.subr.mxu0 0.0
    %653 = vmatpush1.msra.mxu0 0.0
    %654 = vmatprep.subr.mxu0 0.0
    %655 = vmatpush1.msra.mxu0 0.0
    %656 = vmatprep.subr.mxu0 0.0
    %657 = vmatpush1.msra.mxu0 0.0
    %658 = vmatprep.subr.mxu0 0.0
    %659 = vmatpush1.msra.mxu0 0.0
    %660 = vmatprep.subr.mxu0 0.0
    %661 = vmatpush1.msra.mxu0 0.0
    %662 = vmatprep.subr.mxu0 0.0
    %663 = vmatpush1.msra.mxu0 0.0
    %664 = vmatprep.subr.mxu0 0.0
    %665 = vmatpush1.msra.mxu0 0.0
    %666 = vmatprep.subr.mxu0 0.0
    %667 = vmatpush1.msra.mxu0 0.0
    %668 = vmatprep.subr.mxu0 0.0
    %669 = vmatpush1.msra.mxu0 0.0
    %670 = vmatprep.subr.mxu0 0.0
    %671 = vmatpush1.msra.mxu0 0.0
    %672 = vmatprep.subr.mxu0 0.0
    %673 = vmatpush1.msra.mxu0 0.0
    %674 = vmatprep.subr.mxu0 0.0
    %675 = vmatpush1.msra.mxu0 0.0
    %676 = vmatprep.subr.mxu0 0.0
    %677 = vmatpush1.msra.mxu0 0.0
    %678 = vmatprep.subr.mxu0 0.0
    %679 = vmatpush1.msra.mxu0 0.0
    %680 = vmatprep.subr.mxu0 0.0
    %681 = vmatpush1.msra.mxu0 0.0
    %682 = vmatprep.subr.mxu0 0.0
    %683 = vmatpush1.msra.mxu0 0.0
    %684 = vmatprep.subr.mxu0 0.0
    %685 = vmatpush1.msra.mxu0 0.0
    %686 = vmatprep.subr.mxu0 0.0
    %687 = vmatpush1.msra.mxu0 0.0
    %688 = vmatprep.subr.mxu0 0.0
    %689 = vmatpush1.msra.mxu0 0.0
    %690 = vmatprep.mubr.f32.mxu0 0.0
    %691 = vmatmul.mubr.f32.gmra.mrb[0].mxu0 %v433
    %v692 = vpop.f32.mrb[0].mxu0
    %v693 = vadd.f32 %v624, %v692
    %v694 = vpop.f32.mrb[0].mxu0
    %695 = vmatprep.mubr.f32.mxu0 0.0
    %696 = vmatmul.mubr.f32.gmra.mrb[0].mxu0 %v436
    %v697 = vpop.f32.mrb[0].mxu0
    %v698 = vadd.f32 %v624, %v697
    %v699 = vpop.f32.mrb[0].mxu0
    %700 = vmatprep.mubr.f32.mxu0 0.0
    %701 = vmatmul.mubr.f32.gmra.mrb[0].mxu0 %v439
    %v702 = vpop.f32.mrb[0].mxu0
    %v703 = vadd.f32 %v624, %v702
    %v704 = vpop.f32.mrb[0].mxu0
    %705 = vmatprep.mubr.f32.mxu0 0.0
    %706 = vmatmul.mubr.f32.gmra.mrb[0].mxu0 %v442
    %v707 = vpop.f32.mrb[0].mxu0
    %v708 = vadd.f32 %v624, %v707
    %v709 = vpop.f32.mrb[0].mxu0
    %710 = vdwg.mxu0
    %vm711 = vcmask 130048
    %v713 = vsel %vm711, %v511, 0
    %v716 = vsel %vm711, %v516, 0
    %v719 = vsel %vm711, %v521, 0
    %v722 = vsel %vm711, %v526, 0
    %v725 = vsel %vm711, %v602, 0
    %v728 = vsel %vm711, %v607, 0
    %v731 = vsel %vm711, %v612, 0
    %v734 = vsel %vm711, %v617, 0
    %736 = vmatprep.subr.mxu0 0.0
    %737 = vmatpush1.xpose.msra.mxu0 %v725
    %738 = vmatprep.subr.mxu0 0.0
    %739 = vmatpush1.xpose.msra.mxu0 %v728
    %740 = vmatprep.subr.mxu0 0.0
    %741 = vmatpush1.xpose.msra.mxu0 %v731
    %742 = vmatprep.subr.mxu0 0.0
    %743 = vmatpush1.xpose.msra.mxu0 %v734
    %744 = vmatprep.subr.mxu0 0.0
    %745 = vmatpush1.xpose.msra.mxu0 0.0
    %746 = vmatprep.subr.mxu0 0.0
    %747 = vmatpush1.xpose.msra.mxu0 0.0
    %748 = vmatprep.subr.mxu0 0.0
    %749 = vmatpush1.xpose.msra.mxu0 0.0
    %750 = vmatprep.subr.mxu0 0.0
    %751 = vmatpush1.xpose.msra.mxu0 0.0
    %752 = vmatprep.subr.mxu0 0.0
    %753 = vmatpush1.xpose.msra.mxu0 0.0
    %754 = vmatprep.subr.mxu0 0.0
    %755 = vmatpush1.xpose.msra.mxu0 0.0
    %756 = vmatprep.subr.mxu0 0.0
    %757 = vmatpush1.xpose.msra.mxu0 0.0
    %758 = vmatprep.subr.mxu0 0.0
    %759 = vmatpush1.xpose.msra.mxu0 0.0
    %760 = vmatprep.subr.mxu0 0.0
    %761 = vmatpush1.xpose.msra.mxu0 0.0
    %762 = vmatprep.subr.mxu0 0.0
    %763 = vmatpush1.xpose.msra.mxu0 0.0
    %764 = vmatprep.subr.mxu0 0.0
    %765 = vmatpush1.xpose.msra.mxu0 0.0
    %766 = vmatprep.subr.mxu0 0.0
    %767 = vmatpush1.xpose.msra.mxu0 0.0
    %768 = vmatprep.subr.mxu0 0.0
    %769 = vmatpush1.xpose.msra.mxu0 0.0
    %770 = vmatprep.subr.mxu0 0.0
    %771 = vmatpush1.xpose.msra.mxu0 0.0
    %772 = vmatprep.subr.mxu0 0.0
    %773 = vmatpush1.xpose.msra.mxu0 0.0
    %774 = vmatprep.subr.mxu0 0.0
    %775 = vmatpush1.xpose.msra.mxu0 0.0
    %776 = vmatprep.subr.mxu0 0.0
    %777 = vmatpush1.xpose.msra.mxu0 0.0
    %778 = vmatprep.subr.mxu0 0.0
    %779 = vmatpush1.xpose.msra.mxu0 0.0
    %780 = vmatprep.subr.mxu0 0.0
    %781 = vmatpush1.xpose.msra.mxu0 0.0
    %782 = vmatprep.subr.mxu0 0.0
    %783 = vmatpush1.xpose.msra.mxu0 0.0
    %784 = vmatprep.subr.mxu0 0.0
    %785 = vmatpush1.xpose.msra.mxu0 0.0
    %786 = vmatprep.subr.mxu0 0.0
    %787 = vmatpush1.xpose.msra.mxu0 0.0
    %788 = vmatprep.subr.mxu0 0.0
    %789 = vmatpush1.xpose.msra.mxu0 0.0
    %790 = vmatprep.subr.mxu0 0.0
    %791 = vmatpush1.xpose.msra.mxu0 0.0
    %792 = vmatprep.subr.mxu0 0.0
    %793 = vmatpush1.xpose.msra.mxu0 0.0
    %794 = vmatprep.subr.mxu0 0.0
    %795 = vmatpush1.xpose.msra.mxu0 0.0
    %796 = vmatprep.subr.mxu0 0.0
    %797 = vmatpush1.xpose.msra.mxu0 0.0
    %798 = vmatprep.subr.mxu0 0.0
    %799 = vmatpush1.xpose.msra.mxu0 0.0
    %800 = vmatprep.mubr.f32.mxu0 0.0
    %801 = vmatmul.mubr.f32.gmra.mrb[0].mxu0 %v713
    %v802 = vpop.f32.mrb[0].mxu0
    %v803 = vadd.f32 0.0, %v802
    %v804 = vpop.f32.mrb[0].mxu0
    %805 = vmatprep.mubr.f32.mxu0 0.0
    %806 = vmatmul.mubr.f32.gmra.mrb[0].mxu0 %v716
    %v807 = vpop.f32.mrb[0].mxu0
    %v808 = vadd.f32 0.0, %v807
    %v809 = vpop.f32.mrb[0].mxu0
    %810 = vmatprep.mubr.f32.mxu0 0.0
    %811 = vmatmul.mubr.f32.gmra.mrb[0].mxu0 %v719
    %v812 = vpop.f32.mrb[0].mxu0
    %v813 = vadd.f32 0.0, %v812
    %v814 = vpop.f32.mrb[0].mxu0
    %815 = vmatprep.mubr.f32.mxu0 0.0
    %816 = vmatmul.mubr.f32.gmra.mrb[0].mxu0 %v722
    %v817 = vpop.f32.mrb[0].mxu0
    %v818 = vadd.f32 0.0, %v817
    %v819 = vpop.f32.mrb[0].mxu0
    %820 = vdwg.mxu0
    %v821 = vmul.f32 %v803, 0.25
    %v822 = vmul.f32 %v808, 0.25
    %v823 = vmul.f32 %v813, 0.25
    %v824 = vmul.f32 %v818, 0.25
    %v825 = vadd.f32 %v821, %v203
    %v826 = vadd.f32 %v822, %v204
    %v827 = vadd.f32 %v823, %v205
    %v828 = vadd.f32 %v824, %v206
    %v829 = vsel %vm431, %v825, -inf
    %830 = vmax.xlane.f32.xlu0 %v829
    %v831 = vpop.xlane.xlu0 %830
    %v832 = vsel %vm431, %v826, -inf
    %833 = vmax.xlane.f32.xlu0 %v832
    %v834 = vpop.xlane.xlu0 %833
    %v835 = vsel %vm431, %v827, -inf
    %836 = vmax.xlane.f32.xlu0 %v835
    %v837 = vpop.xlane.xlu0 %836
    %v838 = vsel %vm431, %v828, -inf
    %839 = vmax.xlane.f32.xlu0 %v838
    %v840 = vpop.xlane.xlu0 %839
    %v841 = vsub.f32 %v825, %v831
    %v842 = vsub.f32 %v826, %v834
    %v843 = vsub.f32 %v827, %v837
    %v844 = vsub.f32 %v828, %v840
    %v845 = vmul.f32 %v841, 1.442695
    %v846 = vpow.pop %v845
    %v847 = vmul.f32 %v842, 1.442695
    %v848 = vpow.pop %v847
    %v849 = vmul.f32 %v843, 1.442695
    %v850 = vpow.pop %v849
    %v851 = vmul.f32 %v844, 1.442695
    %v852 = vpow.pop %v851
    %v853 = vsel %vm431, %v846, 0.0
    %854 = vadd.xlane.f32.xlu0 %v853
    %v855 = vpop.xlane.xlu0 %854
    %v856 = vsel %vm431, %v848, 0.0
    %857 = vadd.xlane.f32.xlu0 %v856
    %v858 = vpop.xlane.xlu0 %857
    %v859 = vsel %vm431, %v850, 0.0
    %860 = vadd.xlane.f32.xlu0 %v859
    %v861 = vpop.xlane.xlu0 %860
    %v862 = vsel %vm431, %v852, 0.0
    %863 = vadd.xlane.f32.xlu0 %v862
    %v864 = vpop.xlane.xlu0 %863
    %v865 = vrcp.pop %v855
    %v866 = vrcp.pop %v858
    %v867 = vrcp.pop %v861
    %v868 = vrcp.pop %v864
    %v869 = vmul.f32 %v846, %v865
    %v870 = vmul.f32 %v848, %v866
    %v871 = vmul.f32 %v850, %v867
    %v872 = vmul.f32 %v852, %v868
    %v874 = vsel %vm431, %v869, 0
    %v877 = vsel %vm431, %v870, 0
    %v880 = vsel %vm431, %v871, 0
    %v883 = vsel %vm431, %v872, 0
    %885 = vmatprep.subr.mxu0 0.0
    %886 = vmatpush1.msra.mxu0 %v693
    %887 = vmatprep.subr.mxu0 0.0
    %888 = vmatpush1.msra.mxu0 %v698
    %889 = vmatprep.subr.mxu0 0.0
    %890 = vmatpush1.msra.mxu0 %v703
    %891 = vmatprep.subr.mxu0 0.0
    %892 = vmatpush1.msra.mxu0 %v708
    %893 = vmatprep.subr.mxu0 0.0
    %894 = vmatpush1.msra.mxu0 0.0
    %895 = vmatprep.subr.mxu0 0.0
    %896 = vmatpush1.msra.mxu0 0.0
    %897 = vmatprep.subr.mxu0 0.0
    %898 = vmatpush1.msra.mxu0 0.0
    %899 = vmatprep.subr.mxu0 0.0
    %900 = vmatpush1.msra.mxu0 0.0
    %901 = vmatprep.subr.mxu0 0.0
    %902 = vmatpush1.msra.mxu0 0.0
    %903 = vmatprep.subr.mxu0 0.0
    %904 = vmatpush1.msra.mxu0 0.0
    %905 = vmatprep.subr.mxu0 0.0
    %906 = vmatpush1.msra.mxu0 0.0
    %907 = vmatprep.subr.mxu0 0.0
    %908 = vmatpush1.msra.mxu0 0.0
    %909 = vmatprep.subr.mxu0 0.0
    %910 = vmatpush1.msra.mxu0 0.0
    %911 = vmatprep.subr.mxu0 0.0
    %912 = vmatpush1.msra.mxu0 0.0
    %913 = vmatprep.subr.mxu0 0.0
    %914 = vmatpush1.msra.mxu0 0.0
    %915 = vmatprep.subr.mxu0 0.0
    %916 = vmatpush1.msra.mxu0 0.0
    %917 = vmatprep.subr.mxu0 0.0
    %918 = vmatpush1.msra.mxu0 0.0
    %919 = vmatprep.subr.mxu0 0.0
    %920 = vmatpush1.msra.mxu0 0.0
    %921 = vmatprep.subr.mxu0 0.0
    %922 = vmatpush1.msra.mxu0 0.0
    %923 = vmatprep.subr.mxu0 0.0
    %924 = vmatpush1.msra.mxu0 0.0
    %925 = vmatprep.subr.mxu0 0.0
    %926 = vmatpush1.msra.mxu0 0.0
    %927 = vmatprep.subr.mxu0 0.0
    %928 = vmatpush1.msra.mxu0 0.0
    %929 = vmatprep.subr.mxu0 0.0
    %930 = vmatpush1.msra.mxu0 0.0
    %931 = vmatprep.subr.mxu0 0.0
    %932 = vmatpush1.msra.mxu0 0.0
    %933 = vmatprep.subr.mxu0 0.0
    %934 = vmatpush1.msra.mxu0 0.0
    %935 = vmatprep.subr.mxu0 0.0
    %936 = vmatpush1.msra.mxu0 0.0
    %937 = vmatprep.subr.mxu0 0.0
    %938 = vmatpush1.msra.mxu0 0.0
    %939 = vmatprep.subr.mxu0 0.0
    %940 = vmatpush1.msra.mxu0 0.0
    %941 = vmatprep.subr.mxu0 0.0
    %942 = vmatpush1.msra.mxu0 0.0
    %943 = vmatprep.subr.mxu0 0.0
    %944 = vmatpush1.msra.mxu0 0.0
    %945 = vmatprep.subr.mxu0 0.0
    %946 = vmatpush1.msra.mxu0 0.0
    %947 = vmatprep.subr.mxu0 0.0
    %948 = vmatpush1.msra.mxu0 0.0
    %949 = vmatprep.mubr.f32.mxu0 0.0
    %950 = vmatmul.mubr.f32.gmra.mrb[0].mxu0 %v874
    %v951 = vpop.f32.mrb[0].mxu0
    %v952 = vadd.f32 0.0, %v951
    %v953 = vpop.f32.mrb[0].mxu0
    %954 = vmatprep.mubr.f32.mxu0 0.0
    %955 = vmatmul.mubr.f32.gmra.mrb[0].mxu0 %v877
    %v956 = vpop.f32.mrb[0].mxu0
    %v957 = vadd.f32 0.0, %v956
    %v958 = vpop.f32.mrb[0].mxu0
    %959 = vmatprep.mubr.f32.mxu0 0.0
    %960 = vmatmul.mubr.f32.gmra.mrb[0].mxu0 %v880
    %v961 = vpop.f32.mrb[0].mxu0
    %v962 = vadd.f32 0.0, %v961
    %v963 = vpop.f32.mrb[0].mxu0
    %964 = vmatprep.mubr.f32.mxu0 0.0
    %965 = vmatmul.mubr.f32.gmra.mrb[0].mxu0 %v883
    %v966 = vpop.f32.mrb[0].mxu0
    %v967 = vadd.f32 0.0, %v966
    %v968 = vpop.f32.mrb[0].mxu0
    %969 = vdwg.mxu0
    %v971 = vlaneseq
    %v972 = vshrl.u32 %v971, 7
    %v973 = vsub.s32 0, %v972
    %v974 = vrot.slane %v415, %v973
    %976 = vmatprep.subr.mxu0 0.0
    %977 = vmatpush1.msra.mxu0 %v394
    %978 = vmatprep.subr.mxu0 0.0
    %979 = vmatpush1.msra.mxu0 %v395
    %980 = vmatprep.subr.mxu0 0.0
    %981 = vmatpush1.msra.mxu0 %v396
    %982 = vmatprep.subr.mxu0 0.0
    %983 = vmatpush1.msra.mxu0 %v397
    %984 = vmatprep.subr.mxu0 0.0
    %985 = vmatpush1.msra.mxu0 0.0
    %986 = vmatprep.subr.mxu0 0.0
    %987 = vmatpush1.msra.mxu0 0.0
    %988 = vmatprep.subr.mxu0 0.0
    %989 = vmatpush1.msra.mxu0 0.0
    %990 = vmatprep.subr.mxu0 0.0
    %991 = vmatpush1.msra.mxu0 0.0
    %992 = vmatprep.subr.mxu0 0.0
    %993 = vmatpush1.msra.mxu0 0.0
    %994 = vmatprep.subr.mxu0 0.0
    %995 = vmatpush1.msra.mxu0 0.0
    %996 = vmatprep.subr.mxu0 0.0
    %997 = vmatpush1.msra.mxu0 0.0
    %998 = vmatprep.subr.mxu0 0.0
    %999 = vmatpush1.msra.mxu0 0.0
    %1000 = vmatprep.subr.mxu0 0.0
    %1001 = vmatpush1.msra.mxu0 0.0
    %1002 = vmatprep.subr.mxu0 0.0
    %1003 = vmatpush1.msra.mxu0 0.0
    %1004 = vmatprep.subr.mxu0 0.0
    %1005 = vmatpush1.msra.mxu0 0.0
    %1006 = vmatprep.subr.mxu0 0.0
    %1007 = vmatpush1.msra.mxu0 0.0
    %1008 = vmatprep.subr.mxu0 0.0
    %1009 = vmatpush1.msra.mxu0 0.0
    %1010 = vmatprep.subr.mxu0 0.0
    %1011 = vmatpush1.msra.mxu0 0.0
    %1012 = vmatprep.subr.mxu0 0.0
    %1013 = vmatpush1.msra.mxu0 0.0
    %1014 = vmatprep.subr.mxu0 0.0
    %1015 = vmatpush1.msra.mxu0 0.0
    %1016 = vmatprep.subr.mxu0 0.0
    %1017 = vmatpush1.msra.mxu0 0.0
    %1018 = vmatprep.subr.mxu0 0.0
    %1019 = vmatpush1.msra.mxu0 0.0
    %1020 = vmatprep.subr.mxu0 0.0
    %1021 = vmatpush1.msra.mxu0 0.0
    %1022 = vmatprep.subr.mxu0 0.0
    %1023 = vmatpush1.msra.mxu0 0.0
    %1024 = vmatprep.subr.mxu0 0.0
    %1025 = vmatpush1.msra.mxu0 0.0
    %1026 = vmatprep.subr.mxu0 0.0
    %1027 = vmatpush1.msra.mxu0 0.0
    %1028 = vmatprep.subr.mxu0 0.0
    %1029 = vmatpush1.msra.mxu0 0.0
    %1030 = vmatprep.subr.mxu0 0.0
    %1031 = vmatpush1.msra.mxu0 0.0
    %1032 = vmatprep.subr.mxu0 0.0
    %1033 = vmatpush1.msra.mxu0 0.0
    %1034 = vmatprep.subr.mxu0 0.0
    %1035 = vmatpush1.msra.mxu0 0.0
    %1036 = vmatprep.subr.mxu0 0.0
    %1037 = vmatpush1.msra.mxu0 0.0
    %1038 = vmatprep.subr.mxu0 0.0
    %1039 = vmatpush1.msra.mxu0 0.0
    %1040 = vmatprep.mubr.f32.mxu0 0.0
    %1041 = vmatmul.mubr.f32.gmra.mrb[0].mxu0 %v433
    %v1042 = vpop.f32.mrb[0].mxu0
    %v1043 = vadd.f32 %v974, %v1042
    %v1044 = vpop.f32.mrb[0].mxu0
    %1045 = vmatprep.mubr.f32.mxu0 0.0
    %1046 = vmatmul.mubr.f32.gmra.mrb[0].mxu0 %v436
    %v1047 = vpop.f32.mrb[0].mxu0
    %v1048 = vadd.f32 %v974, %v1047
    %v1049 = vpop.f32.mrb[0].mxu0
    %1050 = vmatprep.mubr.f32.mxu0 0.0
    %1051 = vmatmul.mubr.f32.gmra.mrb[0].mxu0 %v439
    %v1052 = vpop.f32.mrb[0].mxu0
    %v1053 = vadd.f32 %v974, %v1052
    %v1054 = vpop.f32.mrb[0].mxu0
    %1055 = vmatprep.mubr.f32.mxu0 0.0
    %1056 = vmatmul.mubr.f32.gmra.mrb[0].mxu0 %v442
    %v1057 = vpop.f32.mrb[0].mxu0
    %v1058 = vadd.f32 %v974, %v1057
    %v1059 = vpop.f32.mrb[0].mxu0
    %1060 = vdwg.mxu0
    %v1062 = vlaneseq
    %v1063 = vshrl.u32 %v1062, 7
    %v1064 = vsub.s32 0, %v1063
    %v1065 = vrot.slane %v417, %v1064
    %1067 = vmatprep.subr.mxu0 0.0
    %1068 = vmatpush1.msra.mxu0 %v402
    %1069 = vmatprep.subr.mxu0 0.0
    %1070 = vmatpush1.msra.mxu0 %v403
    %1071 = vmatprep.subr.mxu0 0.0
    %1072 = vmatpush1.msra.mxu0 %v404
    %1073 = vmatprep.subr.mxu0 0.0
    %1074 = vmatpush1.msra.mxu0 %v405
    %1075 = vmatprep.subr.mxu0 0.0
    %1076 = vmatpush1.msra.mxu0 0.0
    %1077 = vmatprep.subr.mxu0 0.0
    %1078 = vmatpush1.msra.mxu0 0.0
    %1079 = vmatprep.subr.mxu0 0.0
    %1080 = vmatpush1.msra.mxu0 0.0
    %1081 = vmatprep.subr.mxu0 0.0
    %1082 = vmatpush1.msra.mxu0 0.0
    %1083 = vmatprep.subr.mxu0 0.0
    %1084 = vmatpush1.msra.mxu0 0.0
    %1085 = vmatprep.subr.mxu0 0.0
    %1086 = vmatpush1.msra.mxu0 0.0
    %1087 = vmatprep.subr.mxu0 0.0
    %1088 = vmatpush1.msra.mxu0 0.0
    %1089 = vmatprep.subr.mxu0 0.0
    %1090 = vmatpush1.msra.mxu0 0.0
    %1091 = vmatprep.subr.mxu0 0.0
    %1092 = vmatpush1.msra.mxu0 0.0
    %1093 = vmatprep.subr.mxu0 0.0
    %1094 = vmatpush1.msra.mxu0 0.0
    %1095 = vmatprep.subr.mxu0 0.0
    %1096 = vmatpush1.msra.mxu0 0.0
    %1097 = vmatprep.subr.mxu0 0.0
    %1098 = vmatpush1.msra.mxu0 0.0
    %1099 = vmatprep.subr.mxu0 0.0
    %1100 = vmatpush1.msra.mxu0 0.0
    %1101 = vmatprep.subr.mxu0 0.0
    %1102 = vmatpush1.msra.mxu0 0.0
    %1103 = vmatprep.subr.mxu0 0.0
    %1104 = vmatpush1.msra.mxu0 0.0
    %1105 = vmatprep.subr.mxu0 0.0
    %1106 = vmatpush1.msra.mxu0 0.0
    %1107 = vmatprep.subr.mxu0 0.0
    %1108 = vmatpush1.msra.mxu0 0.0
    %1109 = vmatprep.subr.mxu0 0.0
    %1110 = vmatpush1.msra.mxu0 0.0
    %1111 = vmatprep.subr.mxu0 0.0
    %1112 = vmatpush1.msra.mxu0 0.0
    %1113 = vmatprep.subr.mxu0 0.0
    %1114 = vmatpush1.msra.mxu0 0.0
    %1115 = vmatprep.subr.mxu0 0.0
    %1116 = vmatpush1.msra.mxu0 0.0
    %1117 = vmatprep.subr.mxu0 0.0
    %1118 = vmatpush1.msra.mxu0 0.0
    %1119 = vmatprep.subr.mxu0 0.0
    %1120 = vmatpush1.msra.mxu0 0.0
    %1121 = vmatprep.subr.mxu0 0.0
    %1122 = vmatpush1.msra.mxu0 0.0
    %1123 = vmatprep.subr.mxu0 0.0
    %1124 = vmatpush1.msra.mxu0 0.0
    %1125 = vmatprep.subr.mxu0 0.0
    %1126 = vmatpush1.msra.mxu0 0.0
    %1127 = vmatprep.subr.mxu0 0.0
    %1128 = vmatpush1.msra.mxu0 0.0
    %1129 = vmatprep.subr.mxu0 0.0
    %1130 = vmatpush1.msra.mxu0 0.0
    %1131 = vmatprep.mubr.f32.mxu0 0.0
    %1132 = vmatmul.mubr.f32.gmra.mrb[0].mxu0 %v433
    %v1133 = vpop.f32.mrb[0].mxu0
    %v1134 = vadd.f32 %v1065, %v1133
    %v1135 = vpop.f32.mrb[0].mxu0
    %1136 = vmatprep.mubr.f32.mxu0 0.0
    %1137 = vmatmul.mubr.f32.gmra.mrb[0].mxu0 %v436
    %v1138 = vpop.f32.mrb[0].mxu0
    %v1139 = vadd.f32 %v1065, %v1138
    %v1140 = vpop.f32.mrb[0].mxu0
    %1141 = vmatprep.mubr.f32.mxu0 0.0
    %1142 = vmatmul.mubr.f32.gmra.mrb[0].mxu0 %v439
    %v1143 = vpop.f32.mrb[0].mxu0
    %v1144 = vadd.f32 %v1065, %v1143
    %v1145 = vpop.f32.mrb[0].mxu0
    %1146 = vmatprep.mubr.f32.mxu0 0.0
    %1147 = vmatmul.mubr.f32.gmra.mrb[0].mxu0 %v442
    %v1148 = vpop.f32.mrb[0].mxu0
    %v1149 = vadd.f32 %v1065, %v1148
    %v1150 = vpop.f32.mrb[0].mxu0
    %1151 = vdwg.mxu0
    %v1153 = vlaneseq
    %v1154 = vshrl.u32 %v1153, 7
    %v1155 = vsub.s32 0, %v1154
    %v1156 = vrot.slane %v419, %v1155
    %1158 = vmatprep.subr.mxu0 0.0
    %1159 = vmatpush1.msra.mxu0 %v410
    %1160 = vmatprep.subr.mxu0 0.0
    %1161 = vmatpush1.msra.mxu0 %v411
    %1162 = vmatprep.subr.mxu0 0.0
    %1163 = vmatpush1.msra.mxu0 %v412
    %1164 = vmatprep.subr.mxu0 0.0
    %1165 = vmatpush1.msra.mxu0 %v413
    %1166 = vmatprep.subr.mxu0 0.0
    %1167 = vmatpush1.msra.mxu0 0.0
    %1168 = vmatprep.subr.mxu0 0.0
    %1169 = vmatpush1.msra.mxu0 0.0
    %1170 = vmatprep.subr.mxu0 0.0
    %1171 = vmatpush1.msra.mxu0 0.0
    %1172 = vmatprep.subr.mxu0 0.0
    %1173 = vmatpush1.msra.mxu0 0.0
    %1174 = vmatprep.subr.mxu0 0.0
    %1175 = vmatpush1.msra.mxu0 0.0
    %1176 = vmatprep.subr.mxu0 0.0
    %1177 = vmatpush1.msra.mxu0 0.0
    %1178 = vmatprep.subr.mxu0 0.0
    %1179 = vmatpush1.msra.mxu0 0.0
    %1180 = vmatprep.subr.mxu0 0.0
    %1181 = vmatpush1.msra.mxu0 0.0
    %1182 = vmatprep.subr.mxu0 0.0
    %1183 = vmatpush1.msra.mxu0 0.0
    %1184 = vmatprep.subr.mxu0 0.0
    %1185 = vmatpush1.msra.mxu0 0.0
    %1186 = vmatprep.subr.mxu0 0.0
    %1187 = vmatpush1.msra.mxu0 0.0
    %1188 = vmatprep.subr.mxu0 0.0
    %1189 = vmatpush1.msra.mxu0 0.0
    %1190 = vmatprep.subr.mxu0 0.0
    %1191 = vmatpush1.msra.mxu0 0.0
    %1192 = vmatprep.subr.mxu0 0.0
    %1193 = vmatpush1.msra.mxu0 0.0
    %1194 = vmatprep.subr.mxu0 0.0
    %1195 = vmatpush1.msra.mxu0 0.0
    %1196 = vmatprep.subr.mxu0 0.0
    %1197 = vmatpush1.msra.mxu0 0.0
    %1198 = vmatprep.subr.mxu0 0.0
    %1199 = vmatpush1.msra.mxu0 0.0
    %1200 = vmatprep.subr.mxu0 0.0
    %1201 = vmatpush1.msra.mxu0 0.0
    %1202 = vmatprep.subr.mxu0 0.0
    %1203 = vmatpush1.msra.mxu0 0.0
    %1204 = vmatprep.subr.mxu0 0.0
    %1205 = vmatpush1.msra.mxu0 0.0
    %1206 = vmatprep.subr.mxu0 0.0
    %1207 = vmatpush1.msra.mxu0 0.0
    %1208 = vmatprep.subr.mxu0 0.0
    %1209 = vmatpush1.msra.mxu0 0.0
    %1210 = vmatprep.subr.mxu0 0.0
    %1211 = vmatpush1.msra.mxu0 0.0
    %1212 = vmatprep.subr.mxu0 0.0
    %1213 = vmatpush1.msra.mxu0 0.0
    %1214 = vmatprep.subr.mxu0 0.0
    %1215 = vmatpush1.msra.mxu0 0.0
    %1216 = vmatprep.subr.mxu0 0.0
    %1217 = vmatpush1.msra.mxu0 0.0
    %1218 = vmatprep.subr.mxu0 0.0
    %1219 = vmatpush1.msra.mxu0 0.0
    %1220 = vmatprep.subr.mxu0 0.0
    %1221 = vmatpush1.msra.mxu0 0.0
    %1222 = vmatprep.mubr.f32.mxu0 0.0
    %1223 = vmatmul.mubr.f32.gmra.mrb[0].mxu0 %v433
    %v1224 = vpop.f32.mrb[0].mxu0
    %v1225 = vadd.f32 %v1156, %v1224
    %v1226 = vpop.f32.mrb[0].mxu0
    %1227 = vmatprep.mubr.f32.mxu0 0.0
    %1228 = vmatmul.mubr.f32.gmra.mrb[0].mxu0 %v436
    %v1229 = vpop.f32.mrb[0].mxu0
    %v1230 = vadd.f32 %v1156, %v1229
    %v1231 = vpop.f32.mrb[0].mxu0
    %1232 = vmatprep.mubr.f32.mxu0 0.0
    %1233 = vmatmul.mubr.f32.gmra.mrb[0].mxu0 %v439
    %v1234 = vpop.f32.mrb[0].mxu0
    %v1235 = vadd.f32 %v1156, %v1234
    %v1236 = vpop.f32.mrb[0].mxu0
    %1237 = vmatprep.mubr.f32.mxu0 0.0
    %1238 = vmatmul.mubr.f32.gmra.mrb[0].mxu0 %v442
    %v1239 = vpop.f32.mrb[0].mxu0
    %v1240 = vadd.f32 %v1156, %v1239
    %v1241 = vpop.f32.mrb[0].mxu0
    %1242 = vdwg.mxu0
    %v1244 = vsel %vm711, %v1043, 0
    %v1247 = vsel %vm711, %v1048, 0
    %v1250 = vsel %vm711, %v1053, 0
    %v1253 = vsel %vm711, %v1058, 0
    %v1256 = vsel %vm711, %v1134, 0
    %v1259 = vsel %vm711, %v1139, 0
    %v1262 = vsel %vm711, %v1144, 0
    %v1265 = vsel %vm711, %v1149, 0
    %1267 = vmatprep.subr.mxu0 0.0
    %1268 = vmatpush1.xpose.msra.mxu0 %v1256
    %1269 = vmatprep.subr.mxu0 0.0
    %1270 = vmatpush1.xpose.msra.mxu0 %v1259
    %1271 = vmatprep.subr.mxu0 0.0
    %1272 = vmatpush1.xpose.msra.mxu0 %v1262
    %1273 = vmatprep.subr.mxu0 0.0
    %1274 = vmatpush1.xpose.msra.mxu0 %v1265
    %1275 = vmatprep.subr.mxu0 0.0
    %1276 = vmatpush1.xpose.msra.mxu0 0.0
    %1277 = vmatprep.subr.mxu0 0.0
    %1278 = vmatpush1.xpose.msra.mxu0 0.0
    %1279 = vmatprep.subr.mxu0 0.0
    %1280 = vmatpush1.xpose.msra.mxu0 0.0
    %1281 = vmatprep.subr.mxu0 0.0
    %1282 = vmatpush1.xpose.msra.mxu0 0.0
    %1283 = vmatprep.subr.mxu0 0.0
    %1284 = vmatpush1.xpose.msra.mxu0 0.0
    %1285 = vmatprep.subr.mxu0 0.0
    %1286 = vmatpush1.xpose.msra.mxu0 0.0
    %1287 = vmatprep.subr.mxu0 0.0
    %1288 = vmatpush1.xpose.msra.mxu0 0.0
    %1289 = vmatprep.subr.mxu0 0.0
    %1290 = vmatpush1.xpose.msra.mxu0 0.0
    %1291 = vmatprep.subr.mxu0 0.0
    %1292 = vmatpush1.xpose.msra.mxu0 0.0
    %1293 = vmatprep.subr.mxu0 0.0
    %1294 = vmatpush1.xpose.msra.mxu0 0.0
    %1295 = vmatprep.subr.mxu0 0.0
    %1296 = vmatpush1.xpose.msra.mxu0 0.0
    %1297 = vmatprep.subr.mxu0 0.0
    %1298 = vmatpush1.xpose.msra.mxu0 0.0
    %1299 = vmatprep.subr.mxu0 0.0
    %1300 = vmatpush1.xpose.msra.mxu0 0.0
    %1301 = vmatprep.subr.mxu0 0.0
    %1302 = vmatpush1.xpose.msra.mxu0 0.0
    %1303 = vmatprep.subr.mxu0 0.0
    %1304 = vmatpush1.xpose.msra.mxu0 0.0
    %1305 = vmatprep.subr.mxu0 0.0
    %1306 = vmatpush1.xpose.msra.mxu0 0.0
    %1307 = vmatprep.subr.mxu0 0.0
    %1308 = vmatpush1.xpose.msra.mxu0 0.0
    %1309 = vmatprep.subr.mxu0 0.0
    %1310 = vmatpush1.xpose.msra.mxu0 0.0
    %1311 = vmatprep.subr.mxu0 0.0
    %1312 = vmatpush1.xpose.msra.mxu0 0.0
    %1313 = vmatprep.subr.mxu0 0.0
    %1314 = vmatpush1.xpose.msra.mxu0 0.0
    %1315 = vmatprep.subr.mxu0 0.0
    %1316 = vmatpush1.xpose.msra.mxu0 0.0
    %1317 = vmatprep.subr.mxu0 0.0
    %1318 = vmatpush1.xpose.msra.mxu0 0.0
    %1319 = vmatprep.subr.mxu0 0.0
    %1320 = vmatpush1.xpose.msra.mxu0 0.0
    %1321 = vmatprep.subr.mxu0 0.0
    %1322 = vmatpush1.xpose.msra.mxu0 0.0
    %1323 = vmatprep.subr.mxu0 0.0
    %1324 = vmatpush1.xpose.msra.mxu0 0.0
    %1325 = vmatprep.subr.mxu0 0.0
    %1326 = vmatpush1.xpose.msra.mxu0 0.0
    %1327 = vmatprep.subr.mxu0 0.0
    %1328 = vmatpush1.xpose.msra.mxu0 0.0
    %1329 = vmatprep.subr.mxu0 0.0
    %1330 = vmatpush1.xpose.msra.mxu0 0.0
    %1331 = vmatprep.mubr.f32.mxu0 0.0
    %1332 = vmatmul.mubr.f32.gmra.mrb[0].mxu0 %v1244
    %v1333 = vpop.f32.mrb[0].mxu0
    %v1334 = vadd.f32 0.0, %v1333
    %v1335 = vpop.f32.mrb[0].mxu0
    %1336 = vmatprep.mubr.f32.mxu0 0.0
    %1337 = vmatmul.mubr.f32.gmra.mrb[0].mxu0 %v1247
    %v1338 = vpop.f32.mrb[0].mxu0
    %v1339 = vadd.f32 0.0, %v1338
    %v1340 = vpop.f32.mrb[0].mxu0
    %1341 = vmatprep.mubr.f32.mxu0 0.0
    %1342 = vmatmul.mubr.f32.gmra.mrb[0].mxu0 %v1250
    %v1343 = vpop.f32.mrb[0].mxu0
    %v1344 = vadd.f32 0.0, %v1343
    %v1345 = vpop.f32.mrb[0].mxu0
    %1346 = vmatprep.mubr.f32.mxu0 0.0
    %1347 = vmatmul.mubr.f32.gmra.mrb[0].mxu0 %v1253
    %v1348 = vpop.f32.mrb[0].mxu0
    %v1349 = vadd.f32 0.0, %v1348
    %v1350 = vpop.f32.mrb[0].mxu0
    %1351 = vdwg.mxu0
    %v1352 = vmul.f32 %v1334, 0.25
    %v1353 = vmul.f32 %v1339, 0.25
    %v1354 = vmul.f32 %v1344, 0.25
    %v1355 = vmul.f32 %v1349, 0.25
    %v1356 = vadd.f32 %v1352, %v203
    %v1357 = vadd.f32 %v1353, %v204
    %v1358 = vadd.f32 %v1354, %v205
    %v1359 = vadd.f32 %v1355, %v206
    %v1360 = vsel %vm431, %v1356, -inf
    %1361 = vmax.xlane.f32.xlu0 %v1360
    %v1362 = vpop.xlane.xlu0 %1361
    %v1363 = vsel %vm431, %v1357, -inf
    %1364 = vmax.xlane.f32.xlu0 %v1363
    %v1365 = vpop.xlane.xlu0 %1364
    %v1366 = vsel %vm431, %v1358, -inf
    %1367 = vmax.xlane.f32.xlu0 %v1366
    %v1368 = vpop.xlane.xlu0 %1367
    %v1369 = vsel %vm431, %v1359, -inf
    %1370 = vmax.xlane.f32.xlu0 %v1369
    %v1371 = vpop.xlane.xlu0 %1370
    %v1372 = vsub.f32 %v1356, %v1362
    %v1373 = vsub.f32 %v1357, %v1365
    %v1374 = vsub.f32 %v1358, %v1368
    %v1375 = vsub.f32 %v1359, %v1371
    %v1376 = vmul.f32 %v1372, 1.442695
    %v1377 = vpow.pop %v1376
    %v1378 = vmul.f32 %v1373, 1.442695
    %v1379 = vpow.pop %v1378
    %v1380 = vmul.f32 %v1374, 1.442695
    %v1381 = vpow.pop %v1380
    %v1382 = vmul.f32 %v1375, 1.442695
    %v1383 = vpow.pop %v1382
    %v1384 = vsel %vm431, %v1377, 0.0
    %1385 = vadd.xlane.f32.xlu0 %v1384
    %v1386 = vpop.xlane.xlu0 %1385
    %v1387 = vsel %vm431, %v1379, 0.0
    %1388 = vadd.xlane.f32.xlu0 %v1387
    %v1389 = vpop.xlane.xlu0 %1388
    %v1390 = vsel %vm431, %v1381, 0.0
    %1391 = vadd.xlane.f32.xlu0 %v1390
    %v1392 = vpop.xlane.xlu0 %1391
    %v1393 = vsel %vm431, %v1383, 0.0
    %1394 = vadd.xlane.f32.xlu0 %v1393
    %v1395 = vpop.xlane.xlu0 %1394
    %v1396 = vrcp.pop %v1386
    %v1397 = vrcp.pop %v1389
    %v1398 = vrcp.pop %v1392
    %v1399 = vrcp.pop %v1395
    %v1400 = vmul.f32 %v1377, %v1396
    %v1401 = vmul.f32 %v1379, %v1397
    %v1402 = vmul.f32 %v1381, %v1398
    %v1403 = vmul.f32 %v1383, %v1399
    %v1405 = vsel %vm431, %v1400, 0
    %v1408 = vsel %vm431, %v1401, 0
    %v1411 = vsel %vm431, %v1402, 0
    %v1414 = vsel %vm431, %v1403, 0
    %1416 = vmatprep.subr.mxu0 0.0
    %1417 = vmatpush1.msra.mxu0 %v1225
    %1418 = vmatprep.subr.mxu0 0.0
    %1419 = vmatpush1.msra.mxu0 %v1230
    %1420 = vmatprep.subr.mxu0 0.0
    %1421 = vmatpush1.msra.mxu0 %v1235
    %1422 = vmatprep.subr.mxu0 0.0
    %1423 = vmatpush1.msra.mxu0 %v1240
    %1424 = vmatprep.subr.mxu0 0.0
    %1425 = vmatpush1.msra.mxu0 0.0
    %1426 = vmatprep.subr.mxu0 0.0
    %1427 = vmatpush1.msra.mxu0 0.0
    %1428 = vmatprep.subr.mxu0 0.0
    %1429 = vmatpush1.msra.mxu0 0.0
    %1430 = vmatprep.subr.mxu0 0.0
    %1431 = vmatpush1.msra.mxu0 0.0
    %1432 = vmatprep.subr.mxu0 0.0
    %1433 = vmatpush1.msra.mxu0 0.0
    %1434 = vmatprep.subr.mxu0 0.0
    %1435 = vmatpush1.msra.mxu0 0.0
    %1436 = vmatprep.subr.mxu0 0.0
    %1437 = vmatpush1.msra.mxu0 0.0
    %1438 = vmatprep.subr.mxu0 0.0
    %1439 = vmatpush1.msra.mxu0 0.0
    %1440 = vmatprep.subr.mxu0 0.0
    %1441 = vmatpush1.msra.mxu0 0.0
    %1442 = vmatprep.subr.mxu0 0.0
    %1443 = vmatpush1.msra.mxu0 0.0
    %1444 = vmatprep.subr.mxu0 0.0
    %1445 = vmatpush1.msra.mxu0 0.0
    %1446 = vmatprep.subr.mxu0 0.0
    %1447 = vmatpush1.msra.mxu0 0.0
    %1448 = vmatprep.subr.mxu0 0.0
    %1449 = vmatpush1.msra.mxu0 0.0
    %1450 = vmatprep.subr.mxu0 0.0
    %1451 = vmatpush1.msra.mxu0 0.0
    %1452 = vmatprep.subr.mxu0 0.0
    %1453 = vmatpush1.msra.mxu0 0.0
    %1454 = vmatprep.subr.mxu0 0.0
    %1455 = vmatpush1.msra.mxu0 0.0
    %1456 = vmatprep.subr.mxu0 0.0
    %1457 = vmatpush1.msra.mxu0 0.0
    %1458 = vmatprep.subr.mxu0 0.0
    %1459 = vmatpush1.msra.mxu0 0.0
    %1460 = vmatprep.subr.mxu0 0.0
    %1461 = vmatpush1.msra.mxu0 0.0
    %1462 = vmatprep.subr.mxu0 0.0
    %1463 = vmatpush1.msra.mxu0 0.0
    %1464 = vmatprep.subr.mxu0 0.0
    %1465 = vmatpush1.msra.mxu0 0.0
    %1466 = vmatprep.subr.mxu0 0.0
    %1467 = vmatpush1.msra.mxu0 0.0
    %1468 = vmatprep.subr.mxu0 0.0
    %1469 = vmatpush1.msra.mxu0 0.0
    %1470 = vmatprep.subr.mxu0 0.0
    %1471 = vmatpush1.msra.mxu0 0.0
    %1472 = vmatprep.subr.mxu0 0.0
    %1473 = vmatpush1.msra.mxu0 0.0
    %1474 = vmatprep.subr.mxu0 0.0
    %1475 = vmatpush1.msra.mxu0 0.0
    %1476 = vmatprep.subr.mxu0 0.0
    %1477 = vmatpush1.msra.mxu0 0.0
    %1478 = vmatprep.subr.mxu0 0.0
    %1479 = vmatpush1.msra.mxu0 0.0
    %1480 = vmatprep.mubr.f32.mxu0 0.0
    %1481 = vmatmul.mubr.f32.gmra.mrb[0].mxu0 %v1405
    %v1482 = vpop.f32.mrb[0].mxu0
    %v1483 = vadd.f32 0.0, %v1482
    %v1484 = vpop.f32.mrb[0].mxu0
    %1485 = vmatprep.mubr.f32.mxu0 0.0
    %1486 = vmatmul.mubr.f32.gmra.mrb[0].mxu0 %v1408
    %v1487 = vpop.f32.mrb[0].mxu0
    %v1488 = vadd.f32 0.0, %v1487
    %v1489 = vpop.f32.mrb[0].mxu0
    %1490 = vmatprep.mubr.f32.mxu0 0.0
    %1491 = vmatmul.mubr.f32.gmra.mrb[0].mxu0 %v1411
    %v1492 = vpop.f32.mrb[0].mxu0
    %v1493 = vadd.f32 0.0, %v1492
    %v1494 = vpop.f32.mrb[0].mxu0
    %1495 = vmatprep.mubr.f32.mxu0 0.0
    %1496 = vmatmul.mubr.f32.gmra.mrb[0].mxu0 %v1414
    %v1497 = vpop.f32.mrb[0].mxu0
    %v1498 = vadd.f32 0.0, %v1497
    %v1499 = vpop.f32.mrb[0].mxu0
    %1500 = vdwg.mxu0
    %v1502 = vsel %vm711, %v1483, 0
    %v1505 = vsel %vm711, %v1488, 0
    %v1508 = vsel %vm711, %v1493, 0
    %v1511 = vsel %vm711, %v1498, 0
    %1513 = vmatprep.subr.mxu0 0.0
    %1514 = vmatpush1.msra.mxu0 %v422
    %1515 = vmatprep.subr.mxu0 0.0
    %1516 = vmatpush1.msra.mxu0 %v423
    %1517 = vmatprep.subr.mxu0 0.0
    %1518 = vmatpush1.msra.mxu0 0.0
    %1519 = vmatprep.subr.mxu0 0.0
    %1520 = vmatpush1.msra.mxu0 0.0
    %1521 = vmatprep.subr.mxu0 0.0
    %1522 = vmatpush1.msra.mxu0 0.0
    %1523 = vmatprep.subr.mxu0 0.0
    %1524 = vmatpush1.msra.mxu0 0.0
    %1525 = vmatprep.subr.mxu0 0.0
    %1526 = vmatpush1.msra.mxu0 0.0
    %1527 = vmatprep.subr.mxu0 0.0
    %1528 = vmatpush1.msra.mxu0 0.0
    %1529 = vmatprep.subr.mxu0 0.0
    %1530 = vmatpush1.msra.mxu0 0.0
    %1531 = vmatprep.subr.mxu0 0.0
    %1532 = vmatpush1.msra.mxu0 0.0
    %1533 = vmatprep.subr.mxu0 0.0
    %1534 = vmatpush1.msra.mxu0 0.0
    %1535 = vmatprep.subr.mxu0 0.0
    %1536 = vmatpush1.msra.mxu0 0.0
    %1537 = vmatprep.subr.mxu0 0.0
    %1538 = vmatpush1.msra.mxu0 0.0
    %1539 = vmatprep.subr.mxu0 0.0
    %1540 = vmatpush1.msra.mxu0 0.0
    %1541 = vmatprep.subr.mxu0 0.0
    %1542 = vmatpush1.msra.mxu0 0.0
    %1543 = vmatprep.subr.mxu0 0.0
    %1544 = vmatpush1.msra.mxu0 0.0
    %1545 = vmatprep.subr.mxu0 0.0
    %1546 = vmatpush1.msra.mxu0 0.0
    %1547 = vmatprep.subr.mxu0 0.0
    %1548 = vmatpush1.msra.mxu0 0.0
    %1549 = vmatprep.subr.mxu0 0.0
    %1550 = vmatpush1.msra.mxu0 0.0
    %1551 = vmatprep.subr.mxu0 0.0
    %1552 = vmatpush1.msra.mxu0 0.0
    %1553 = vmatprep.subr.mxu0 0.0
    %1554 = vmatpush1.msra.mxu0 0.0
    %1555 = vmatprep.subr.mxu0 0.0
    %1556 = vmatpush1.msra.mxu0 0.0
    %1557 = vmatprep.subr.mxu0 0.0
    %1558 = vmatpush1.msra.mxu0 0.0
    %1559 = vmatprep.subr.mxu0 0.0
    %1560 = vmatpush1.msra.mxu0 0.0
    %1561 = vmatprep.subr.mxu0 0.0
    %1562 = vmatpush1.msra.mxu0 0.0
    %1563 = vmatprep.subr.mxu0 0.0
    %1564 = vmatpush1.msra.mxu0 0.0
    %1565 = vmatprep.subr.mxu0 0.0
    %1566 = vmatpush1.msra.mxu0 0.0
    %1567 = vmatprep.subr.mxu0 0.0
    %1568 = vmatpush1.msra.mxu0 0.0
    %1569 = vmatprep.subr.mxu0 0.0
    %1570 = vmatpush1.msra.mxu0 0.0
    %1571 = vmatprep.subr.mxu0 0.0
    %1572 = vmatpush1.msra.mxu0 0.0
    %1573 = vmatprep.subr.mxu0 0.0
    %1574 = vmatpush1.msra.mxu0 0.0
    %1575 = vmatprep.subr.mxu0 0.0
    %1576 = vmatpush1.msra.mxu0 0.0
    %1577 = vmatprep.mubr.f32.mxu0 0.0
    %1578 = vmatmul.mubr.f32.gmra.mrb[0].mxu0 %v1502
    %v1579 = vpop.f32.mrb[0].mxu0
    %v1580 = vadd.f32 0.0, %v1579
    %v1581 = vpop.f32.mrb[0].mxu0
    %1582 = vmatprep.mubr.f32.mxu0 0.0
    %1583 = vmatmul.mubr.f32.gmra.mrb[0].mxu0 %v1505
    %v1584 = vpop.f32.mrb[0].mxu0
    %v1585 = vadd.f32 0.0, %v1584
    %v1586 = vpop.f32.mrb[0].mxu0
    %1587 = vmatprep.mubr.f32.mxu0 0.0
    %1588 = vmatmul.mubr.f32.gmra.mrb[0].mxu0 %v1508
    %v1589 = vpop.f32.mrb[0].mxu0
    %v1590 = vadd.f32 0.0, %v1589
    %v1591 = vpop.f32.mrb[0].mxu0
    %1592 = vmatprep.mubr.f32.mxu0 0.0
    %1593 = vmatmul.mubr.f32.gmra.mrb[0].mxu0 %v1511
    %v1594 = vpop.f32.mrb[0].mxu0
    %v1595 = vadd.f32 0.0, %v1594
    %v1596 = vpop.f32.mrb[0].mxu0
    %1597 = vdwg.mxu0
    %v1599 = vsel %vm711, %v952, 0
    %v1602 = vsel %vm711, %v957, 0
    %v1605 = vsel %vm711, %v962, 0
    %v1608 = vsel %vm711, %v967, 0
    %1610 = vmatprep.subr.mxu0 0.0
    %1611 = vmatpush1.msra.mxu0 %v420
    %1612 = vmatprep.subr.mxu0 0.0
    %1613 = vmatpush1.msra.mxu0 %v421
    %1614 = vmatprep.subr.mxu0 0.0
    %1615 = vmatpush1.msra.mxu0 0.0
    %1616 = vmatprep.subr.mxu0 0.0
    %1617 = vmatpush1.msra.mxu0 0.0
    %1618 = vmatprep.subr.mxu0 0.0
    %1619 = vmatpush1.msra.mxu0 0.0
    %1620 = vmatprep.subr.mxu0 0.0
    %1621 = vmatpush1.msra.mxu0 0.0
    %1622 = vmatprep.subr.mxu0 0.0
    %1623 = vmatpush1.msra.mxu0 0.0
    %1624 = vmatprep.subr.mxu0 0.0
    %1625 = vmatpush1.msra.mxu0 0.0
    %1626 = vmatprep.subr.mxu0 0.0
    %1627 = vmatpush1.msra.mxu0 0.0
    %1628 = vmatprep.subr.mxu0 0.0
    %1629 = vmatpush1.msra.mxu0 0.0
    %1630 = vmatprep.subr.mxu0 0.0
    %1631 = vmatpush1.msra.mxu0 0.0
    %1632 = vmatprep.subr.mxu0 0.0
    %1633 = vmatpush1.msra.mxu0 0.0
    %1634 = vmatprep.subr.mxu0 0.0
    %1635 = vmatpush1.msra.mxu0 0.0
    %1636 = vmatprep.subr.mxu0 0.0
    %1637 = vmatpush1.msra.mxu0 0.0
    %1638 = vmatprep.subr.mxu0 0.0
    %1639 = vmatpush1.msra.mxu0 0.0
    %1640 = vmatprep.subr.mxu0 0.0
    %1641 = vmatpush1.msra.mxu0 0.0
    %1642 = vmatprep.subr.mxu0 0.0
    %1643 = vmatpush1.msra.mxu0 0.0
    %1644 = vmatprep.subr.mxu0 0.0
    %1645 = vmatpush1.msra.mxu0 0.0
    %1646 = vmatprep.subr.mxu0 0.0
    %1647 = vmatpush1.msra.mxu0 0.0
    %1648 = vmatprep.subr.mxu0 0.0
    %1649 = vmatpush1.msra.mxu0 0.0
    %1650 = vmatprep.subr.mxu0 0.0
    %1651 = vmatpush1.msra.mxu0 0.0
    %1652 = vmatprep.subr.mxu0 0.0
    %1653 = vmatpush1.msra.mxu0 0.0
    %1654 = vmatprep.subr.mxu0 0.0
    %1655 = vmatpush1.msra.mxu0 0.0
    %1656 = vmatprep.subr.mxu0 0.0
    %1657 = vmatpush1.msra.mxu0 0.0
    %1658 = vmatprep.subr.mxu0 0.0
    %1659 = vmatpush1.msra.mxu0 0.0
    %1660 = vmatprep.subr.mxu0 0.0
    %1661 = vmatpush1.msra.mxu0 0.0
    %1662 = vmatprep.subr.mxu0 0.0
    %1663 = vmatpush1.msra.mxu0 0.0
    %1664 = vmatprep.subr.mxu0 0.0
    %1665 = vmatpush1.msra.mxu0 0.0
    %1666 = vmatprep.subr.mxu0 0.0
    %1667 = vmatpush1.msra.mxu0 0.0
    %1668 = vmatprep.subr.mxu0 0.0
    %1669 = vmatpush1.msra.mxu0 0.0
    %1670 = vmatprep.subr.mxu0 0.0
    %1671 = vmatpush1.msra.mxu0 0.0
    %1672 = vmatprep.subr.mxu0 0.0
    %1673 = vmatpush1.msra.mxu0 0.0
    %1674 = vmatprep.mubr.f32.mxu0 0.0
    %1675 = vmatmul.mubr.f32.gmra.mrb[0].mxu0 %v1599
    %v1676 = vpop.f32.mrb[0].mxu0
    %v1677 = vadd.f32 %v1580, %v1676
    %v1678 = vpop.f32.mrb[0].mxu0
    %1679 = vmatprep.mubr.f32.mxu0 0.0
    %1680 = vmatmul.mubr.f32.gmra.mrb[0].mxu0 %v1602
    %v1681 = vpop.f32.mrb[0].mxu0
    %v1682 = vadd.f32 %v1585, %v1681
    %v1683 = vpop.f32.mrb[0].mxu0
    %1684 = vmatprep.mubr.f32.mxu0 0.0
    %1685 = vmatmul.mubr.f32.gmra.mrb[0].mxu0 %v1605
    %v1686 = vpop.f32.mrb[0].mxu0
    %v1687 = vadd.f32 %v1590, %v1686
    %v1688 = vpop.f32.mrb[0].mxu0
    %1689 = vmatprep.mubr.f32.mxu0 0.0
    %1690 = vmatmul.mubr.f32.gmra.mrb[0].mxu0 %v1608
    %v1691 = vpop.f32.mrb[0].mxu0
    %v1692 = vadd.f32 %v1595, %v1691
    %v1693 = vpop.f32.mrb[0].mxu0
    %1694 = vdwg.mxu0
    %v1696 = vlaneseq
    %v1697 = vshrl.u32 %v1696, 7
    %v1698 = vsub.s32 0, %v1697
    %v1699 = vrot.slane %v424, %v1698
    %v1701 = vadd.f32 %v1677, %v1699
    %v1702 = vadd.f32 %v1682, %v1699
    %v1703 = vadd.f32 %v1687, %v1699
    %v1704 = vadd.f32 %v1692, %v1699
    %v1705 = vadd.f32 %v380, %v1701
    %v1706 = vadd.f32 %v381, %v1702
    %v1707 = vadd.f32 %v382, %v1703
    %v1708 = vadd.f32 %v383, %v1704
    %v1709 = vsel %vm431, %v1705, 0.0
    %1710 = vadd.xlane.f32.xlu0 %v1709
    %v1711 = vpop.xlane.xlu0 %1710
    %v1712 = vsel %vm431, %v1706, 0.0
    %1713 = vadd.xlane.f32.xlu0 %v1712
    %v1714 = vpop.xlane.xlu0 %1713
    %v1715 = vsel %vm431, %v1707, 0.0
    %1716 = vadd.xlane.f32.xlu0 %v1715
    %v1717 = vpop.xlane.xlu0 %1716
    %v1718 = vsel %vm431, %v1708, 0.0
    %1719 = vadd.xlane.f32.xlu0 %v1718
    %v1720 = vpop.xlane.xlu0 %1719
    %v1721 = vrcp.pop 32.0
    %v1722 = vmul.f32 %v1711, %v1721
    %v1723 = vmul.f32 %v1714, %v1721
    %v1724 = vmul.f32 %v1717, %v1721
    %v1725 = vmul.f32 %v1720, %v1721
    %v1726 = vsub.f32 %v1705, %v1722
    %v1727 = vsub.f32 %v1706, %v1723
    %v1728 = vsub.f32 %v1707, %v1724
    %v1729 = vsub.f32 %v1708, %v1725
    %v1730 = vmul.f32 %v1726, %v1726
    %v1731 = vmul.f32 %v1727, %v1727
    %v1732 = vmul.f32 %v1728, %v1728
    %v1733 = vmul.f32 %v1729, %v1729
    %v1734 = vsel %vm431, %v1730, 0.0
    %1735 = vadd.xlane.f32.xlu0 %v1734
    %v1736 = vpop.xlane.xlu0 %1735
    %v1737 = vsel %vm431, %v1731, 0.0
    %1738 = vadd.xlane.f32.xlu0 %v1737
    %v1739 = vpop.xlane.xlu0 %1738
    %v1740 = vsel %vm431, %v1732, 0.0
    %1741 = vadd.xlane.f32.xlu0 %v1740
    %v1742 = vpop.xlane.xlu0 %1741
    %v1743 = vsel %vm431, %v1733, 0.0
    %1744 = vadd.xlane.f32.xlu0 %v1743
    %v1745 = vpop.xlane.xlu0 %1744
    %v1746 = vmul.f32 %v1736, %v1721
    %v1747 = vmul.f32 %v1739, %v1721
    %v1748 = vmul.f32 %v1742, %v1721
    %v1749 = vmul.f32 %v1745, %v1721
    %v1750 = vadd.f32 %v1746, 1e-05
    %v1751 = vadd.f32 %v1747, 1e-05
    %v1752 = vadd.f32 %v1748, 1e-05
    %v1753 = vadd.f32 %v1749, 1e-05
    %v1754 = vrsqrt.pop %v1750
    %v1755 = vrsqrt.pop %v1751
    %v1756 = vrsqrt.pop %v1752
    %v1757 = vrsqrt.pop %v1753
    %v1758 = vmul.f32 %v1726, %v1754
    %v1759 = vmul.f32 %v1727, %v1755
    %v1760 = vmul.f32 %v1728, %v1756
    %v1761 = vmul.f32 %v1729, %v1757
    %v1763 = vlaneseq
    %v1764 = vshrl.u32 %v1763, 7
    %v1765 = vsub.s32 0, %v1764
    %v1766 = vrot.slane %v384, %v1765
    %v1768 = vmul.f32 %v1758, %v1766
    %v1769 = vmul.f32 %v1759, %v1766
    %v1770 = vmul.f32 %v1760, %v1766
    %v1771 = vmul.f32 %v1761, %v1766
    %v1773 = vlaneseq
    %v1774 = vshrl.u32 %v1773, 7
    %v1775 = vsub.s32 0, %v1774
    %v1776 = vrot.slane %v387, %v1775
    %v1778 = vadd.f32 %v1768, %v1776
    %v1779 = vadd.f32 %v1769, %v1776
    %v1780 = vadd.f32 %v1770, %v1776
    %v1781 = vadd.f32 %v1771, %v1776
    %v1782 = vld [vmem:[%s21] sm:$0xff]
    %v1783 = vld [vmem:[%s21 + $0x8] sm:$0xff]
    %v1784 = vld [vmem:[%s21 + $0x10] sm:$0xff]
    %v1785 = vld [vmem:[%s21 + $0x18] sm:$0xff]
    %v1786 = vld [vmem:[%s23] sm:$0x1]
    %v1787 = vld [vmem:[%s25] sm:$0xff]
    %v1788 = vld [vmem:[%s25 + $0x8] sm:$0xff]
    %v1789 = vld [vmem:[%s25 + $0x10] sm:$0xff]
    %v1790 = vld [vmem:[%s25 + $0x18] sm:$0xff]
    %v1791 = vld [vmem:[%s25 + $0x20] sm:$0xff]
    %v1792 = vld [vmem:[%s25 + $0x28] sm:$0xff]
    %v1793 = vld [vmem:[%s25 + $0x30] sm:$0xff]
    %v1794 = vld [vmem:[%s25 + $0x38] sm:$0xff]
    %v1795 = vld [vmem:[%s27] sm:$0x1]
    %v1797 = vlaneseq
    %v1798 = vshrl.u32 %v1797, 7
    %v1799 = vsub.s32 0, %v1798
    %v1800 = vrot.slane %v1786, %v1799
    %v1803 = vsel %vm431, %v1778, 0
    %v1806 = vsel %vm431, %v1779, 0
    %v1809 = vsel %vm431, %v1780, 0
    %v1812 = vsel %vm431, %v1781, 0
    %1814 = vmatprep.subr.mxu0 0.0
    %1815 = vmatpush1.msra.mxu0 %v1782
    %1816 = vmatprep.subr.mxu0 0.0
    %1817 = vmatpush1.msra.mxu0 %v1783
    %1818 = vmatprep.subr.mxu0 0.0
    %1819 = vmatpush1.msra.mxu0 %v1784
    %1820 = vmatprep.subr.mxu0 0.0
    %1821 = vmatpush1.msra.mxu0 %v1785
    %1822 = vmatprep.subr.mxu0 0.0
    %1823 = vmatpush1.msra.mxu0 0.0
    %1824 = vmatprep.subr.mxu0 0.0
    %1825 = vmatpush1.msra.mxu0 0.0
    %1826 = vmatprep.subr.mxu0 0.0
    %1827 = vmatpush1.msra.mxu0 0.0
    %1828 = vmatprep.subr.mxu0 0.0
    %1829 = vmatpush1.msra.mxu0 0.0
    %1830 = vmatprep.subr.mxu0 0.0
    %1831 = vmatpush1.msra.mxu0 0.0
    %1832 = vmatprep.subr.mxu0 0.0
    %1833 = vmatpush1.msra.mxu0 0.0
    %1834 = vmatprep.subr.mxu0 0.0
    %1835 = vmatpush1.msra.mxu0 0.0
    %1836 = vmatprep.subr.mxu0 0.0
    %1837 = vmatpush1.msra.mxu0 0.0
    %1838 = vmatprep.subr.mxu0 0.0
    %1839 = vmatpush1.msra.mxu0 0.0
    %1840 = vmatprep.subr.mxu0 0.0
    %1841 = vmatpush1.msra.mxu0 0.0
    %1842 = vmatprep.subr.mxu0 0.0
    %1843 = vmatpush1.msra.mxu0 0.0
    %1844 = vmatprep.subr.mxu0 0.0
    %1845 = vmatpush1.msra.mxu0 0.0
    %1846 = vmatprep.subr.mxu0 0.0
    %1847 = vmatpush1.msra.mxu0 0.0
    %1848 = vmatprep.subr.mxu0 0.0
    %1849 = vmatpush1.msra.mxu0 0.0
    %1850 = vmatprep.subr.mxu0 0.0
    %1851 = vmatpush1.msra.mxu0 0.0
    %1852 = vmatprep.subr.mxu0 0.0
    %1853 = vmatpush1.msra.mxu0 0.0
    %1854 = vmatprep.subr.mxu0 0.0
    %1855 = vmatpush1.msra.mxu0 0.0
    %1856 = vmatprep.subr.mxu0 0.0
    %1857 = vmatpush1.msra.mxu0 0.0
    %1858 = vmatprep.subr.mxu0 0.0
    %1859 = vmatpush1.msra.mxu0 0.0
    %1860 = vmatprep.subr.mxu0 0.0
    %1861 = vmatpush1.msra.mxu0 0.0
    %1862 = vmatprep.subr.mxu0 0.0
    %1863 = vmatpush1.msra.mxu0 0.0
    %1864 = vmatprep.subr.mxu0 0.0
    %1865 = vmatpush1.msra.mxu0 0.0
    %1866 = vmatprep.subr.mxu0 0.0
    %1867 = vmatpush1.msra.mxu0 0.0
    %1868 = vmatprep.subr.mxu0 0.0
    %1869 = vmatpush1.msra.mxu0 0.0
    %1870 = vmatprep.subr.mxu0 0.0
    %1871 = vmatpush1.msra.mxu0 0.0
    %1872 = vmatprep.subr.mxu0 0.0
    %1873 = vmatpush1.msra.mxu0 0.0
    %1874 = vmatprep.subr.mxu0 0.0
    %1875 = vmatpush1.msra.mxu0 0.0
    %1876 = vmatprep.subr.mxu0 0.0
    %1877 = vmatpush1.msra.mxu0 0.0
    %1878 = vmatprep.mubr.f32.mxu0 0.0
    %1879 = vmatmul.mubr.f32.gmra.mrb[0].mxu0 %v1803
    %v1880 = vpop.f32.mrb[0].mxu0
    %v1881 = vadd.f32 %v1800, %v1880
    %v1882 = vpop.f32.mrb[0].mxu0
    %1883 = vmatprep.mubr.f32.mxu0 0.0
    %1884 = vmatmul.mubr.f32.gmra.mrb[0].mxu0 %v1806
    %v1885 = vpop.f32.mrb[0].mxu0
    %v1886 = vadd.f32 %v1800, %v1885
    %v1887 = vpop.f32.mrb[0].mxu0
    %1888 = vmatprep.mubr.f32.mxu0 0.0
    %1889 = vmatmul.mubr.f32.gmra.mrb[0].mxu0 %v1809
    %v1890 = vpop.f32.mrb[0].mxu0
    %v1891 = vadd.f32 %v1800, %v1890
    %v1892 = vpop.f32.mrb[0].mxu0
    %1893 = vmatprep.mubr.f32.mxu0 0.0
    %1894 = vmatmul.mubr.f32.gmra.mrb[0].mxu0 %v1812
    %v1895 = vpop.f32.mrb[0].mxu0
    %v1896 = vadd.f32 %v1800, %v1895
    %v1897 = vpop.f32.mrb[0].mxu0
    %1898 = vdwg.mxu0
    %v1899 = vmax.f32 %v1881, 0.0
    %v1900 = vmax.f32 %v1886, 0.0
    %v1901 = vmax.f32 %v1891, 0.0
    %v1902 = vmax.f32 %v1896, 0.0
    %v1904 = vlaneseq
    %v1905 = vshrl.u32 %v1904, 7
    %v1906 = vsub.s32 0, %v1905
    %v1907 = vrot.slane %v1795, %v1906
    %v1910 = vsel %vm278, %v1899, 0
    %v1913 = vsel %vm278, %v1900, 0
    %v1916 = vsel %vm278, %v1901, 0
    %v1919 = vsel %vm278, %v1902, 0
    %1921 = vmatprep.subr.mxu0 0.0
    %1922 = vmatpush1.msra.mxu0 %v1787
    %1923 = vmatprep.subr.mxu0 0.0
    %1924 = vmatpush1.msra.mxu0 %v1788
    %1925 = vmatprep.subr.mxu0 0.0
    %1926 = vmatpush1.msra.mxu0 %v1789
    %1927 = vmatprep.subr.mxu0 0.0
    %1928 = vmatpush1.msra.mxu0 %v1790
    %1929 = vmatprep.subr.mxu0 0.0
    %1930 = vmatpush1.msra.mxu0 %v1791
    %1931 = vmatprep.subr.mxu0 0.0
    %1932 = vmatpush1.msra.mxu0 %v1792
    %1933 = vmatprep.subr.mxu0 0.0
    %1934 = vmatpush1.msra.mxu0 %v1793
    %1935 = vmatprep.subr.mxu0 0.0
    %1936 = vmatpush1.msra.mxu0 %v1794
    %1937 = vmatprep.subr.mxu0 0.0
    %1938 = vmatpush1.msra.mxu0 0.0
    %1939 = vmatprep.subr.mxu0 0.0
    %1940 = vmatpush1.msra.mxu0 0.0
    %1941 = vmatprep.subr.mxu0 0.0
    %1942 = vmatpush1.msra.mxu0 0.0
    %1943 = vmatprep.subr.mxu0 0.0
    %1944 = vmatpush1.msra.mxu0 0.0
    %1945 = vmatprep.subr.mxu0 0.0
    %1946 = vmatpush1.msra.mxu0 0.0
    %1947 = vmatprep.subr.mxu0 0.0
    %1948 = vmatpush1.msra.mxu0 0.0
    %1949 = vmatprep.subr.mxu0 0.0
    %1950 = vmatpush1.msra.mxu0 0.0
    %1951 = vmatprep.subr.mxu0 0.0
    %1952 = vmatpush1.msra.mxu0 0.0
    %1953 = vmatprep.subr.mxu0 0.0
    %1954 = vmatpush1.msra.mxu0 0.0
    %1955 = vmatprep.subr.mxu0 0.0
    %1956 = vmatpush1.msra.mxu0 0.0
    %1957 = vmatprep.subr.mxu0 0.0
    %1958 = vmatpush1.msra.mxu0 0.0
    %1959 = vmatprep.subr.mxu0 0.0
    %1960 = vmatpush1.msra.mxu0 0.0
    %1961 = vmatprep.subr.mxu0 0.0
    %1962 = vmatpush1.msra.mxu0 0.0
    %1963 = vmatprep.subr.mxu0 0.0
    %1964 = vmatpush1.msra.mxu0 0.0
    %1965 = vmatprep.subr.mxu0 0.0
    %1966 = vmatpush1.msra.mxu0 0.0
    %1967 = vmatprep.subr.mxu0 0.0
    %1968 = vmatpush1.msra.mxu0 0.0
    %1969 = vmatprep.subr.mxu0 0.0
    %1970 = vmatpush1.msra.mxu0 0.0
    %1971 = vmatprep.subr.mxu0 0.0
    %1972 = vmatpush1.msra.mxu0 0.0
    %1973 = vmatprep.subr.mxu0 0.0
    %1974 = vmatpush1.msra.mxu0 0.0
    %1975 = vmatprep.subr.mxu0 0.0
    %1976 = vmatpush1.msra.mxu0 0.0
    %1977 = vmatprep.subr.mxu0 0.0
    %1978 = vmatpush1.msra.mxu0 0.0
    %1979 = vmatprep.subr.mxu0 0.0
    %1980 = vmatpush1.msra.mxu0 0.0
    %1981 = vmatprep.subr.mxu0 0.0
    %1982 = vmatpush1.msra.mxu0 0.0
    %1983 = vmatprep.subr.mxu0 0.0
    %1984 = vmatpush1.msra.mxu0 0.0
    %1985 = vmatprep.mubr.f32.mxu0 0.0
    %1986 = vmatmul.mubr.f32.gmra.mrb[0].mxu0 %v1910
    %v1987 = vpop.f32.mrb[0].mxu0
    %v1988 = vadd.f32 %v1907, %v1987
    %v1989 = vpop.f32.mrb[0].mxu0
    %1990 = vmatprep.mubr.f32.mxu0 0.0
    %1991 = vmatmul.mubr.f32.gmra.mrb[0].mxu0 %v1913
    %v1992 = vpop.f32.mrb[0].mxu0
    %v1993 = vadd.f32 %v1907, %v1992
    %v1994 = vpop.f32.mrb[0].mxu0
    %1995 = vmatprep.mubr.f32.mxu0 0.0
    %1996 = vmatmul.mubr.f32.gmra.mrb[0].mxu0 %v1916
    %v1997 = vpop.f32.mrb[0].mxu0
    %v1998 = vadd.f32 %v1907, %v1997
    %v1999 = vpop.f32.mrb[0].mxu0
    %2000 = vmatprep.mubr.f32.mxu0 0.0
    %2001 = vmatmul.mubr.f32.gmra.mrb[0].mxu0 %v1919
    %v2002 = vpop.f32.mrb[0].mxu0
    %v2003 = vadd.f32 %v1907, %v2002
    %v2004 = vpop.f32.mrb[0].mxu0
    %2005 = vdwg.mxu0
    %v2006 = vadd.f32 %v1778, %v1988
    %v2007 = vadd.f32 %v1779, %v1993
    %v2008 = vadd.f32 %v1780, %v1998
    %v2009 = vadd.f32 %v1781, %v2003
    %v2010 = vsel %vm431, %v2006, 0.0
    %2011 = vadd.xlane.f32.xlu0 %v2010
    %v2012 = vpop.xlane.xlu0 %2011
    %v2013 = vsel %vm431, %v2007, 0.0
    %2014 = vadd.xlane.f32.xlu0 %v2013
    %v2015 = vpop.xlane.xlu0 %2014
    %v2016 = vsel %vm431, %v2008, 0.0
    %2017 = vadd.xlane.f32.xlu0 %v2016
    %v2018 = vpop.xlane.xlu0 %2017
    %v2019 = vsel %vm431, %v2009, 0.0
    %2020 = vadd.xlane.f32.xlu0 %v2019
    %v2021 = vpop.xlane.xlu0 %2020
    %v2022 = vmul.f32 %v2012, %v1721
    %v2023 = vmul.f32 %v2015, %v1721
    %v2024 = vmul.f32 %v2018, %v1721
    %v2025 = vmul.f32 %v2021, %v1721
    %v2026 = vsub.f32 %v2006, %v2022
    %v2027 = vsub.f32 %v2007, %v2023
    %v2028 = vsub.f32 %v2008, %v2024
    %v2029 = vsub.f32 %v2009, %v2025
    %v2030 = vmul.f32 %v2026, %v2026
    %v2031 = vmul.f32 %v2027, %v2027
    %v2032 = vmul.f32 %v2028, %v2028
    %v2033 = vmul.f32 %v2029, %v2029
    %v2034 = vsel %vm431, %v2030, 0.0
    %2035 = vadd.xlane.f32.xlu0 %v2034
    %v2036 = vpop.xlane.xlu0 %2035
    %v2037 = vsel %vm431, %v2031, 0.0
    %2038 = vadd.xlane.f32.xlu0 %v2037
    %v2039 = vpop.xlane.xlu0 %2038
    %v2040 = vsel %vm431, %v2032, 0.0
    %2041 = vadd.xlane.f32.xlu0 %v2040
    %v2042 = vpop.xlane.xlu0 %2041
    %v2043 = vsel %vm431, %v2033, 0.0
    %2044 = vadd.xlane.f32.xlu0 %v2043
    %v2045 = vpop.xlane.xlu0 %2044
    %v2046 = vmul.f32 %v2036, %v1721
    %v2047 = vmul.f32 %v2039, %v1721
    %v2048 = vmul.f32 %v2042, %v1721
    %v2049 = vmul.f32 %v2045, %v1721
    %v2050 = vadd.f32 %v2046, 1e-05
    %v2051 = vadd.f32 %v2047, 1e-05
    %v2052 = vadd.f32 %v2048, 1e-05
    %v2053 = vadd.f32 %v2049, 1e-05
    %v2054 = vrsqrt.pop %v2050
    %v2055 = vrsqrt.pop %v2051
    %v2056 = vrsqrt.pop %v2052
    %v2057 = vrsqrt.pop %v2053
    %v2058 = vmul.f32 %v2026, %v2054
    %v2059 = vmul.f32 %v2027, %v2055
    %v2060 = vmul.f32 %v2028, %v2056
    %v2061 = vmul.f32 %v2029, %v2057
    %v2063 = vlaneseq
    %v2064 = vshrl.u32 %v2063, 7
    %v2065 = vsub.s32 0, %v2064
    %v2066 = vrot.slane %v385, %v2065
    %v2068 = vmul.f32 %v2058, %v2066
    %v2069 = vmul.f32 %v2059, %v2066
    %v2070 = vmul.f32 %v2060, %v2066
    %v2071 = vmul.f32 %v2061, %v2066
    %v2073 = vlaneseq
    %v2074 = vshrl.u32 %v2073, 7
    %v2075 = vsub.s32 0, %v2074
    %v2076 = vrot.slane %v388, %v2075
    %v2078 = vadd.f32 %v2068, %v2076
    %v2079 = vadd.f32 %v2069, %v2076
    %v2080 = vadd.f32 %v2070, %v2076
    %v2081 = vadd.f32 %v2071, %v2076
    %v2082 = vsel %vm431, %v2078, 0.0
    %2083 = vadd.xlane.f32.xlu0 %v2082
    %v2084 = vpop.xlane.xlu0 %2083
    %v2085 = vsel %vm431, %v2079, 0.0
    %2086 = vadd.xlane.f32.xlu0 %v2085
    %v2087 = vpop.xlane.xlu0 %2086
    %v2088 = vsel %vm431, %v2080, 0.0
    %2089 = vadd.xlane.f32.xlu0 %v2088
    %v2090 = vpop.xlane.xlu0 %2089
    %v2091 = vsel %vm431, %v2081, 0.0
    %2092 = vadd.xlane.f32.xlu0 %v2091
    %v2093 = vpop.xlane.xlu0 %2092
    %v2094 = vmul.f32 %v2084, %v1721
    %v2095 = vmul.f32 %v2087, %v1721
    %v2096 = vmul.f32 %v2090, %v1721
    %v2097 = vmul.f32 %v2093, %v1721
    %v2098 = vsub.f32 %v2078, %v2094
    %v2099 = vsub.f32 %v2079, %v2095
    %v2100 = vsub.f32 %v2080, %v2096
    %v2101 = vsub.f32 %v2081, %v2097
    %v2102 = vmul.f32 %v2098, %v2098
    %v2103 = vmul.f32 %v2099, %v2099
    %v2104 = vmul.f32 %v2100, %v2100
    %v2105 = vmul.f32 %v2101, %v2101
    %v2106 = vsel %vm431, %v2102, 0.0
    %2107 = vadd.xlane.f32.xlu0 %v2106
    %v2108 = vpop.xlane.xlu0 %2107
    %v2109 = vsel %vm431, %v2103, 0.0
    %2110 = vadd.xlane.f32.xlu0 %v2109
    %v2111 = vpop.xlane.xlu0 %2110
    %v2112 = vsel %vm431, %v2104, 0.0
    %2113 = vadd.xlane.f32.xlu0 %v2112
    %v2114 = vpop.xlane.xlu0 %2113
    %v2115 = vsel %vm431, %v2105, 0.0
    %2116 = vadd.xlane.f32.xlu0 %v2115
    %v2117 = vpop.xlane.xlu0 %2116
    %v2118 = vmul.f32 %v2108, %v1721
    %v2119 = vmul.f32 %v2111, %v1721
    %v2120 = vmul.f32 %v2114, %v1721
    %v2121 = vmul.f32 %v2117, %v1721
    %v2122 = vadd.f32 %v2118, 1e-05
    %v2123 = vadd.f32 %v2119, 1e-05
    %v2124 = vadd.f32 %v2120, 1e-05
    %v2125 = vadd.f32 %v2121, 1e-05
    %v2126 = vrsqrt.pop %v2122
    %v2127 = vrsqrt.pop %v2123
    %v2128 = vrsqrt.pop %v2124
    %v2129 = vrsqrt.pop %v2125
    %v2130 = vmul.f32 %v2098, %v2126
    %v2131 = vmul.f32 %v2099, %v2127
    %v2132 = vmul.f32 %v2100, %v2128
    %v2133 = vmul.f32 %v2101, %v2129
    %v2135 = vlaneseq
    %v2136 = vshrl.u32 %v2135, 7
    %v2137 = vsub.s32 0, %v2136
    %v2138 = vrot.slane %v386, %v2137
    %v2140 = vmul.f32 %v2130, %v2138
    %v2141 = vmul.f32 %v2131, %v2138
    %v2142 = vmul.f32 %v2132, %v2138
    %v2143 = vmul.f32 %v2133, %v2138
    %v2145 = vlaneseq
    %v2146 = vshrl.u32 %v2145, 7
    %v2147 = vsub.s32 0, %v2146
    %v2148 = vrot.slane %v389, %v2147
    %v2150 = vadd.f32 %v2140, %v2148
    %v2151 = vadd.f32 %v2141, %v2148
    %v2152 = vadd.f32 %v2142, %v2148
    %v2153 = vadd.f32 %v2143, %v2148
    %v2154 = vld [vmem:[%s5] sm:$0xff]
    %v2155 = vld [vmem:[%s5 + $0x8] sm:$0xff]
    %v2156 = vld [vmem:[%s57] sm:$0x1]
    %v2157 = vld [vmem:[%s57 + $0x1] sm:$0x1]
    %v2158 = vld [vmem:[%s57 + $0x2] sm:$0x1]
    %v2159 = vld [vmem:[%s57 + $0x3] sm:$0x1]
    %v2160 = vld [vmem:[%s59] sm:$0x1]
    %v2161 = vld [vmem:[%s59 + $0x1] sm:$0x1]
    %v2162 = vld [vmem:[%s59 + $0x2] sm:$0x1]
    %v2163 = vld [vmem:[%s59 + $0x3] sm:$0x1]
    %v2164 = vld [vmem:[%s33] sm:$0xff]
    %v2165 = vld [vmem:[%s33 + $0x8] sm:$0xff]
    %v2166 = vld [vmem:[%s33 + $0x10] sm:$0xff]
    %v2167 = vld [vmem:[%s33 + $0x18] sm:$0xff]
    %v2168 = vld [vmem:[%s33 + $0x20] sm:$0xff]
    %v2169 = vld [vmem:[%s33 + $0x28] sm:$0xff]
    %v2170 = vld [vmem:[%s33 + $0x30] sm:$0xff]
    %v2171 = vld [vmem:[%s33 + $0x38] sm:$0xff]
    %v2172 = vld [vmem:[%s33 + $0x40] sm:$0xff]
    %v2173 = vld [vmem:[%s33 + $0x48] sm:$0xff]
    %v2174 = vld [vmem:[%s33 + $0x50] sm:$0xff]
    %v2175 = vld [vmem:[%s33 + $0x58] sm:$0xff]
    %v2176 = vld [vmem:[%s33 + $0x60] sm:$0xff]
    %v2177 = vld [vmem:[%s33 + $0x68] sm:$0xff]
    %v2178 = vld [vmem:[%s33 + $0x70] sm:$0xff]
    %v2179 = vld [vmem:[%s33 + $0x78] sm:$0xff]
    %v2180 = vld [vmem:[%s33 + $0x80] sm:$0xff]
    %v2181 = vld [vmem:[%s33 + $0x88] sm:$0xff]
    %v2182 = vld [vmem:[%s33 + $0x90] sm:$0xff]
    %v2183 = vld [vmem:[%s33 + $0x98] sm:$0xff]
    %v2184 = vld [vmem:[%s33 + $0xa0] sm:$0xff]
    %v2185 = vld [vmem:[%s33 + $0xa8] sm:$0xff]
    %v2186 = vld [vmem:[%s33 + $0xb0] sm:$0xff]
    %v2187 = vld [vmem:[%s33 + $0xb8] sm:$0xff]
    %v2188 = vld [vmem:[%s35] sm:$0x1]
    %v2189 = vld [vmem:[%s35 + $0x1] sm:$0x1]
    %v2190 = vld [vmem:[%s35 + $0x2] sm:$0x1]
    %v2191 = vld [vmem:[%s35 + $0x3] sm:$0x1]
    %v2192 = vld [vmem:[%s35 + $0x4] sm:$0x1]
    %v2193 = vld [vmem:[%s35 + $0x5] sm:$0x1]
    %v2194 = vld [vmem:[%s37] sm:$0xff]
    %v2195 = vld [vmem:[%s37 + $0x8] sm:$0xff]
    %v2196 = vld [vmem:[%s37 + $0x10] sm:$0xff]
    %v2197 = vld [vmem:[%s37 + $0x18] sm:$0xff]
    %v2198 = vld [vmem:[%s39] sm:$0x1]
    %v2200 = vlaneseq
    %v2201 = vshrl.u32 %v2200, 7
    %v2202 = vsub.s32 0, %v2201
    %v2203 = vrot.slane %v2188, %v2202
    %v2206 = vsel %vm431, %v2154, 0
    %v2209 = vsel %vm431, %v2155, 0
    %2211 = vmatprep.subr.mxu0 0.0
    %2212 = vmatpush1.msra.mxu0 %v2164
    %2213 = vmatprep.subr.mxu0 0.0
    %2214 = vmatpush1.msra.mxu0 %v2165
    %2215 = vmatprep.subr.mxu0 0.0
    %2216 = vmatpush1.msra.mxu0 %v2166
    %2217 = vmatprep.subr.mxu0 0.0
    %2218 = vmatpush1.msra.mxu0 %v2167
    %2219 = vmatprep.subr.mxu0 0.0
    %2220 = vmatpush1.msra.mxu0 0.0
    %2221 = vmatprep.subr.mxu0 0.0
    %2222 = vmatpush1.msra.mxu0 0.0
    %2223 = vmatprep.subr.mxu0 0.0
    %2224 = vmatpush1.msra.mxu0 0.0
    %2225 = vmatprep.subr.mxu0 0.0
    %2226 = vmatpush1.msra.mxu0 0.0
    %2227 = vmatprep.subr.mxu0 0.0
    %2228 = vmatpush1.msra.mxu0 0.0
    %2229 = vmatprep.subr.mxu0 0.0
    %2230 = vmatpush1.msra.mxu0 0.0
    %2231 = vmatprep.subr.mxu0 0.0
    %2232 = vmatpush1.msra.mxu0 0.0
    %2233 = vmatprep.subr.mxu0 0.0
    %2234 = vmatpush1.msra.mxu0 0.0
    %2235 = vmatprep.subr.mxu0 0.0
    %2236 = vmatpush1.msra.mxu0 0.0
    %2237 = vmatprep.subr.mxu0 0.0
    %2238 = vmatpush1.msra.mxu0 0.0
    %2239 = vmatprep.subr.mxu0 0.0
    %2240 = vmatpush1.msra.mxu0 0.0
    %2241 = vmatprep.subr.mxu0 0.0
    %2242 = vmatpush1.msra.mxu0 0.0
    %2243 = vmatprep.subr.mxu0 0.0
    %2244 = vmatpush1.msra.mxu0 0.0
    %2245 = vmatprep.subr.mxu0 0.0
    %2246 = vmatpush1.msra.mxu0 0.0
    %2247 = vmatprep.subr.mxu0 0.0
    %2248 = vmatpush1.msra.mxu0 0.0
    %2249 = vmatprep.subr.mxu0 0.0
    %2250 = vmatpush1.msra.mxu0 0.0
    %2251 = vmatprep.subr.mxu0 0.0
    %2252 = vmatpush1.msra.mxu0 0.0
    %2253 = vmatprep.subr.mxu0 0.0
    %2254 = vmatpush1.msra.mxu0 0.0
    %2255 = vmatprep.subr.mxu0 0.0
    %2256 = vmatpush1.msra.mxu0 0.0
    %2257 = vmatprep.subr.mxu0 0.0
    %2258 = vmatpush1.msra.mxu0 0.0
    %2259 = vmatprep.subr.mxu0 0.0
    %2260 = vmatpush1.msra.mxu0 0.0
    %2261 = vmatprep.subr.mxu0 0.0
    %2262 = vmatpush1.msra.mxu0 0.0
    %2263 = vmatprep.subr.mxu0 0.0
    %2264 = vmatpush1.msra.mxu0 0.0
    %2265 = vmatprep.subr.mxu0 0.0
    %2266 = vmatpush1.msra.mxu0 0.0
    %2267 = vmatprep.subr.mxu0 0.0
    %2268 = vmatpush1.msra.mxu0 0.0
    %2269 = vmatprep.subr.mxu0 0.0
    %2270 = vmatpush1.msra.mxu0 0.0
    %2271 = vmatprep.subr.mxu0 0.0
    %2272 = vmatpush1.msra.mxu0 0.0
    %2273 = vmatprep.subr.mxu0 0.0
    %2274 = vmatpush1.msra.mxu0 0.0
    %2275 = vmatprep.mubr.f32.mxu0 0.0
    %2276 = vmatmul.mubr.f32.gmra.mrb[0].mxu0 %v2206
    %v2277 = vpop.f32.mrb[0].mxu0
    %v2278 = vadd.f32 %v2203, %v2277
    %v2279 = vpop.f32.mrb[0].mxu0
    %2280 = vmatprep.mubr.f32.mxu0 0.0
    %2281 = vmatmul.mubr.f32.gmra.mrb[0].mxu0 %v2209
    %v2282 = vpop.f32.mrb[0].mxu0
    %v2283 = vadd.f32 %v2203, %v2282
    %v2284 = vpop.f32.mrb[0].mxu0
    %2285 = vdwg.mxu0
    %v2287 = vlaneseq
    %v2288 = vshrl.u32 %v2287, 7
    %v2289 = vsub.s32 0, %v2288
    %v2290 = vrot.slane %v2190, %v2289
    %2292 = vmatprep.subr.mxu0 0.0
    %2293 = vmatpush1.msra.mxu0 %v2172
    %2294 = vmatprep.subr.mxu0 0.0
    %2295 = vmatpush1.msra.mxu0 %v2173
    %2296 = vmatprep.subr.mxu0 0.0
    %2297 = vmatpush1.msra.mxu0 %v2174
    %2298 = vmatprep.subr.mxu0 0.0
    %2299 = vmatpush1.msra.mxu0 %v2175
    %2300 = vmatprep.subr.mxu0 0.0
    %2301 = vmatpush1.msra.mxu0 0.0
    %2302 = vmatprep.subr.mxu0 0.0
    %2303 = vmatpush1.msra.mxu0 0.0
    %2304 = vmatprep.subr.mxu0 0.0
    %2305 = vmatpush1.msra.mxu0 0.0
    %2306 = vmatprep.subr.mxu0 0.0
    %2307 = vmatpush1.msra.mxu0 0.0
    %2308 = vmatprep.subr.mxu0 0.0
    %2309 = vmatpush1.msra.mxu0 0.0
    %2310 = vmatprep.subr.mxu0 0.0
    %2311 = vmatpush1.msra.mxu0 0.0
    %2312 = vmatprep.subr.mxu0 0.0
    %2313 = vmatpush1.msra.mxu0 0.0
    %2314 = vmatprep.subr.mxu0 0.0
    %2315 = vmatpush1.msra.mxu0 0.0
    %2316 = vmatprep.subr.mxu0 0.0
    %2317 = vmatpush1.msra.mxu0 0.0
    %2318 = vmatprep.subr.mxu0 0.0
    %2319 = vmatpush1.msra.mxu0 0.0
    %2320 = vmatprep.subr.mxu0 0.0
    %2321 = vmatpush1.msra.mxu0 0.0
    %2322 = vmatprep.subr.mxu0 0.0
    %2323 = vmatpush1.msra.mxu0 0.0
    %2324 = vmatprep.subr.mxu0 0.0
    %2325 = vmatpush1.msra.mxu0 0.0
    %2326 = vmatprep.subr.mxu0 0.0
    %2327 = vmatpush1.msra.mxu0 0.0
    %2328 = vmatprep.subr.mxu0 0.0
    %2329 = vmatpush1.msra.mxu0 0.0
    %2330 = vmatprep.subr.mxu0 0.0
    %2331 = vmatpush1.msra.mxu0 0.0
    %2332 = vmatprep.subr.mxu0 0.0
    %2333 = vmatpush1.msra.mxu0 0.0
    %2334 = vmatprep.subr.mxu0 0.0
    %2335 = vmatpush1.msra.mxu0 0.0
    %2336 = vmatprep.subr.mxu0 0.0
    %2337 = vmatpush1.msra.mxu0 0.0
    %2338 = vmatprep.subr.mxu0 0.0
    %2339 = vmatpush1.msra.mxu0 0.0
    %2340 = vmatprep.subr.mxu0 0.0
    %2341 = vmatpush1.msra.mxu0 0.0
    %2342 = vmatprep.subr.mxu0 0.0
    %2343 = vmatpush1.msra.mxu0 0.0
    %2344 = vmatprep.subr.mxu0 0.0
    %2345 = vmatpush1.msra.mxu0 0.0
    %2346 = vmatprep.subr.mxu0 0.0
    %2347 = vmatpush1.msra.mxu0 0.0
    %2348 = vmatprep.subr.mxu0 0.0
    %2349 = vmatpush1.msra.mxu0 0.0
    %2350 = vmatprep.subr.mxu0 0.0
    %2351 = vmatpush1.msra.mxu0 0.0
    %2352 = vmatprep.subr.mxu0 0.0
    %2353 = vmatpush1.msra.mxu0 0.0
    %2354 = vmatprep.subr.mxu0 0.0
    %2355 = vmatpush1.msra.mxu0 0.0
    %2356 = vmatprep.mubr.f32.mxu0 0.0
    %2357 = vmatmul.mubr.f32.gmra.mrb[0].mxu0 %v2206
    %v2358 = vpop.f32.mrb[0].mxu0
    %v2359 = vadd.f32 %v2290, %v2358
    %v2360 = vpop.f32.mrb[0].mxu0
    %2361 = vmatprep.mubr.f32.mxu0 0.0
    %2362 = vmatmul.mubr.f32.gmra.mrb[0].mxu0 %v2209
    %v2363 = vpop.f32.mrb[0].mxu0
    %v2364 = vadd.f32 %v2290, %v2363
    %v2365 = vpop.f32.mrb[0].mxu0
    %2366 = vdwg.mxu0
    %v2368 = vlaneseq
    %v2369 = vshrl.u32 %v2368, 7
    %v2370 = vsub.s32 0, %v2369
    %v2371 = vrot.slane %v2192, %v2370
    %2373 = vmatprep.subr.mxu0 0.0
    %2374 = vmatpush1.msra.mxu0 %v2180
    %2375 = vmatprep.subr.mxu0 0.0
    %2376 = vmatpush1.msra.mxu0 %v2181
    %2377 = vmatprep.subr.mxu0 0.0
    %2378 = vmatpush1.msra.mxu0 %v2182
    %2379 = vmatprep.subr.mxu0 0.0
    %2380 = vmatpush1.msra.mxu0 %v2183
    %2381 = vmatprep.subr.mxu0 0.0
    %2382 = vmatpush1.msra.mxu0 0.0
    %2383 = vmatprep.subr.mxu0 0.0
    %2384 = vmatpush1.msra.mxu0 0.0
    %2385 = vmatprep.subr.mxu0 0.0
    %2386 = vmatpush1.msra.mxu0 0.0
    %2387 = vmatprep.subr.mxu0 0.0
    %2388 = vmatpush1.msra.mxu0 0.0
    %2389 = vmatprep.subr.mxu0 0.0
    %2390 = vmatpush1.msra.mxu0 0.0
    %2391 = vmatprep.subr.mxu0 0.0
    %2392 = vmatpush1.msra.mxu0 0.0
    %2393 = vmatprep.subr.mxu0 0.0
    %2394 = vmatpush1.msra.mxu0 0.0
    %2395 = vmatprep.subr.mxu0 0.0
    %2396 = vmatpush1.msra.mxu0 0.0
    %2397 = vmatprep.subr.mxu0 0.0
    %2398 = vmatpush1.msra.mxu0 0.0
    %2399 = vmatprep.subr.mxu0 0.0
    %2400 = vmatpush1.msra.mxu0 0.0
    %2401 = vmatprep.subr.mxu0 0.0
    %2402 = vmatpush1.msra.mxu0 0.0
    %2403 = vmatprep.subr.mxu0 0.0
    %2404 = vmatpush1.msra.mxu0 0.0
    %2405 = vmatprep.subr.mxu0 0.0
    %2406 = vmatpush1.msra.mxu0 0.0
    %2407 = vmatprep.subr.mxu0 0.0
    %2408 = vmatpush1.msra.mxu0 0.0
    %2409 = vmatprep.subr.mxu0 0.0
    %2410 = vmatpush1.msra.mxu0 0.0
    %2411 = vmatprep.subr.mxu0 0.0
    %2412 = vmatpush1.msra.mxu0 0.0
    %2413 = vmatprep.subr.mxu0 0.0
    %2414 = vmatpush1.msra.mxu0 0.0
    %2415 = vmatprep.subr.mxu0 0.0
    %2416 = vmatpush1.msra.mxu0 0.0
    %2417 = vmatprep.subr.mxu0 0.0
    %2418 = vmatpush1.msra.mxu0 0.0
    %2419 = vmatprep.subr.mxu0 0.0
    %2420 = vmatpush1.msra.mxu0 0.0
    %2421 = vmatprep.subr.mxu0 0.0
    %2422 = vmatpush1.msra.mxu0 0.0
    %2423 = vmatprep.subr.mxu0 0.0
    %2424 = vmatpush1.msra.mxu0 0.0
    %2425 = vmatprep.subr.mxu0 0.0
    %2426 = vmatpush1.msra.mxu0 0.0
    %2427 = vmatprep.subr.mxu0 0.0
    %2428 = vmatpush1.msra.mxu0 0.0
    %2429 = vmatprep.subr.mxu0 0.0
    %2430 = vmatpush1.msra.mxu0 0.0
    %2431 = vmatprep.subr.mxu0 0.0
    %2432 = vmatpush1.msra.mxu0 0.0
    %2433 = vmatprep.subr.mxu0 0.0
    %2434 = vmatpush1.msra.mxu0 0.0
    %2435 = vmatprep.subr.mxu0 0.0
    %2436 = vmatpush1.msra.mxu0 0.0
    %2437 = vmatprep.mubr.f32.mxu0 0.0
    %2438 = vmatmul.mubr.f32.gmra.mrb[0].mxu0 %v2206
    %v2439 = vpop.f32.mrb[0].mxu0
    %v2440 = vadd.f32 %v2371, %v2439
    %v2441 = vpop.f32.mrb[0].mxu0
    %2442 = vmatprep.mubr.f32.mxu0 0.0
    %2443 = vmatmul.mubr.f32.gmra.mrb[0].mxu0 %v2209
    %v2444 = vpop.f32.mrb[0].mxu0
    %v2445 = vadd.f32 %v2371, %v2444
    %v2446 = vpop.f32.mrb[0].mxu0
    %2447 = vdwg.mxu0
    %v2449 = vsel %vm711, %v2278, 0
    %v2452 = vsel %vm711, %v2283, 0
    %v2455 = vsel %vm711, %v2359, 0
    %v2458 = vsel %vm711, %v2364, 0
    %2460 = vmatprep.subr.mxu0 0.0
    %2461 = vmatpush1.xpose.msra.mxu0 %v2455
    %2462 = vmatprep.subr.mxu0 0.0
    %2463 = vmatpush1.xpose.msra.mxu0 %v2458
    %2464 = vmatprep.subr.mxu0 0.0
    %2465 = vmatpush1.xpose.msra.mxu0 0.0
    %2466 = vmatprep.subr.mxu0 0.0
    %2467 = vmatpush1.xpose.msra.mxu0 0.0
    %2468 = vmatprep.subr.mxu0 0.0
    %2469 = vmatpush1.xpose.msra.mxu0 0.0
    %2470 = vmatprep.subr.mxu0 0.0
    %2471 = vmatpush1.xpose.msra.mxu0 0.0
    %2472 = vmatprep.subr.mxu0 0.0
    %2473 = vmatpush1.xpose.msra.mxu0 0.0
    %2474 = vmatprep.subr.mxu0 0.0
    %2475 = vmatpush1.xpose.msra.mxu0 0.0
    %2476 = vmatprep.subr.mxu0 0.0
    %2477 = vmatpush1.xpose.msra.mxu0 0.0
    %2478 = vmatprep.subr.mxu0 0.0
    %2479 = vmatpush1.xpose.msra.mxu0 0.0
    %2480 = vmatprep.subr.mxu0 0.0
    %2481 = vmatpush1.xpose.msra.mxu0 0.0
    %2482 = vmatprep.subr.mxu0 0.0
    %2483 = vmatpush1.xpose.msra.mxu0 0.0
    %2484 = vmatprep.subr.mxu0 0.0
    %2485 = vmatpush1.xpose.msra.mxu0 0.0
    %2486 = vmatprep.subr.mxu0 0.0
    %2487 = vmatpush1.xpose.msra.mxu0 0.0
    %2488 = vmatprep.subr.mxu0 0.0
    %2489 = vmatpush1.xpose.msra.mxu0 0.0
    %2490 = vmatprep.subr.mxu0 0.0
    %2491 = vmatpush1.xpose.msra.mxu0 0.0
    %2492 = vmatprep.subr.mxu0 0.0
    %2493 = vmatpush1.xpose.msra.mxu0 0.0
    %2494 = vmatprep.subr.mxu0 0.0
    %2495 = vmatpush1.xpose.msra.mxu0 0.0
    %2496 = vmatprep.subr.mxu0 0.0
    %2497 = vmatpush1.xpose.msra.mxu0 0.0
    %2498 = vmatprep.subr.mxu0 0.0
    %2499 = vmatpush1.xpose.msra.mxu0 0.0
    %2500 = vmatprep.subr.mxu0 0.0
    %2501 = vmatpush1.xpose.msra.mxu0 0.0
    %2502 = vmatprep.subr.mxu0 0.0
    %2503 = vmatpush1.xpose.msra.mxu0 0.0
    %2504 = vmatprep.subr.mxu0 0.0
    %2505 = vmatpush1.xpose.msra.mxu0 0.0
    %2506 = vmatprep.subr.mxu0 0.0
    %2507 = vmatpush1.xpose.msra.mxu0 0.0
    %2508 = vmatprep.subr.mxu0 0.0
    %2509 = vmatpush1.xpose.msra.mxu0 0.0
    %2510 = vmatprep.subr.mxu0 0.0
    %2511 = vmatpush1.xpose.msra.mxu0 0.0
    %2512 = vmatprep.subr.mxu0 0.0
    %2513 = vmatpush1.xpose.msra.mxu0 0.0
    %2514 = vmatprep.subr.mxu0 0.0
    %2515 = vmatpush1.xpose.msra.mxu0 0.0
    %2516 = vmatprep.subr.mxu0 0.0
    %2517 = vmatpush1.xpose.msra.mxu0 0.0
    %2518 = vmatprep.subr.mxu0 0.0
    %2519 = vmatpush1.xpose.msra.mxu0 0.0
    %2520 = vmatprep.subr.mxu0 0.0
    %2521 = vmatpush1.xpose.msra.mxu0 0.0
    %2522 = vmatprep.subr.mxu0 0.0
    %2523 = vmatpush1.xpose.msra.mxu0 0.0
    %2524 = vmatprep.mubr.f32.mxu0 0.0
    %2525 = vmatmul.mubr.f32.gmra.mrb[0].mxu0 %v2449
    %v2526 = vpop.f32.mrb[0].mxu0
    %v2527 = vadd.f32 0.0, %v2526
    %v2528 = vpop.f32.mrb[0].mxu0
    %2529 = vmatprep.mubr.f32.mxu0 0.0
    %2530 = vmatmul.mubr.f32.gmra.mrb[0].mxu0 %v2452
    %v2531 = vpop.f32.mrb[0].mxu0
    %v2532 = vadd.f32 0.0, %v2531
    %v2533 = vpop.f32.mrb[0].mxu0
    %2534 = vdwg.mxu0
    %v2535 = vmul.f32 %v2527, 0.25
    %v2536 = vmul.f32 %v2532, 0.25
    %v2537 = vadd.f32 %v2535, %v247
    %v2538 = vadd.f32 %v2536, %v248
    %v2539 = vsel %vm711, %v2537, -inf
    %2540 = vmax.xlane.f32.xlu0 %v2539
    %v2541 = vpop.xlane.xlu0 %2540
    %v2542 = vsel %vm711, %v2538, -inf
    %2543 = vmax.xlane.f32.xlu0 %v2542
    %v2544 = vpop.xlane.xlu0 %2543
    %v2545 = vsub.f32 %v2537, %v2541
    %v2546 = vsub.f32 %v2538, %v2544
    %v2547 = vmul.f32 %v2545, 1.442695
    %v2548 = vpow.pop %v2547
    %v2549 = vmul.f32 %v2546, 1.442695
    %v2550 = vpow.pop %v2549
    %v2551 = vsel %vm711, %v2548, 0.0
    %2552 = vadd.xlane.f32.xlu0 %v2551
    %v2553 = vpop.xlane.xlu0 %2552
    %v2554 = vsel %vm711, %v2550, 0.0
    %2555 = vadd.xlane.f32.xlu0 %v2554
    %v2556 = vpop.xlane.xlu0 %2555
    %v2557 = vrcp.pop %v2553
    %v2558 = vrcp.pop %v2556
    %v2559 = vmul.f32 %v2548, %v2557
    %v2560 = vmul.f32 %v2550, %v2558
    %v2562 = vsel %vm711, %v2559, 0
    %v2565 = vsel %vm711, %v2560, 0
    %2567 = vmatprep.subr.mxu0 0.0
    %2568 = vmatpush1.msra.mxu0 %v2440
    %2569 = vmatprep.subr.mxu0 0.0
    %2570 = vmatpush1.msra.mxu0 %v2445
    %2571 = vmatprep.subr.mxu0 0.0
    %2572 = vmatpush1.msra.mxu0 0.0
    %2573 = vmatprep.subr.mxu0 0.0
    %2574 = vmatpush1.msra.mxu0 0.0
    %2575 = vmatprep.subr.mxu0 0.0
    %2576 = vmatpush1.msra.mxu0 0.0
    %2577 = vmatprep.subr.mxu0 0.0
    %2578 = vmatpush1.msra.mxu0 0.0
    %2579 = vmatprep.subr.mxu0 0.0
    %2580 = vmatpush1.msra.mxu0 0.0
    %2581 = vmatprep.subr.mxu0 0.0
    %2582 = vmatpush1.msra.mxu0 0.0
    %2583 = vmatprep.subr.mxu0 0.0
    %2584 = vmatpush1.msra.mxu0 0.0
    %2585 = vmatprep.subr.mxu0 0.0
    %2586 = vmatpush1.msra.mxu0 0.0
    %2587 = vmatprep.subr.mxu0 0.0
    %2588 = vmatpush1.msra.mxu0 0.0
    %2589 = vmatprep.subr.mxu0 0.0
    %2590 = vmatpush1.msra.mxu0 0.0
    %2591 = vmatprep.subr.mxu0 0.0
    %2592 = vmatpush1.msra.mxu0 0.0
    %2593 = vmatprep.subr.mxu0 0.0
    %2594 = vmatpush1.msra.mxu0 0.0
    %2595 = vmatprep.subr.mxu0 0.0
    %2596 = vmatpush1.msra.mxu0 0.0
    %2597 = vmatprep.subr.mxu0 0.0
    %2598 = vmatpush1.msra.mxu0 0.0
    %2599 = vmatprep.subr.mxu0 0.0
    %2600 = vmatpush1.msra.mxu0 0.0
    %2601 = vmatprep.subr.mxu0 0.0
    %2602 = vmatpush1.msra.mxu0 0.0
    %2603 = vmatprep.subr.mxu0 0.0
    %2604 = vmatpush1.msra.mxu0 0.0
    %2605 = vmatprep.subr.mxu0 0.0
    %2606 = vmatpush1.msra.mxu0 0.0
    %2607 = vmatprep.subr.mxu0 0.0
    %2608 = vmatpush1.msra.mxu0 0.0
    %2609 = vmatprep.subr.mxu0 0.0
    %2610 = vmatpush1.msra.mxu0 0.0
    %2611 = vmatprep.subr.mxu0 0.0
    %2612 = vmatpush1.msra.mxu0 0.0
    %2613 = vmatprep.subr.mxu0 0.0
    %2614 = vmatpush1.msra.mxu0 0.0
    %2615 = vmatprep.subr.mxu0 0.0
    %2616 = vmatpush1.msra.mxu0 0.0
    %2617 = vmatprep.subr.mxu0 0.0
    %2618 = vmatpush1.msra.mxu0 0.0
    %2619 = vmatprep.subr.mxu0 0.0
    %2620 = vmatpush1.msra.mxu0 0.0
    %2621 = vmatprep.subr.mxu0 0.0
    %2622 = vmatpush1.msra.mxu0 0.0
    %2623 = vmatprep.subr.mxu0 0.0
    %2624 = vmatpush1.msra.mxu0 0.0
    %2625 = vmatprep.subr.mxu0 0.0
    %2626 = vmatpush1.msra.mxu0 0.0
    %2627 = vmatprep.subr.mxu0 0.0
    %2628 = vmatpush1.msra.mxu0 0.0
    %2629 = vmatprep.subr.mxu0 0.0
    %2630 = vmatpush1.msra.mxu0 0.0
    %2631 = vmatprep.mubr.f32.mxu0 0.0
    %2632 = vmatmul.mubr.f32.gmra.mrb[0].mxu0 %v2562
    %v2633 = vpop.f32.mrb[0].mxu0
    %v2634 = vadd.f32 0.0, %v2633
    %v2635 = vpop.f32.mrb[0].mxu0
    %2636 = vmatprep.mubr.f32.mxu0 0.0
    %2637 = vmatmul.mubr.f32.gmra.mrb[0].mxu0 %v2565
    %v2638 = vpop.f32.mrb[0].mxu0
    %v2639 = vadd.f32 0.0, %v2638
    %v2640 = vpop.f32.mrb[0].mxu0
    %2641 = vdwg.mxu0
    %v2643 = vlaneseq
    %v2644 = vshrl.u32 %v2643, 7
    %v2645 = vsub.s32 0, %v2644
    %v2646 = vrot.slane %v2189, %v2645
    %2648 = vmatprep.subr.mxu0 0.0
    %2649 = vmatpush1.msra.mxu0 %v2168
    %2650 = vmatprep.subr.mxu0 0.0
    %2651 = vmatpush1.msra.mxu0 %v2169
    %2652 = vmatprep.subr.mxu0 0.0
    %2653 = vmatpush1.msra.mxu0 %v2170
    %2654 = vmatprep.subr.mxu0 0.0
    %2655 = vmatpush1.msra.mxu0 %v2171
    %2656 = vmatprep.subr.mxu0 0.0
    %2657 = vmatpush1.msra.mxu0 0.0
    %2658 = vmatprep.subr.mxu0 0.0
    %2659 = vmatpush1.msra.mxu0 0.0
    %2660 = vmatprep.subr.mxu0 0.0
    %2661 = vmatpush1.msra.mxu0 0.0
    %2662 = vmatprep.subr.mxu0 0.0
    %2663 = vmatpush1.msra.mxu0 0.0
    %2664 = vmatprep.subr.mxu0 0.0
    %2665 = vmatpush1.msra.mxu0 0.0
    %2666 = vmatprep.subr.mxu0 0.0
    %2667 = vmatpush1.msra.mxu0 0.0
    %2668 = vmatprep.subr.mxu0 0.0
    %2669 = vmatpush1.msra.mxu0 0.0
    %2670 = vmatprep.subr.mxu0 0.0
    %2671 = vmatpush1.msra.mxu0 0.0
    %2672 = vmatprep.subr.mxu0 0.0
    %2673 = vmatpush1.msra.mxu0 0.0
    %2674 = vmatprep.subr.mxu0 0.0
    %2675 = vmatpush1.msra.mxu0 0.0
    %2676 = vmatprep.subr.mxu0 0.0
    %2677 = vmatpush1.msra.mxu0 0.0
    %2678 = vmatprep.subr.mxu0 0.0
    %2679 = vmatpush1.msra.mxu0 0.0
    %2680 = vmatprep.subr.mxu0 0.0
    %2681 = vmatpush1.msra.mxu0 0.0
    %2682 = vmatprep.subr.mxu0 0.0
    %2683 = vmatpush1.msra.mxu0 0.0
    %2684 = vmatprep.subr.mxu0 0.0
    %2685 = vmatpush1.msra.mxu0 0.0
    %2686 = vmatprep.subr.mxu0 0.0
    %2687 = vmatpush1.msra.mxu0 0.0
    %2688 = vmatprep.subr.mxu0 0.0
    %2689 = vmatpush1.msra.mxu0 0.0
    %2690 = vmatprep.subr.mxu0 0.0
    %2691 = vmatpush1.msra.mxu0 0.0
    %2692 = vmatprep.subr.mxu0 0.0
    %2693 = vmatpush1.msra.mxu0 0.0
    %2694 = vmatprep.subr.mxu0 0.0
    %2695 = vmatpush1.msra.mxu0 0.0
    %2696 = vmatprep.subr.mxu0 0.0
    %2697 = vmatpush1.msra.mxu0 0.0
    %2698 = vmatprep.subr.mxu0 0.0
    %2699 = vmatpush1.msra.mxu0 0.0
    %2700 = vmatprep.subr.mxu0 0.0
    %2701 = vmatpush1.msra.mxu0 0.0
    %2702 = vmatprep.subr.mxu0 0.0
    %2703 = vmatpush1.msra.mxu0 0.0
    %2704 = vmatprep.subr.mxu0 0.0
    %2705 = vmatpush1.msra.mxu0 0.0
    %2706 = vmatprep.subr.mxu0 0.0
    %2707 = vmatpush1.msra.mxu0 0.0
    %2708 = vmatprep.subr.mxu0 0.0
    %2709 = vmatpush1.msra.mxu0 0.0
    %2710 = vmatprep.subr.mxu0 0.0
    %2711 = vmatpush1.msra.mxu0 0.0
    %2712 = vmatprep.mubr.f32.mxu0 0.0
    %2713 = vmatmul.mubr.f32.gmra.mrb[0].mxu0 %v2206
    %v2714 = vpop.f32.mrb[0].mxu0
    %v2715 = vadd.f32 %v2646, %v2714
    %v2716 = vpop.f32.mrb[0].mxu0
    %2717 = vmatprep.mubr.f32.mxu0 0.0
    %2718 = vmatmul.mubr.f32.gmra.mrb[0].mxu0 %v2209
    %v2719 = vpop.f32.mrb[0].mxu0
    %v2720 = vadd.f32 %v2646, %v2719
    %v2721 = vpop.f32.mrb[0].mxu0
    %2722 = vdwg.mxu0
    %v2724 = vlaneseq
    %v2725 = vshrl.u32 %v2724, 7
    %v2726 = vsub.s32 0, %v2725
    %v2727 = vrot.slane %v2191, %v2726
    %2729 = vmatprep.subr.mxu0 0.0
    %2730 = vmatpush1.msra.mxu0 %v2176
    %2731 = vmatprep.subr.mxu0 0.0
    %2732 = vmatpush1.msra.mxu0 %v2177
    %2733 = vmatprep.subr.mxu0 0.0
    %2734 = vmatpush1.msra.mxu0 %v2178
    %2735 = vmatprep.subr.mxu0 0.0
    %2736 = vmatpush1.msra.mxu0 %v2179
    %2737 = vmatprep.subr.mxu0 0.0
    %2738 = vmatpush1.msra.mxu0 0.0
    %2739 = vmatprep.subr.mxu0 0.0
    %2740 = vmatpush1.msra.mxu0 0.0
    %2741 = vmatprep.subr.mxu0 0.0
    %2742 = vmatpush1.msra.mxu0 0.0
    %2743 = vmatprep.subr.mxu0 0.0
    %2744 = vmatpush1.msra.mxu0 0.0
    %2745 = vmatprep.subr.mxu0 0.0
    %2746 = vmatpush1.msra.mxu0 0.0
    %2747 = vmatprep.subr.mxu0 0.0
    %2748 = vmatpush1.msra.mxu0 0.0
    %2749 = vmatprep.subr.mxu0 0.0
    %2750 = vmatpush1.msra.mxu0 0.0
    %2751 = vmatprep.subr.mxu0 0.0
    %2752 = vmatpush1.msra.mxu0 0.0
    %2753 = vmatprep.subr.mxu0 0.0
    %2754 = vmatpush1.msra.mxu0 0.0
    %2755 = vmatprep.subr.mxu0 0.0
    %2756 = vmatpush1.msra.mxu0 0.0
    %2757 = vmatprep.subr.mxu0 0.0
    %2758 = vmatpush1.msra.mxu0 0.0
    %2759 = vmatprep.subr.mxu0 0.0
    %2760 = vmatpush1.msra.mxu0 0.0
    %2761 = vmatprep.subr.mxu0 0.0
    %2762 = vmatpush1.msra.mxu0 0.0
    %2763 = vmatprep.subr.mxu0 0.0
    %2764 = vmatpush1.msra.mxu0 0.0
    %2765 = vmatprep.subr.mxu0 0.0
    %2766 = vmatpush1.msra.mxu0 0.0
    %2767 = vmatprep.subr.mxu0 0.0
    %2768 = vmatpush1.msra.mxu0 0.0
    %2769 = vmatprep.subr.mxu0 0.0
    %2770 = vmatpush1.msra.mxu0 0.0
    %2771 = vmatprep.subr.mxu0 0.0
    %2772 = vmatpush1.msra.mxu0 0.0
    %2773 = vmatprep.subr.mxu0 0.0
    %2774 = vmatpush1.msra.mxu0 0.0
    %2775 = vmatprep.subr.mxu0 0.0
    %2776 = vmatpush1.msra.mxu0 0.0
    %2777 = vmatprep.subr.mxu0 0.0
    %2778 = vmatpush1.msra.mxu0 0.0
    %2779 = vmatprep.subr.mxu0 0.0
    %2780 = vmatpush1.msra.mxu0 0.0
    %2781 = vmatprep.subr.mxu0 0.0
    %2782 = vmatpush1.msra.mxu0 0.0
    %2783 = vmatprep.subr.mxu0 0.0
    %2784 = vmatpush1.msra.mxu0 0.0
    %2785 = vmatprep.subr.mxu0 0.0
    %2786 = vmatpush1.msra.mxu0 0.0
    %2787 = vmatprep.subr.mxu0 0.0
    %2788 = vmatpush1.msra.mxu0 0.0
    %2789 = vmatprep.subr.mxu0 0.0
    %2790 = vmatpush1.msra.mxu0 0.0
    %2791 = vmatprep.subr.mxu0 0.0
    %2792 = vmatpush1.msra.mxu0 0.0
    %2793 = vmatprep.mubr.f32.mxu0 0.0
    %2794 = vmatmul.mubr.f32.gmra.mrb[0].mxu0 %v2206
    %v2795 = vpop.f32.mrb[0].mxu0
    %v2796 = vadd.f32 %v2727, %v2795
    %v2797 = vpop.f32.mrb[0].mxu0
    %2798 = vmatprep.mubr.f32.mxu0 0.0
    %2799 = vmatmul.mubr.f32.gmra.mrb[0].mxu0 %v2209
    %v2800 = vpop.f32.mrb[0].mxu0
    %v2801 = vadd.f32 %v2727, %v2800
    %v2802 = vpop.f32.mrb[0].mxu0
    %2803 = vdwg.mxu0
    %v2805 = vlaneseq
    %v2806 = vshrl.u32 %v2805, 7
    %v2807 = vsub.s32 0, %v2806
    %v2808 = vrot.slane %v2193, %v2807
    %2810 = vmatprep.subr.mxu0 0.0
    %2811 = vmatpush1.msra.mxu0 %v2184
    %2812 = vmatprep.subr.mxu0 0.0
    %2813 = vmatpush1.msra.mxu0 %v2185
    %2814 = vmatprep.subr.mxu0 0.0
    %2815 = vmatpush1.msra.mxu0 %v2186
    %2816 = vmatprep.subr.mxu0 0.0
    %2817 = vmatpush1.msra.mxu0 %v2187
    %2818 = vmatprep.subr.mxu0 0.0
    %2819 = vmatpush1.msra.mxu0 0.0
    %2820 = vmatprep.subr.mxu0 0.0
    %2821 = vmatpush1.msra.mxu0 0.0
    %2822 = vmatprep.subr.mxu0 0.0
    %2823 = vmatpush1.msra.mxu0 0.0
    %2824 = vmatprep.subr.mxu0 0.0
    %2825 = vmatpush1.msra.mxu0 0.0
    %2826 = vmatprep.subr.mxu0 0.0
    %2827 = vmatpush1.msra.mxu0 0.0
    %2828 = vmatprep.subr.mxu0 0.0
    %2829 = vmatpush1.msra.mxu0 0.0
    %2830 = vmatprep.subr.mxu0 0.0
    %2831 = vmatpush1.msra.mxu0 0.0
    %2832 = vmatprep.subr.mxu0 0.0
    %2833 = vmatpush1.msra.mxu0 0.0
    %2834 = vmatprep.subr.mxu0 0.0
    %2835 = vmatpush1.msra.mxu0 0.0
    %2836 = vmatprep.subr.mxu0 0.0
    %2837 = vmatpush1.msra.mxu0 0.0
    %2838 = vmatprep.subr.mxu0 0.0
    %2839 = vmatpush1.msra.mxu0 0.0
    %2840 = vmatprep.subr.mxu0 0.0
    %2841 = vmatpush1.msra.mxu0 0.0
    %2842 = vmatprep.subr.mxu0 0.0
    %2843 = vmatpush1.msra.mxu0 0.0
    %2844 = vmatprep.subr.mxu0 0.0
    %2845 = vmatpush1.msra.mxu0 0.0
    %2846 = vmatprep.subr.mxu0 0.0
    %2847 = vmatpush1.msra.mxu0 0.0
    %2848 = vmatprep.subr.mxu0 0.0
    %2849 = vmatpush1.msra.mxu0 0.0
    %2850 = vmatprep.subr.mxu0 0.0
    %2851 = vmatpush1.msra.mxu0 0.0
    %2852 = vmatprep.subr.mxu0 0.0
    %2853 = vmatpush1.msra.mxu0 0.0
    %2854 = vmatprep.subr.mxu0 0.0
    %2855 = vmatpush1.msra.mxu0 0.0
    %2856 = vmatprep.subr.mxu0 0.0
    %2857 = vmatpush1.msra.mxu0 0.0
    %2858 = vmatprep.subr.mxu0 0.0
    %2859 = vmatpush1.msra.mxu0 0.0
    %2860 = vmatprep.subr.mxu0 0.0
    %2861 = vmatpush1.msra.mxu0 0.0
    %2862 = vmatprep.subr.mxu0 0.0
    %2863 = vmatpush1.msra.mxu0 0.0
    %2864 = vmatprep.subr.mxu0 0.0
    %2865 = vmatpush1.msra.mxu0 0.0
    %2866 = vmatprep.subr.mxu0 0.0
    %2867 = vmatpush1.msra.mxu0 0.0
    %2868 = vmatprep.subr.mxu0 0.0
    %2869 = vmatpush1.msra.mxu0 0.0
    %2870 = vmatprep.subr.mxu0 0.0
    %2871 = vmatpush1.msra.mxu0 0.0
    %2872 = vmatprep.subr.mxu0 0.0
    %2873 = vmatpush1.msra.mxu0 0.0
    %2874 = vmatprep.mubr.f32.mxu0 0.0
    %2875 = vmatmul.mubr.f32.gmra.mrb[0].mxu0 %v2206
    %v2876 = vpop.f32.mrb[0].mxu0
    %v2877 = vadd.f32 %v2808, %v2876
    %v2878 = vpop.f32.mrb[0].mxu0
    %2879 = vmatprep.mubr.f32.mxu0 0.0
    %2880 = vmatmul.mubr.f32.gmra.mrb[0].mxu0 %v2209
    %v2881 = vpop.f32.mrb[0].mxu0
    %v2882 = vadd.f32 %v2808, %v2881
    %v2883 = vpop.f32.mrb[0].mxu0
    %2884 = vdwg.mxu0
    %v2886 = vsel %vm711, %v2715, 0
    %v2889 = vsel %vm711, %v2720, 0
    %v2892 = vsel %vm711, %v2796, 0
    %v2895 = vsel %vm711, %v2801, 0
    %2897 = vmatprep.subr.mxu0 0.0
    %2898 = vmatpush1.xpose.msra.mxu0 %v2892
    %2899 = vmatprep.subr.mxu0 0.0
    %2900 = vmatpush1.xpose.msra.mxu0 %v2895
    %2901 = vmatprep.subr.mxu0 0.0
    %2902 = vmatpush1.xpose.msra.mxu0 0.0
    %2903 = vmatprep.subr.mxu0 0.0
    %2904 = vmatpush1.xpose.msra.mxu0 0.0
    %2905 = vmatprep.subr.mxu0 0.0
    %2906 = vmatpush1.xpose.msra.mxu0 0.0
    %2907 = vmatprep.subr.mxu0 0.0
    %2908 = vmatpush1.xpose.msra.mxu0 0.0
    %2909 = vmatprep.subr.mxu0 0.0
    %2910 = vmatpush1.xpose.msra.mxu0 0.0
    %2911 = vmatprep.subr.mxu0 0.0
    %2912 = vmatpush1.xpose.msra.mxu0 0.0
    %2913 = vmatprep.subr.mxu0 0.0
    %2914 = vmatpush1.xpose.msra.mxu0 0.0
    %2915 = vmatprep.subr.mxu0 0.0
    %2916 = vmatpush1.xpose.msra.mxu0 0.0
    %2917 = vmatprep.subr.mxu0 0.0
    %2918 = vmatpush1.xpose.msra.mxu0 0.0
    %2919 = vmatprep.subr.mxu0 0.0
    %2920 = vmatpush1.xpose.msra.mxu0 0.0
    %2921 = vmatprep.subr.mxu0 0.0
    %2922 = vmatpush1.xpose.msra.mxu0 0.0
    %2923 = vmatprep.subr.mxu0 0.0
    %2924 = vmatpush1.xpose.msra.mxu0 0.0
    %2925 = vmatprep.subr.mxu0 0.0
    %2926 = vmatpush1.xpose.msra.mxu0 0.0
    %2927 = vmatprep.subr.mxu0 0.0
    %2928 = vmatpush1.xpose.msra.mxu0 0.0
    %2929 = vmatprep.subr.mxu0 0.0
    %2930 = vmatpush1.xpose.msra.mxu0 0.0
    %2931 = vmatprep.subr.mxu0 0.0
    %2932 = vmatpush1.xpose.msra.mxu0 0.0
    %2933 = vmatprep.subr.mxu0 0.0
    %2934 = vmatpush1.xpose.msra.mxu0 0.0
    %2935 = vmatprep.subr.mxu0 0.0
    %2936 = vmatpush1.xpose.msra.mxu0 0.0
    %2937 = vmatprep.subr.mxu0 0.0
    %2938 = vmatpush1.xpose.msra.mxu0 0.0
    %2939 = vmatprep.subr.mxu0 0.0
    %2940 = vmatpush1.xpose.msra.mxu0 0.0
    %2941 = vmatprep.subr.mxu0 0.0
    %2942 = vmatpush1.xpose.msra.mxu0 0.0
    %2943 = vmatprep.subr.mxu0 0.0
    %2944 = vmatpush1.xpose.msra.mxu0 0.0
    %2945 = vmatprep.subr.mxu0 0.0
    %2946 = vmatpush1.xpose.msra.mxu0 0.0
    %2947 = vmatprep.subr.mxu0 0.0
    %2948 = vmatpush1.xpose.msra.mxu0 0.0
    %2949 = vmatprep.subr.mxu0 0.0
    %2950 = vmatpush1.xpose.msra.mxu0 0.0
    %2951 = vmatprep.subr.mxu0 0.0
    %2952 = vmatpush1.xpose.msra.mxu0 0.0
    %2953 = vmatprep.subr.mxu0 0.0
    %2954 = vmatpush1.xpose.msra.mxu0 0.0
    %2955 = vmatprep.subr.mxu0 0.0
    %2956 = vmatpush1.xpose.msra.mxu0 0.0
    %2957 = vmatprep.subr.mxu0 0.0
    %2958 = vmatpush1.xpose.msra.mxu0 0.0
    %2959 = vmatprep.subr.mxu0 0.0
    %2960 = vmatpush1.xpose.msra.mxu0 0.0
    %2961 = vmatprep.mubr.f32.mxu0 0.0
    %2962 = vmatmul.mubr.f32.gmra.mrb[0].mxu0 %v2886
    %v2963 = vpop.f32.mrb[0].mxu0
    %v2964 = vadd.f32 0.0, %v2963
    %v2965 = vpop.f32.mrb[0].mxu0
    %2966 = vmatprep.mubr.f32.mxu0 0.0
    %2967 = vmatmul.mubr.f32.gmra.mrb[0].mxu0 %v2889
    %v2968 = vpop.f32.mrb[0].mxu0
    %v2969 = vadd.f32 0.0, %v2968
    %v2970 = vpop.f32.mrb[0].mxu0
    %2971 = vdwg.mxu0
    %v2972 = vmul.f32 %v2964, 0.25
    %v2973 = vmul.f32 %v2969, 0.25
    %v2974 = vadd.f32 %v2972, %v247
    %v2975 = vadd.f32 %v2973, %v248
    %v2976 = vsel %vm711, %v2974, -inf
    %2977 = vmax.xlane.f32.xlu0 %v2976
    %v2978 = vpop.xlane.xlu0 %2977
    %v2979 = vsel %vm711, %v2975, -inf
    %2980 = vmax.xlane.f32.xlu0 %v2979
    %v2981 = vpop.xlane.xlu0 %2980
    %v2982 = vsub.f32 %v2974, %v2978
    %v2983 = vsub.f32 %v2975, %v2981
    %v2984 = vmul.f32 %v2982, 1.442695
    %v2985 = vpow.pop %v2984
    %v2986 = vmul.f32 %v2983, 1.442695
    %v2987 = vpow.pop %v2986
    %v2988 = vsel %vm711, %v2985, 0.0
    %2989 = vadd.xlane.f32.xlu0 %v2988
    %v2990 = vpop.xlane.xlu0 %2989
    %v2991 = vsel %vm711, %v2987, 0.0
    %2992 = vadd.xlane.f32.xlu0 %v2991
    %v2993 = vpop.xlane.xlu0 %2992
    %v2994 = vrcp.pop %v2990
    %v2995 = vrcp.pop %v2993
    %v2996 = vmul.f32 %v2985, %v2994
    %v2997 = vmul.f32 %v2987, %v2995
    %v2999 = vsel %vm711, %v2996, 0
    %v3002 = vsel %vm711, %v2997, 0
    %3004 = vmatprep.subr.mxu0 0.0
    %3005 = vmatpush1.msra.mxu0 %v2877
    %3006 = vmatprep.subr.mxu0 0.0
    %3007 = vmatpush1.msra.mxu0 %v2882
    %3008 = vmatprep.subr.mxu0 0.0
    %3009 = vmatpush1.msra.mxu0 0.0
    %3010 = vmatprep.subr.mxu0 0.0
    %3011 = vmatpush1.msra.mxu0 0.0
    %3012 = vmatprep.subr.mxu0 0.0
    %3013 = vmatpush1.msra.mxu0 0.0
    %3014 = vmatprep.subr.mxu0 0.0
    %3015 = vmatpush1.msra.mxu0 0.0
    %3016 = vmatprep.subr.mxu0 0.0
    %3017 = vmatpush1.msra.mxu0 0.0
    %3018 = vmatprep.subr.mxu0 0.0
    %3019 = vmatpush1.msra.mxu0 0.0
    %3020 = vmatprep.subr.mxu0 0.0
    %3021 = vmatpush1.msra.mxu0 0.0
    %3022 = vmatprep.subr.mxu0 0.0
    %3023 = vmatpush1.msra.mxu0 0.0
    %3024 = vmatprep.subr.mxu0 0.0
    %3025 = vmatpush1.msra.mxu0 0.0
    %3026 = vmatprep.subr.mxu0 0.0
    %3027 = vmatpush1.msra.mxu0 0.0
    %3028 = vmatprep.subr.mxu0 0.0
    %3029 = vmatpush1.msra.mxu0 0.0
    %3030 = vmatprep.subr.mxu0 0.0
    %3031 = vmatpush1.msra.mxu0 0.0
    %3032 = vmatprep.subr.mxu0 0.0
    %3033 = vmatpush1.msra.mxu0 0.0
    %3034 = vmatprep.subr.mxu0 0.0
    %3035 = vmatpush1.msra.mxu0 0.0
    %3036 = vmatprep.subr.mxu0 0.0
    %3037 = vmatpush1.msra.mxu0 0.0
    %3038 = vmatprep.subr.mxu0 0.0
    %3039 = vmatpush1.msra.mxu0 0.0
    %3040 = vmatprep.subr.mxu0 0.0
    %3041 = vmatpush1.msra.mxu0 0.0
    %3042 = vmatprep.subr.mxu0 0.0
    %3043 = vmatpush1.msra.mxu0 0.0
    %3044 = vmatprep.subr.mxu0 0.0
    %3045 = vmatpush1.msra.mxu0 0.0
    %3046 = vmatprep.subr.mxu0 0.0
    %3047 = vmatpush1.msra.mxu0 0.0
    %3048 = vmatprep.subr.mxu0 0.0
    %3049 = vmatpush1.msra.mxu0 0.0
    %3050 = vmatprep.subr.mxu0 0.0
    %3051 = vmatpush1.msra.mxu0 0.0
    %3052 = vmatprep.subr.mxu0 0.0
    %3053 = vmatpush1.msra.mxu0 0.0
    %3054 = vmatprep.subr.mxu0 0.0
    %3055 = vmatpush1.msra.mxu0 0.0
    %3056 = vmatprep.subr.mxu0 0.0
    %3057 = vmatpush1.msra.mxu0 0.0
    %3058 = vmatprep.subr.mxu0 0.0
    %3059 = vmatpush1.msra.mxu0 0.0
    %3060 = vmatprep.subr.mxu0 0.0
    %3061 = vmatpush1.msra.mxu0 0.0
    %3062 = vmatprep.subr.mxu0 0.0
    %3063 = vmatpush1.msra.mxu0 0.0
    %3064 = vmatprep.subr.mxu0 0.0
    %3065 = vmatpush1.msra.mxu0 0.0
    %3066 = vmatprep.subr.mxu0 0.0
    %3067 = vmatpush1.msra.mxu0 0.0
    %3068 = vmatprep.mubr.f32.mxu0 0.0
    %3069 = vmatmul.mubr.f32.gmra.mrb[0].mxu0 %v2999
    %v3070 = vpop.f32.mrb[0].mxu0
    %v3071 = vadd.f32 0.0, %v3070
    %v3072 = vpop.f32.mrb[0].mxu0
    %3073 = vmatprep.mubr.f32.mxu0 0.0
    %3074 = vmatmul.mubr.f32.gmra.mrb[0].mxu0 %v3002
    %v3075 = vpop.f32.mrb[0].mxu0
    %v3076 = vadd.f32 0.0, %v3075
    %v3077 = vpop.f32.mrb[0].mxu0
    %3078 = vdwg.mxu0
    %v3080 = vsel %vm711, %v3071, 0
    %v3083 = vsel %vm711, %v3076, 0
    %3085 = vmatprep.subr.mxu0 0.0
    %3086 = vmatpush1.msra.mxu0 %v2196
    %3087 = vmatprep.subr.mxu0 0.0
    %3088 = vmatpush1.msra.mxu0 %v2197
    %3089 = vmatprep.subr.mxu0 0.0
    %3090 = vmatpush1.msra.mxu0 0.0
    %3091 = vmatprep.subr.mxu0 0.0
    %3092 = vmatpush1.msra.mxu0 0.0
    %3093 = vmatprep.subr.mxu0 0.0
    %3094 = vmatpush1.msra.mxu0 0.0
    %3095 = vmatprep.subr.mxu0 0.0
    %3096 = vmatpush1.msra.mxu0 0.0
    %3097 = vmatprep.subr.mxu0 0.0
    %3098 = vmatpush1.msra.mxu0 0.0
    %3099 = vmatprep.subr.mxu0 0.0
    %3100 = vmatpush1.msra.mxu0 0.0
    %3101 = vmatprep.subr.mxu0 0.0
    %3102 = vmatpush1.msra.mxu0 0.0
    %3103 = vmatprep.subr.mxu0 0.0
    %3104 = vmatpush1.msra.mxu0 0.0
    %3105 = vmatprep.subr.mxu0 0.0
    %3106 = vmatpush1.msra.mxu0 0.0
    %3107 = vmatprep.subr.mxu0 0.0
    %3108 = vmatpush1.msra.mxu0 0.0
    %3109 = vmatprep.subr.mxu0 0.0
    %3110 = vmatpush1.msra.mxu0 0.0
    %3111 = vmatprep.subr.mxu0 0.0
    %3112 = vmatpush1.msra.mxu0 0.0
    %3113 = vmatprep.subr.mxu0 0.0
    %3114 = vmatpush1.msra.mxu0 0.0
    %3115 = vmatprep.subr.mxu0 0.0
    %3116 = vmatpush1.msra.mxu0 0.0
    %3117 = vmatprep.subr.mxu0 0.0
    %3118 = vmatpush1.msra.mxu0 0.0
    %3119 = vmatprep.subr.mxu0 0.0
    %3120 = vmatpush1.msra.mxu0 0.0
    %3121 = vmatprep.subr.mxu0 0.0
    %3122 = vmatpush1.msra.mxu0 0.0
    %3123 = vmatprep.subr.mxu0 0.0
    %3124 = vmatpush1.msra.mxu0 0.0
    %3125 = vmatprep.subr.mxu0 0.0
    %3126 = vmatpush1.msra.mxu0 0.0
    %3127 = vmatprep.subr.mxu0 0.0
    %3128 = vmatpush1.msra.mxu0 0.0
    %3129 = vmatprep.subr.mxu0 0.0
    %3130 = vmatpush1.msra.mxu0 0.0
    %3131 = vmatprep.subr.mxu0 0.0
    %3132 = vmatpush1.msra.mxu0 0.0
    %3133 = vmatprep.subr.mxu0 0.0
    %3134 = vmatpush1.msra.mxu0 0.0
    %3135 = vmatprep.subr.mxu0 0.0
    %3136 = vmatpush1.msra.mxu0 0.0
    %3137 = vmatprep.subr.mxu0 0.0
    %3138 = vmatpush1.msra.mxu0 0.0
    %3139 = vmatprep.subr.mxu0 0.0
    %3140 = vmatpush1.msra.mxu0 0.0
    %3141 = vmatprep.subr.mxu0 0.0
    %3142 = vmatpush1.msra.mxu0 0.0
    %3143 = vmatprep.subr.mxu0 0.0
    %3144 = vmatpush1.msra.mxu0 0.0
    %3145 = vmatprep.subr.mxu0 0.0
    %3146 = vmatpush1.msra.mxu0 0.0
    %3147 = vmatprep.subr.mxu0 0.0
    %3148 = vmatpush1.msra.mxu0 0.0
    %3149 = vmatprep.mubr.f32.mxu0 0.0
    %3150 = vmatmul.mubr.f32.gmra.mrb[0].mxu0 %v3080
    %v3151 = vpop.f32.mrb[0].mxu0
    %v3152 = vadd.f32 0.0, %v3151
    %v3153 = vpop.f32.mrb[0].mxu0
    %3154 = vmatprep.mubr.f32.mxu0 0.0
    %3155 = vmatmul.mubr.f32.gmra.mrb[0].mxu0 %v3083
    %v3156 = vpop.f32.mrb[0].mxu0
    %v3157 = vadd.f32 0.0, %v3156
    %v3158 = vpop.f32.mrb[0].mxu0
    %3159 = vdwg.mxu0
    %v3161 = vsel %vm711, %v2634, 0
    %v3164 = vsel %vm711, %v2639, 0
    %3166 = vmatprep.subr.mxu0 0.0
    %3167 = vmatpush1.msra.mxu0 %v2194
    %3168 = vmatprep.subr.mxu0 0.0
    %3169 = vmatpush1.msra.mxu0 %v2195
    %3170 = vmatprep.subr.mxu0 0.0
    %3171 = vmatpush1.msra.mxu0 0.0
    %3172 = vmatprep.subr.mxu0 0.0
    %3173 = vmatpush1.msra.mxu0 0.0
    %3174 = vmatprep.subr.mxu0 0.0
    %3175 = vmatpush1.msra.mxu0 0.0
    %3176 = vmatprep.subr.mxu0 0.0
    %3177 = vmatpush1.msra.mxu0 0.0
    %3178 = vmatprep.subr.mxu0 0.0
    %3179 = vmatpush1.msra.mxu0 0.0
    %3180 = vmatprep.subr.mxu0 0.0
    %3181 = vmatpush1.msra.mxu0 0.0
    %3182 = vmatprep.subr.mxu0 0.0
    %3183 = vmatpush1.msra.mxu0 0.0
    %3184 = vmatprep.subr.mxu0 0.0
    %3185 = vmatpush1.msra.mxu0 0.0
    %3186 = vmatprep.subr.mxu0 0.0
    %3187 = vmatpush1.msra.mxu0 0.0
    %3188 = vmatprep.subr.mxu0 0.0
    %3189 = vmatpush1.msra.mxu0 0.0
    %3190 = vmatprep.subr.mxu0 0.0
    %3191 = vmatpush1.msra.mxu0 0.0
    %3192 = vmatprep.subr.mxu0 0.0
    %3193 = vmatpush1.msra.mxu0 0.0
    %3194 = vmatprep.subr.mxu0 0.0
    %3195 = vmatpush1.msra.mxu0 0.0
    %3196 = vmatprep.subr.mxu0 0.0
    %3197 = vmatpush1.msra.mxu0 0.0
    %3198 = vmatprep.subr.mxu0 0.0
    %3199 = vmatpush1.msra.mxu0 0.0
    %3200 = vmatprep.subr.mxu0 0.0
    %3201 = vmatpush1.msra.mxu0 0.0
    %3202 = vmatprep.subr.mxu0 0.0
    %3203 = vmatpush1.msra.mxu0 0.0
    %3204 = vmatprep.subr.mxu0 0.0
    %3205 = vmatpush1.msra.mxu0 0.0
    %3206 = vmatprep.subr.mxu0 0.0
    %3207 = vmatpush1.msra.mxu0 0.0
    %3208 = vmatprep.subr.mxu0 0.0
    %3209 = vmatpush1.msra.mxu0 0.0
    %3210 = vmatprep.subr.mxu0 0.0
    %3211 = vmatpush1.msra.mxu0 0.0
    %3212 = vmatprep.subr.mxu0 0.0
    %3213 = vmatpush1.msra.mxu0 0.0
    %3214 = vmatprep.subr.mxu0 0.0
    %3215 = vmatpush1.msra.mxu0 0.0
    %3216 = vmatprep.subr.mxu0 0.0
    %3217 = vmatpush1.msra.mxu0 0.0
    %3218 = vmatprep.subr.mxu0 0.0
    %3219 = vmatpush1.msra.mxu0 0.0
    %3220 = vmatprep.subr.mxu0 0.0
    %3221 = vmatpush1.msra.mxu0 0.0
    %3222 = vmatprep.subr.mxu0 0.0
    %3223 = vmatpush1.msra.mxu0 0.0
    %3224 = vmatprep.subr.mxu0 0.0
    %3225 = vmatpush1.msra.mxu0 0.0
    %3226 = vmatprep.subr.mxu0 0.0
    %3227 = vmatpush1.msra.mxu0 0.0
    %3228 = vmatprep.subr.mxu0 0.0
    %3229 = vmatpush1.msra.mxu0 0.0
    %3230 = vmatprep.mubr.f32.mxu0 0.0
    %3231 = vmatmul.mubr.f32.gmra.mrb[0].mxu0 %v3161
    %v3232 = vpop.f32.mrb[0].mxu0
    %v3233 = vadd.f32 %v3152, %v3232
    %v3234 = vpop.f32.mrb[0].mxu0
    %3235 = vmatprep.mubr.f32.mxu0 0.0
    %3236 = vmatmul.mubr.f32.gmra.mrb[0].mxu0 %v3164
    %v3237 = vpop.f32.mrb[0].mxu0
    %v3238 = vadd.f32 %v3157, %v3237
    %v3239 = vpop.f32.mrb[0].mxu0
    %3240 = vdwg.mxu0
    %v3242 = vlaneseq
    %v3243 = vshrl.u32 %v3242, 7
    %v3244 = vsub.s32 0, %v3243
    %v3245 = vrot.slane %v2198, %v3244
    %v3247 = vadd.f32 %v3233, %v3245
    %v3248 = vadd.f32 %v3238, %v3245
    %v3249 = vadd.f32 %v2154, %v3247
    %v3250 = vadd.f32 %v2155, %v3248
    %v3251 = vsel %vm431, %v3249, 0.0
    %3252 = vadd.xlane.f32.xlu0 %v3251
    %v3253 = vpop.xlane.xlu0 %3252
    %v3254 = vsel %vm431, %v3250, 0.0
    %3255 = vadd.xlane.f32.xlu0 %v3254
    %v3256 = vpop.xlane.xlu0 %3255
    %v3257 = vmul.f32 %v3253, %v1721
    %v3258 = vmul.f32 %v3256, %v1721
    %v3259 = vsub.f32 %v3249, %v3257
    %v3260 = vsub.f32 %v3250, %v3258
    %v3261 = vmul.f32 %v3259, %v3259
    %v3262 = vmul.f32 %v3260, %v3260
    %v3263 = vsel %vm431, %v3261, 0.0
    %3264 = vadd.xlane.f32.xlu0 %v3263
    %v3265 = vpop.xlane.xlu0 %3264
    %v3266 = vsel %vm431, %v3262, 0.0
    %3267 = vadd.xlane.f32.xlu0 %v3266
    %v3268 = vpop.xlane.xlu0 %3267
    %v3269 = vmul.f32 %v3265, %v1721
    %v3270 = vmul.f32 %v3268, %v1721
    %v3271 = vadd.f32 %v3269, 1e-05
    %v3272 = vadd.f32 %v3270, 1e-05
    %v3273 = vrsqrt.pop %v3271
    %v3274 = vrsqrt.pop %v3272
    %v3275 = vmul.f32 %v3259, %v3273
    %v3276 = vmul.f32 %v3260, %v3274
    %v3278 = vlaneseq
    %v3279 = vshrl.u32 %v3278, 7
    %v3280 = vsub.s32 0, %v3279
    %v3281 = vrot.slane %v2156, %v3280
    %v3283 = vmul.f32 %v3275, %v3281
    %v3284 = vmul.f32 %v3276, %v3281
    %v3286 = vlaneseq
    %v3287 = vshrl.u32 %v3286, 7
    %v3288 = vsub.s32 0, %v3287
    %v3289 = vrot.slane %v2160, %v3288
    %v3291 = vadd.f32 %v3283, %v3289
    %v3292 = vadd.f32 %v3284, %v3289
    %v3293 = vld [vmem:[%s41] sm:$0xff]
    %v3294 = vld [vmem:[%s41 + $0x8] sm:$0xff]
    %v3295 = vld [vmem:[%s41 + $0x10] sm:$0xff]
    %v3296 = vld [vmem:[%s41 + $0x18] sm:$0xff]
    %v3297 = vld [vmem:[%s41 + $0x20] sm:$0xff]
    %v3298 = vld [vmem:[%s41 + $0x28] sm:$0xff]
    %v3299 = vld [vmem:[%s41 + $0x30] sm:$0xff]
    %v3300 = vld [vmem:[%s41 + $0x38] sm:$0xff]
    %v3301 = vld [vmem:[%s41 + $0x40] sm:$0xff]
    %v3302 = vld [vmem:[%s41 + $0x48] sm:$0xff]
    %v3303 = vld [vmem:[%s41 + $0x50] sm:$0xff]
    %v3304 = vld [vmem:[%s41 + $0x58] sm:$0xff]
    %v3305 = vld [vmem:[%s41 + $0x60] sm:$0xff]
    %v3306 = vld [vmem:[%s41 + $0x68] sm:$0xff]
    %v3307 = vld [vmem:[%s41 + $0x70] sm:$0xff]
    %v3308 = vld [vmem:[%s41 + $0x78] sm:$0xff]
    %v3309 = vld [vmem:[%s41 + $0x80] sm:$0xff]
    %v3310 = vld [vmem:[%s41 + $0x88] sm:$0xff]
    %v3311 = vld [vmem:[%s41 + $0x90] sm:$0xff]
    %v3312 = vld [vmem:[%s41 + $0x98] sm:$0xff]
    %v3313 = vld [vmem:[%s41 + $0xa0] sm:$0xff]
    %v3314 = vld [vmem:[%s41 + $0xa8] sm:$0xff]
    %v3315 = vld [vmem:[%s41 + $0xb0] sm:$0xff]
    %v3316 = vld [vmem:[%s41 + $0xb8] sm:$0xff]
    %v3317 = vld [vmem:[%s43] sm:$0x1]
    %v3318 = vld [vmem:[%s43 + $0x1] sm:$0x1]
    %v3319 = vld [vmem:[%s43 + $0x2] sm:$0x1]
    %v3320 = vld [vmem:[%s43 + $0x3] sm:$0x1]
    %v3321 = vld [vmem:[%s43 + $0x4] sm:$0x1]
    %v3322 = vld [vmem:[%s43 + $0x5] sm:$0x1]
    %v3323 = vld [vmem:[%s45] sm:$0xff]
    %v3324 = vld [vmem:[%s45 + $0x8] sm:$0xff]
    %v3325 = vld [vmem:[%s45 + $0x10] sm:$0xff]
    %v3326 = vld [vmem:[%s45 + $0x18] sm:$0xff]
    %v3327 = vld [vmem:[%s47] sm:$0x1]
    %v3329 = vlaneseq
    %v3330 = vshrl.u32 %v3329, 7
    %v3331 = vsub.s32 0, %v3330
    %v3332 = vrot.slane %v3317, %v3331
    %v3335 = vsel %vm431, %v3291, 0
    %v3338 = vsel %vm431, %v3292, 0
    %3340 = vmatprep.subr.mxu0 0.0
    %3341 = vmatpush1.msra.mxu0 %v3293
    %3342 = vmatprep.subr.mxu0 0.0
    %3343 = vmatpush1.msra.mxu0 %v3294
    %3344 = vmatprep.subr.mxu0 0.0
    %3345 = vmatpush1.msra.mxu0 %v3295
    %3346 = vmatprep.subr.mxu0 0.0
    %3347 = vmatpush1.msra.mxu0 %v3296
    %3348 = vmatprep.subr.mxu0 0.0
    %3349 = vmatpush1.msra.mxu0 0.0
    %3350 = vmatprep.subr.mxu0 0.0
    %3351 = vmatpush1.msra.mxu0 0.0
    %3352 = vmatprep.subr.mxu0 0.0
    %3353 = vmatpush1.msra.mxu0 0.0
    %3354 = vmatprep.subr.mxu0 0.0
    %3355 = vmatpush1.msra.mxu0 0.0
    %3356 = vmatprep.subr.mxu0 0.0
    %3357 = vmatpush1.msra.mxu0 0.0
    %3358 = vmatprep.subr.mxu0 0.0
    %3359 = vmatpush1.msra.mxu0 0.0
    %3360 = vmatprep.subr.mxu0 0.0
    %3361 = vmatpush1.msra.mxu0 0.0
    %3362 = vmatprep.subr.mxu0 0.0
    %3363 = vmatpush1.msra.mxu0 0.0
    %3364 = vmatprep.subr.mxu0 0.0
    %3365 = vmatpush1.msra.mxu0 0.0
    %3366 = vmatprep.subr.mxu0 0.0
    %3367 = vmatpush1.msra.mxu0 0.0
    %3368 = vmatprep.subr.mxu0 0.0
    %3369 = vmatpush1.msra.mxu0 0.0
    %3370 = vmatprep.subr.mxu0 0.0
    %3371 = vmatpush1.msra.mxu0 0.0
    %3372 = vmatprep.subr.mxu0 0.0
    %3373 = vmatpush1.msra.mxu0 0.0
    %3374 = vmatprep.subr.mxu0 0.0
    %3375 = vmatpush1.msra.mxu0 0.0
    %3376 = vmatprep.subr.mxu0 0.0
    %3377 = vmatpush1.msra.mxu0 0.0
    %3378 = vmatprep.subr.mxu0 0.0
    %3379 = vmatpush1.msra.mxu0 0.0
    %3380 = vmatprep.subr.mxu0 0.0
    %3381 = vmatpush1.msra.mxu0 0.0
    %3382 = vmatprep.subr.mxu0 0.0
    %3383 = vmatpush1.msra.mxu0 0.0
    %3384 = vmatprep.subr.mxu0 0.0
    %3385 = vmatpush1.msra.mxu0 0.0
    %3386 = vmatprep.subr.mxu0 0.0
    %3387 = vmatpush1.msra.mxu0 0.0
    %3388 = vmatprep.subr.mxu0 0.0
    %3389 = vmatpush1.msra.mxu0 0.0
    %3390 = vmatprep.subr.mxu0 0.0
    %3391 = vmatpush1.msra.mxu0 0.0
    %3392 = vmatprep.subr.mxu0 0.0
    %3393 = vmatpush1.msra.mxu0 0.0
    %3394 = vmatprep.subr.mxu0 0.0
    %3395 = vmatpush1.msra.mxu0 0.0
    %3396 = vmatprep.subr.mxu0 0.0
    %3397 = vmatpush1.msra.mxu0 0.0
    %3398 = vmatprep.subr.mxu0 0.0
    %3399 = vmatpush1.msra.mxu0 0.0
    %3400 = vmatprep.subr.mxu0 0.0
    %3401 = vmatpush1.msra.mxu0 0.0
    %3402 = vmatprep.subr.mxu0 0.0
    %3403 = vmatpush1.msra.mxu0 0.0
    %3404 = vmatprep.mubr.f32.mxu0 0.0
    %3405 = vmatmul.mubr.f32.gmra.mrb[0].mxu0 %v3335
    %v3406 = vpop.f32.mrb[0].mxu0
    %v3407 = vadd.f32 %v3332, %v3406
    %v3408 = vpop.f32.mrb[0].mxu0
    %3409 = vmatprep.mubr.f32.mxu0 0.0
    %3410 = vmatmul.mubr.f32.gmra.mrb[0].mxu0 %v3338
    %v3411 = vpop.f32.mrb[0].mxu0
    %v3412 = vadd.f32 %v3332, %v3411
    %v3413 = vpop.f32.mrb[0].mxu0
    %3414 = vdwg.mxu0
    %v3416 = vlaneseq
    %v3417 = vshrl.u32 %v3416, 7
    %v3418 = vsub.s32 0, %v3417
    %v3419 = vrot.slane %v3319, %v3418
    %v3422 = vsel %vm431, %v2150, 0
    %v3425 = vsel %vm431, %v2151, 0
    %v3428 = vsel %vm431, %v2152, 0
    %v3431 = vsel %vm431, %v2153, 0
    %3433 = vmatprep.subr.mxu0 0.0
    %3434 = vmatpush1.msra.mxu0 %v3301
    %3435 = vmatprep.subr.mxu0 0.0
    %3436 = vmatpush1.msra.mxu0 %v3302
    %3437 = vmatprep.subr.mxu0 0.0
    %3438 = vmatpush1.msra.mxu0 %v3303
    %3439 = vmatprep.subr.mxu0 0.0
    %3440 = vmatpush1.msra.mxu0 %v3304
    %3441 = vmatprep.subr.mxu0 0.0
    %3442 = vmatpush1.msra.mxu0 0.0
    %3443 = vmatprep.subr.mxu0 0.0
    %3444 = vmatpush1.msra.mxu0 0.0
    %3445 = vmatprep.subr.mxu0 0.0
    %3446 = vmatpush1.msra.mxu0 0.0
    %3447 = vmatprep.subr.mxu0 0.0
    %3448 = vmatpush1.msra.mxu0 0.0
    %3449 = vmatprep.subr.mxu0 0.0
    %3450 = vmatpush1.msra.mxu0 0.0
    %3451 = vmatprep.subr.mxu0 0.0
    %3452 = vmatpush1.msra.mxu0 0.0
    %3453 = vmatprep.subr.mxu0 0.0
    %3454 = vmatpush1.msra.mxu0 0.0
    %3455 = vmatprep.subr.mxu0 0.0
    %3456 = vmatpush1.msra.mxu0 0.0
    %3457 = vmatprep.subr.mxu0 0.0
    %3458 = vmatpush1.msra.mxu0 0.0
    %3459 = vmatprep.subr.mxu0 0.0
    %3460 = vmatpush1.msra.mxu0 0.0
    %3461 = vmatprep.subr.mxu0 0.0
    %3462 = vmatpush1.msra.mxu0 0.0
    %3463 = vmatprep.subr.mxu0 0.0
    %3464 = vmatpush1.msra.mxu0 0.0
    %3465 = vmatprep.subr.mxu0 0.0
    %3466 = vmatpush1.msra.mxu0 0.0
    %3467 = vmatprep.subr.mxu0 0.0
    %3468 = vmatpush1.msra.mxu0 0.0
    %3469 = vmatprep.subr.mxu0 0.0
    %3470 = vmatpush1.msra.mxu0 0.0
    %3471 = vmatprep.subr.mxu0 0.0
    %3472 = vmatpush1.msra.mxu0 0.0
    %3473 = vmatprep.subr.mxu0 0.0
    %3474 = vmatpush1.msra.mxu0 0.0
    %3475 = vmatprep.subr.mxu0 0.0
    %3476 = vmatpush1.msra.mxu0 0.0
    %3477 = vmatprep.subr.mxu0 0.0
    %3478 = vmatpush1.msra.mxu0 0.0
    %3479 = vmatprep.subr.mxu0 0.0
    %3480 = vmatpush1.msra.mxu0 0.0
    %3481 = vmatprep.subr.mxu0 0.0
    %3482 = vmatpush1.msra.mxu0 0.0
    %3483 = vmatprep.subr.mxu0 0.0
    %3484 = vmatpush1.msra.mxu0 0.0
    %3485 = vmatprep.subr.mxu0 0.0
    %3486 = vmatpush1.msra.mxu0 0.0
    %3487 = vmatprep.subr.mxu0 0.0
    %3488 = vmatpush1.msra.mxu0 0.0
    %3489 = vmatprep.subr.mxu0 0.0
    %3490 = vmatpush1.msra.mxu0 0.0
    %3491 = vmatprep.subr.mxu0 0.0
    %3492 = vmatpush1.msra.mxu0 0.0
    %3493 = vmatprep.subr.mxu0 0.0
    %3494 = vmatpush1.msra.mxu0 0.0
    %3495 = vmatprep.subr.mxu0 0.0
    %3496 = vmatpush1.msra.mxu0 0.0
    %3497 = vmatprep.mubr.f32.mxu0 0.0
    %3498 = vmatmul.mubr.f32.gmra.mrb[0].mxu0 %v3422
    %v3499 = vpop.f32.mrb[0].mxu0
    %v3500 = vadd.f32 %v3419, %v3499
    %v3501 = vpop.f32.mrb[0].mxu0
    %3502 = vmatprep.mubr.f32.mxu0 0.0
    %3503 = vmatmul.mubr.f32.gmra.mrb[0].mxu0 %v3425
    %v3504 = vpop.f32.mrb[0].mxu0
    %v3505 = vadd.f32 %v3419, %v3504
    %v3506 = vpop.f32.mrb[0].mxu0
    %3507 = vmatprep.mubr.f32.mxu0 0.0
    %3508 = vmatmul.mubr.f32.gmra.mrb[0].mxu0 %v3428
    %v3509 = vpop.f32.mrb[0].mxu0
    %v3510 = vadd.f32 %v3419, %v3509
    %v3511 = vpop.f32.mrb[0].mxu0
    %3512 = vmatprep.mubr.f32.mxu0 0.0
    %3513 = vmatmul.mubr.f32.gmra.mrb[0].mxu0 %v3431
    %v3514 = vpop.f32.mrb[0].mxu0
    %v3515 = vadd.f32 %v3419, %v3514
    %v3516 = vpop.f32.mrb[0].mxu0
    %3517 = vdwg.mxu0
    %v3519 = vlaneseq
    %v3520 = vshrl.u32 %v3519, 7
    %v3521 = vsub.s32 0, %v3520
    %v3522 = vrot.slane %v3321, %v3521
    %3524 = vmatprep.subr.mxu0 0.0
    %3525 = vmatpush1.msra.mxu0 %v3309
    %3526 = vmatprep.subr.mxu0 0.0
    %3527 = vmatpush1.msra.mxu0 %v3310
    %3528 = vmatprep.subr.mxu0 0.0
    %3529 = vmatpush1.msra.mxu0 %v3311
    %3530 = vmatprep.subr.mxu0 0.0
    %3531 = vmatpush1.msra.mxu0 %v3312
    %3532 = vmatprep.subr.mxu0 0.0
    %3533 = vmatpush1.msra.mxu0 0.0
    %3534 = vmatprep.subr.mxu0 0.0
    %3535 = vmatpush1.msra.mxu0 0.0
    %3536 = vmatprep.subr.mxu0 0.0
    %3537 = vmatpush1.msra.mxu0 0.0
    %3538 = vmatprep.subr.mxu0 0.0
    %3539 = vmatpush1.msra.mxu0 0.0
    %3540 = vmatprep.subr.mxu0 0.0
    %3541 = vmatpush1.msra.mxu0 0.0
    %3542 = vmatprep.subr.mxu0 0.0
    %3543 = vmatpush1.msra.mxu0 0.0
    %3544 = vmatprep.subr.mxu0 0.0
    %3545 = vmatpush1.msra.mxu0 0.0
    %3546 = vmatprep.subr.mxu0 0.0
    %3547 = vmatpush1.msra.mxu0 0.0
    %3548 = vmatprep.subr.mxu0 0.0
    %3549 = vmatpush1.msra.mxu0 0.0
    %3550 = vmatprep.subr.mxu0 0.0
    %3551 = vmatpush1.msra.mxu0 0.0
    %3552 = vmatprep.subr.mxu0 0.0
    %3553 = vmatpush1.msra.mxu0 0.0
    %3554 = vmatprep.subr.mxu0 0.0
    %3555 = vmatpush1.msra.mxu0 0.0
    %3556 = vmatprep.subr.mxu0 0.0
    %3557 = vmatpush1.msra.mxu0 0.0
    %3558 = vmatprep.subr.mxu0 0.0
    %3559 = vmatpush1.msra.mxu0 0.0
    %3560 = vmatprep.subr.mxu0 0.0
    %3561 = vmatpush1.msra.mxu0 0.0
    %3562 = vmatprep.subr.mxu0 0.0
    %3563 = vmatpush1.msra.mxu0 0.0
    %3564 = vmatprep.subr.mxu0 0.0
    %3565 = vmatpush1.msra.mxu0 0.0
    %3566 = vmatprep.subr.mxu0 0.0
    %3567 = vmatpush1.msra.mxu0 0.0
    %3568 = vmatprep.subr.mxu0 0.0
    %3569 = vmatpush1.msra.mxu0 0.0
    %3570 = vmatprep.subr.mxu0 0.0
    %3571 = vmatpush1.msra.mxu0 0.0
    %3572 = vmatprep.subr.mxu0 0.0
    %3573 = vmatpush1.msra.mxu0 0.0
    %3574 = vmatprep.subr.mxu0 0.0
    %3575 = vmatpush1.msra.mxu0 0.0
    %3576 = vmatprep.subr.mxu0 0.0
    %3577 = vmatpush1.msra.mxu0 0.0
    %3578 = vmatprep.subr.mxu0 0.0
    %3579 = vmatpush1.msra.mxu0 0.0
    %3580 = vmatprep.subr.mxu0 0.0
    %3581 = vmatpush1.msra.mxu0 0.0
    %3582 = vmatprep.subr.mxu0 0.0
    %3583 = vmatpush1.msra.mxu0 0.0
    %3584 = vmatprep.subr.mxu0 0.0
    %3585 = vmatpush1.msra.mxu0 0.0
    %3586 = vmatprep.subr.mxu0 0.0
    %3587 = vmatpush1.msra.mxu0 0.0
    %3588 = vmatprep.mubr.f32.mxu0 0.0
    %3589 = vmatmul.mubr.f32.gmra.mrb[0].mxu0 %v3422
    %v3590 = vpop.f32.mrb[0].mxu0
    %v3591 = vadd.f32 %v3522, %v3590
    %v3592 = vpop.f32.mrb[0].mxu0
    %3593 = vmatprep.mubr.f32.mxu0 0.0
    %3594 = vmatmul.mubr.f32.gmra.mrb[0].mxu0 %v3425
    %v3595 = vpop.f32.mrb[0].mxu0
    %v3596 = vadd.f32 %v3522, %v3595
    %v3597 = vpop.f32.mrb[0].mxu0
    %3598 = vmatprep.mubr.f32.mxu0 0.0
    %3599 = vmatmul.mubr.f32.gmra.mrb[0].mxu0 %v3428
    %v3600 = vpop.f32.mrb[0].mxu0
    %v3601 = vadd.f32 %v3522, %v3600
    %v3602 = vpop.f32.mrb[0].mxu0
    %3603 = vmatprep.mubr.f32.mxu0 0.0
    %3604 = vmatmul.mubr.f32.gmra.mrb[0].mxu0 %v3431
    %v3605 = vpop.f32.mrb[0].mxu0
    %v3606 = vadd.f32 %v3522, %v3605
    %v3607 = vpop.f32.mrb[0].mxu0
    %3608 = vdwg.mxu0
    %v3610 = vsel %vm711, %v3407, 0
    %v3613 = vsel %vm711, %v3412, 0
    %v3616 = vsel %vm711, %v3500, 0
    %v3619 = vsel %vm711, %v3505, 0
    %v3622 = vsel %vm711, %v3510, 0
    %v3625 = vsel %vm711, %v3515, 0
    %3627 = vmatprep.subr.mxu0 0.0
    %3628 = vmatpush1.xpose.msra.mxu0 %v3616
    %3629 = vmatprep.subr.mxu0 0.0
    %3630 = vmatpush1.xpose.msra.mxu0 %v3619
    %3631 = vmatprep.subr.mxu0 0.0
    %3632 = vmatpush1.xpose.msra.mxu0 %v3622
    %3633 = vmatprep.subr.mxu0 0.0
    %3634 = vmatpush1.xpose.msra.mxu0 %v3625
    %3635 = vmatprep.subr.mxu0 0.0
    %3636 = vmatpush1.xpose.msra.mxu0 0.0
    %3637 = vmatprep.subr.mxu0 0.0
    %3638 = vmatpush1.xpose.msra.mxu0 0.0
    %3639 = vmatprep.subr.mxu0 0.0
    %3640 = vmatpush1.xpose.msra.mxu0 0.0
    %3641 = vmatprep.subr.mxu0 0.0
    %3642 = vmatpush1.xpose.msra.mxu0 0.0
    %3643 = vmatprep.subr.mxu0 0.0
    %3644 = vmatpush1.xpose.msra.mxu0 0.0
    %3645 = vmatprep.subr.mxu0 0.0
    %3646 = vmatpush1.xpose.msra.mxu0 0.0
    %3647 = vmatprep.subr.mxu0 0.0
    %3648 = vmatpush1.xpose.msra.mxu0 0.0
    %3649 = vmatprep.subr.mxu0 0.0
    %3650 = vmatpush1.xpose.msra.mxu0 0.0
    %3651 = vmatprep.subr.mxu0 0.0
    %3652 = vmatpush1.xpose.msra.mxu0 0.0
    %3653 = vmatprep.subr.mxu0 0.0
    %3654 = vmatpush1.xpose.msra.mxu0 0.0
    %3655 = vmatprep.subr.mxu0 0.0
    %3656 = vmatpush1.xpose.msra.mxu0 0.0
    %3657 = vmatprep.subr.mxu0 0.0
    %3658 = vmatpush1.xpose.msra.mxu0 0.0
    %3659 = vmatprep.subr.mxu0 0.0
    %3660 = vmatpush1.xpose.msra.mxu0 0.0
    %3661 = vmatprep.subr.mxu0 0.0
    %3662 = vmatpush1.xpose.msra.mxu0 0.0
    %3663 = vmatprep.subr.mxu0 0.0
    %3664 = vmatpush1.xpose.msra.mxu0 0.0
    %3665 = vmatprep.subr.mxu0 0.0
    %3666 = vmatpush1.xpose.msra.mxu0 0.0
    %3667 = vmatprep.subr.mxu0 0.0
    %3668 = vmatpush1.xpose.msra.mxu0 0.0
    %3669 = vmatprep.subr.mxu0 0.0
    %3670 = vmatpush1.xpose.msra.mxu0 0.0
    %3671 = vmatprep.subr.mxu0 0.0
    %3672 = vmatpush1.xpose.msra.mxu0 0.0
    %3673 = vmatprep.subr.mxu0 0.0
    %3674 = vmatpush1.xpose.msra.mxu0 0.0
    %3675 = vmatprep.subr.mxu0 0.0
    %3676 = vmatpush1.xpose.msra.mxu0 0.0
    %3677 = vmatprep.subr.mxu0 0.0
    %3678 = vmatpush1.xpose.msra.mxu0 0.0
    %3679 = vmatprep.subr.mxu0 0.0
    %3680 = vmatpush1.xpose.msra.mxu0 0.0
    %3681 = vmatprep.subr.mxu0 0.0
    %3682 = vmatpush1.xpose.msra.mxu0 0.0
    %3683 = vmatprep.subr.mxu0 0.0
    %3684 = vmatpush1.xpose.msra.mxu0 0.0
    %3685 = vmatprep.subr.mxu0 0.0
    %3686 = vmatpush1.xpose.msra.mxu0 0.0
    %3687 = vmatprep.subr.mxu0 0.0
    %3688 = vmatpush1.xpose.msra.mxu0 0.0
    %3689 = vmatprep.subr.mxu0 0.0
    %3690 = vmatpush1.xpose.msra.mxu0 0.0
    %3691 = vmatprep.mubr.f32.mxu0 0.0
    %3692 = vmatmul.mubr.f32.gmra.mrb[0].mxu0 %v3610
    %v3693 = vpop.f32.mrb[0].mxu0
    %v3694 = vadd.f32 0.0, %v3693
    %v3695 = vpop.f32.mrb[0].mxu0
    %3696 = vmatprep.mubr.f32.mxu0 0.0
    %3697 = vmatmul.mubr.f32.gmra.mrb[0].mxu0 %v3613
    %v3698 = vpop.f32.mrb[0].mxu0
    %v3699 = vadd.f32 0.0, %v3698
    %v3700 = vpop.f32.mrb[0].mxu0
    %3701 = vdwg.mxu0
    %v3702 = vmul.f32 %v3694, 0.25
    %v3703 = vmul.f32 %v3699, 0.25
    %v3704 = vadd.f32 %v3702, %v257
    %v3705 = vadd.f32 %v3703, %v258
    %v3706 = vsel %vm431, %v3704, -inf
    %3707 = vmax.xlane.f32.xlu0 %v3706
    %v3708 = vpop.xlane.xlu0 %3707
    %v3709 = vsel %vm431, %v3705, -inf
    %3710 = vmax.xlane.f32.xlu0 %v3709
    %v3711 = vpop.xlane.xlu0 %3710
    %v3712 = vsub.f32 %v3704, %v3708
    %v3713 = vsub.f32 %v3705, %v3711
    %v3714 = vmul.f32 %v3712, 1.442695
    %v3715 = vpow.pop %v3714
    %v3716 = vmul.f32 %v3713, 1.442695
    %v3717 = vpow.pop %v3716
    %v3718 = vsel %vm431, %v3715, 0.0
    %3719 = vadd.xlane.f32.xlu0 %v3718
    %v3720 = vpop.xlane.xlu0 %3719
    %v3721 = vsel %vm431, %v3717, 0.0
    %3722 = vadd.xlane.f32.xlu0 %v3721
    %v3723 = vpop.xlane.xlu0 %3722
    %v3724 = vrcp.pop %v3720
    %v3725 = vrcp.pop %v3723
    %v3726 = vmul.f32 %v3715, %v3724
    %v3727 = vmul.f32 %v3717, %v3725
    %v3729 = vsel %vm431, %v3726, 0
    %v3732 = vsel %vm431, %v3727, 0
    %3734 = vmatprep.subr.mxu0 0.0
    %3735 = vmatpush1.msra.mxu0 %v3591
    %3736 = vmatprep.subr.mxu0 0.0
    %3737 = vmatpush1.msra.mxu0 %v3596
    %3738 = vmatprep.subr.mxu0 0.0
    %3739 = vmatpush1.msra.mxu0 %v3601
    %3740 = vmatprep.subr.mxu0 0.0
    %3741 = vmatpush1.msra.mxu0 %v3606
    %3742 = vmatprep.subr.mxu0 0.0
    %3743 = vmatpush1.msra.mxu0 0.0
    %3744 = vmatprep.subr.mxu0 0.0
    %3745 = vmatpush1.msra.mxu0 0.0
    %3746 = vmatprep.subr.mxu0 0.0
    %3747 = vmatpush1.msra.mxu0 0.0
    %3748 = vmatprep.subr.mxu0 0.0
    %3749 = vmatpush1.msra.mxu0 0.0
    %3750 = vmatprep.subr.mxu0 0.0
    %3751 = vmatpush1.msra.mxu0 0.0
    %3752 = vmatprep.subr.mxu0 0.0
    %3753 = vmatpush1.msra.mxu0 0.0
    %3754 = vmatprep.subr.mxu0 0.0
    %3755 = vmatpush1.msra.mxu0 0.0
    %3756 = vmatprep.subr.mxu0 0.0
    %3757 = vmatpush1.msra.mxu0 0.0
    %3758 = vmatprep.subr.mxu0 0.0
    %3759 = vmatpush1.msra.mxu0 0.0
    %3760 = vmatprep.subr.mxu0 0.0
    %3761 = vmatpush1.msra.mxu0 0.0
    %3762 = vmatprep.subr.mxu0 0.0
    %3763 = vmatpush1.msra.mxu0 0.0
    %3764 = vmatprep.subr.mxu0 0.0
    %3765 = vmatpush1.msra.mxu0 0.0
    %3766 = vmatprep.subr.mxu0 0.0
    %3767 = vmatpush1.msra.mxu0 0.0
    %3768 = vmatprep.subr.mxu0 0.0
    %3769 = vmatpush1.msra.mxu0 0.0
    %3770 = vmatprep.subr.mxu0 0.0
    %3771 = vmatpush1.msra.mxu0 0.0
    %3772 = vmatprep.subr.mxu0 0.0
    %3773 = vmatpush1.msra.mxu0 0.0
    %3774 = vmatprep.subr.mxu0 0.0
    %3775 = vmatpush1.msra.mxu0 0.0
    %3776 = vmatprep.subr.mxu0 0.0
    %3777 = vmatpush1.msra.mxu0 0.0
    %3778 = vmatprep.subr.mxu0 0.0
    %3779 = vmatpush1.msra.mxu0 0.0
    %3780 = vmatprep.subr.mxu0 0.0
    %3781 = vmatpush1.msra.mxu0 0.0
    %3782 = vmatprep.subr.mxu0 0.0
    %3783 = vmatpush1.msra.mxu0 0.0
    %3784 = vmatprep.subr.mxu0 0.0
    %3785 = vmatpush1.msra.mxu0 0.0
    %3786 = vmatprep.subr.mxu0 0.0
    %3787 = vmatpush1.msra.mxu0 0.0
    %3788 = vmatprep.subr.mxu0 0.0
    %3789 = vmatpush1.msra.mxu0 0.0
    %3790 = vmatprep.subr.mxu0 0.0
    %3791 = vmatpush1.msra.mxu0 0.0
    %3792 = vmatprep.subr.mxu0 0.0
    %3793 = vmatpush1.msra.mxu0 0.0
    %3794 = vmatprep.subr.mxu0 0.0
    %3795 = vmatpush1.msra.mxu0 0.0
    %3796 = vmatprep.subr.mxu0 0.0
    %3797 = vmatpush1.msra.mxu0 0.0
    %3798 = vmatprep.mubr.f32.mxu0 0.0
    %3799 = vmatmul.mubr.f32.gmra.mrb[0].mxu0 %v3729
    %v3800 = vpop.f32.mrb[0].mxu0
    %v3801 = vadd.f32 0.0, %v3800
    %v3802 = vpop.f32.mrb[0].mxu0
    %3803 = vmatprep.mubr.f32.mxu0 0.0
    %3804 = vmatmul.mubr.f32.gmra.mrb[0].mxu0 %v3732
    %v3805 = vpop.f32.mrb[0].mxu0
    %v3806 = vadd.f32 0.0, %v3805
    %v3807 = vpop.f32.mrb[0].mxu0
    %3808 = vdwg.mxu0
    %v3810 = vlaneseq
    %v3811 = vshrl.u32 %v3810, 7
    %v3812 = vsub.s32 0, %v3811
    %v3813 = vrot.slane %v3318, %v3812
    %3815 = vmatprep.subr.mxu0 0.0
    %3816 = vmatpush1.msra.mxu0 %v3297
    %3817 = vmatprep.subr.mxu0 0.0
    %3818 = vmatpush1.msra.mxu0 %v3298
    %3819 = vmatprep.subr.mxu0 0.0
    %3820 = vmatpush1.msra.mxu0 %v3299
    %3821 = vmatprep.subr.mxu0 0.0
    %3822 = vmatpush1.msra.mxu0 %v3300
    %3823 = vmatprep.subr.mxu0 0.0
    %3824 = vmatpush1.msra.mxu0 0.0
    %3825 = vmatprep.subr.mxu0 0.0
    %3826 = vmatpush1.msra.mxu0 0.0
    %3827 = vmatprep.subr.mxu0 0.0
    %3828 = vmatpush1.msra.mxu0 0.0
    %3829 = vmatprep.subr.mxu0 0.0
    %3830 = vmatpush1.msra.mxu0 0.0
    %3831 = vmatprep.subr.mxu0 0.0
    %3832 = vmatpush1.msra.mxu0 0.0
    %3833 = vmatprep.subr.mxu0 0.0
    %3834 = vmatpush1.msra.mxu0 0.0
    %3835 = vmatprep.subr.mxu0 0.0
    %3836 = vmatpush1.msra.mxu0 0.0
    %3837 = vmatprep.subr.mxu0 0.0
    %3838 = vmatpush1.msra.mxu0 0.0
    %3839 = vmatprep.subr.mxu0 0.0
    %3840 = vmatpush1.msra.mxu0 0.0
    %3841 = vmatprep.subr.mxu0 0.0
    %3842 = vmatpush1.msra.mxu0 0.0
    %3843 = vmatprep.subr.mxu0 0.0
    %3844 = vmatpush1.msra.mxu0 0.0
    %3845 = vmatprep.subr.mxu0 0.0
    %3846 = vmatpush1.msra.mxu0 0.0
    %3847 = vmatprep.subr.mxu0 0.0
    %3848 = vmatpush1.msra.mxu0 0.0
    %3849 = vmatprep.subr.mxu0 0.0
    %3850 = vmatpush1.msra.mxu0 0.0
    %3851 = vmatprep.subr.mxu0 0.0
    %3852 = vmatpush1.msra.mxu0 0.0
    %3853 = vmatprep.subr.mxu0 0.0
    %3854 = vmatpush1.msra.mxu0 0.0
    %3855 = vmatprep.subr.mxu0 0.0
    %3856 = vmatpush1.msra.mxu0 0.0
    %3857 = vmatprep.subr.mxu0 0.0
    %3858 = vmatpush1.msra.mxu0 0.0
    %3859 = vmatprep.subr.mxu0 0.0
    %3860 = vmatpush1.msra.mxu0 0.0
    %3861 = vmatprep.subr.mxu0 0.0
    %3862 = vmatpush1.msra.mxu0 0.0
    %3863 = vmatprep.subr.mxu0 0.0
    %3864 = vmatpush1.msra.mxu0 0.0
    %3865 = vmatprep.subr.mxu0 0.0
    %3866 = vmatpush1.msra.mxu0 0.0
    %3867 = vmatprep.subr.mxu0 0.0
    %3868 = vmatpush1.msra.mxu0 0.0
    %3869 = vmatprep.subr.mxu0 0.0
    %3870 = vmatpush1.msra.mxu0 0.0
    %3871 = vmatprep.subr.mxu0 0.0
    %3872 = vmatpush1.msra.mxu0 0.0
    %3873 = vmatprep.subr.mxu0 0.0
    %3874 = vmatpush1.msra.mxu0 0.0
    %3875 = vmatprep.subr.mxu0 0.0
    %3876 = vmatpush1.msra.mxu0 0.0
    %3877 = vmatprep.subr.mxu0 0.0
    %3878 = vmatpush1.msra.mxu0 0.0
    %3879 = vmatprep.mubr.f32.mxu0 0.0
    %3880 = vmatmul.mubr.f32.gmra.mrb[0].mxu0 %v3335
    %v3881 = vpop.f32.mrb[0].mxu0
    %v3882 = vadd.f32 %v3813, %v3881
    %v3883 = vpop.f32.mrb[0].mxu0
    %3884 = vmatprep.mubr.f32.mxu0 0.0
    %3885 = vmatmul.mubr.f32.gmra.mrb[0].mxu0 %v3338
    %v3886 = vpop.f32.mrb[0].mxu0
    %v3887 = vadd.f32 %v3813, %v3886
    %v3888 = vpop.f32.mrb[0].mxu0
    %3889 = vdwg.mxu0
    %v3891 = vlaneseq
    %v3892 = vshrl.u32 %v3891, 7
    %v3893 = vsub.s32 0, %v3892
    %v3894 = vrot.slane %v3320, %v3893
    %3896 = vmatprep.subr.mxu0 0.0
    %3897 = vmatpush1.msra.mxu0 %v3305
    %3898 = vmatprep.subr.mxu0 0.0
    %3899 = vmatpush1.msra.mxu0 %v3306
    %3900 = vmatprep.subr.mxu0 0.0
    %3901 = vmatpush1.msra.mxu0 %v3307
    %3902 = vmatprep.subr.mxu0 0.0
    %3903 = vmatpush1.msra.mxu0 %v3308
    %3904 = vmatprep.subr.mxu0 0.0
    %3905 = vmatpush1.msra.mxu0 0.0
    %3906 = vmatprep.subr.mxu0 0.0
    %3907 = vmatpush1.msra.mxu0 0.0
    %3908 = vmatprep.subr.mxu0 0.0
    %3909 = vmatpush1.msra.mxu0 0.0
    %3910 = vmatprep.subr.mxu0 0.0
    %3911 = vmatpush1.msra.mxu0 0.0
    %3912 = vmatprep.subr.mxu0 0.0
    %3913 = vmatpush1.msra.mxu0 0.0
    %3914 = vmatprep.subr.mxu0 0.0
    %3915 = vmatpush1.msra.mxu0 0.0
    %3916 = vmatprep.subr.mxu0 0.0
    %3917 = vmatpush1.msra.mxu0 0.0
    %3918 = vmatprep.subr.mxu0 0.0
    %3919 = vmatpush1.msra.mxu0 0.0
    %3920 = vmatprep.subr.mxu0 0.0
    %3921 = vmatpush1.msra.mxu0 0.0
    %3922 = vmatprep.subr.mxu0 0.0
    %3923 = vmatpush1.msra.mxu0 0.0
    %3924 = vmatprep.subr.mxu0 0.0
    %3925 = vmatpush1.msra.mxu0 0.0
    %3926 = vmatprep.subr.mxu0 0.0
    %3927 = vmatpush1.msra.mxu0 0.0
    %3928 = vmatprep.subr.mxu0 0.0
    %3929 = vmatpush1.msra.mxu0 0.0
    %3930 = vmatprep.subr.mxu0 0.0
    %3931 = vmatpush1.msra.mxu0 0.0
    %3932 = vmatprep.subr.mxu0 0.0
    %3933 = vmatpush1.msra.mxu0 0.0
    %3934 = vmatprep.subr.mxu0 0.0
    %3935 = vmatpush1.msra.mxu0 0.0
    %3936 = vmatprep.subr.mxu0 0.0
    %3937 = vmatpush1.msra.mxu0 0.0
    %3938 = vmatprep.subr.mxu0 0.0
    %3939 = vmatpush1.msra.mxu0 0.0
    %3940 = vmatprep.subr.mxu0 0.0
    %3941 = vmatpush1.msra.mxu0 0.0
    %3942 = vmatprep.subr.mxu0 0.0
    %3943 = vmatpush1.msra.mxu0 0.0
    %3944 = vmatprep.subr.mxu0 0.0
    %3945 = vmatpush1.msra.mxu0 0.0
    %3946 = vmatprep.subr.mxu0 0.0
    %3947 = vmatpush1.msra.mxu0 0.0
    %3948 = vmatprep.subr.mxu0 0.0
    %3949 = vmatpush1.msra.mxu0 0.0
    %3950 = vmatprep.subr.mxu0 0.0
    %3951 = vmatpush1.msra.mxu0 0.0
    %3952 = vmatprep.subr.mxu0 0.0
    %3953 = vmatpush1.msra.mxu0 0.0
    %3954 = vmatprep.subr.mxu0 0.0
    %3955 = vmatpush1.msra.mxu0 0.0
    %3956 = vmatprep.subr.mxu0 0.0
    %3957 = vmatpush1.msra.mxu0 0.0
    %3958 = vmatprep.subr.mxu0 0.0
    %3959 = vmatpush1.msra.mxu0 0.0
    %3960 = vmatprep.mubr.f32.mxu0 0.0
    %3961 = vmatmul.mubr.f32.gmra.mrb[0].mxu0 %v3422
    %v3962 = vpop.f32.mrb[0].mxu0
    %v3963 = vadd.f32 %v3894, %v3962
    %v3964 = vpop.f32.mrb[0].mxu0
    %3965 = vmatprep.mubr.f32.mxu0 0.0
    %3966 = vmatmul.mubr.f32.gmra.mrb[0].mxu0 %v3425
    %v3967 = vpop.f32.mrb[0].mxu0
    %v3968 = vadd.f32 %v3894, %v3967
    %v3969 = vpop.f32.mrb[0].mxu0
    %3970 = vmatprep.mubr.f32.mxu0 0.0
    %3971 = vmatmul.mubr.f32.gmra.mrb[0].mxu0 %v3428
    %v3972 = vpop.f32.mrb[0].mxu0
    %v3973 = vadd.f32 %v3894, %v3972
    %v3974 = vpop.f32.mrb[0].mxu0
    %3975 = vmatprep.mubr.f32.mxu0 0.0
    %3976 = vmatmul.mubr.f32.gmra.mrb[0].mxu0 %v3431
    %v3977 = vpop.f32.mrb[0].mxu0
    %v3978 = vadd.f32 %v3894, %v3977
    %v3979 = vpop.f32.mrb[0].mxu0
    %3980 = vdwg.mxu0
    %v3982 = vlaneseq
    %v3983 = vshrl.u32 %v3982, 7
    %v3984 = vsub.s32 0, %v3983
    %v3985 = vrot.slane %v3322, %v3984
    %3987 = vmatprep.subr.mxu0 0.0
    %3988 = vmatpush1.msra.mxu0 %v3313
    %3989 = vmatprep.subr.mxu0 0.0
    %3990 = vmatpush1.msra.mxu0 %v3314
    %3991 = vmatprep.subr.mxu0 0.0
    %3992 = vmatpush1.msra.mxu0 %v3315
    %3993 = vmatprep.subr.mxu0 0.0
    %3994 = vmatpush1.msra.mxu0 %v3316
    %3995 = vmatprep.subr.mxu0 0.0
    %3996 = vmatpush1.msra.mxu0 0.0
    %3997 = vmatprep.subr.mxu0 0.0
    %3998 = vmatpush1.msra.mxu0 0.0
    %3999 = vmatprep.subr.mxu0 0.0
    %4000 = vmatpush1.msra.mxu0 0.0
    %4001 = vmatprep.subr.mxu0 0.0
    %4002 = vmatpush1.msra.mxu0 0.0
    %4003 = vmatprep.subr.mxu0 0.0
    %4004 = vmatpush1.msra.mxu0 0.0
    %4005 = vmatprep.subr.mxu0 0.0
    %4006 = vmatpush1.msra.mxu0 0.0
    %4007 = vmatprep.subr.mxu0 0.0
    %4008 = vmatpush1.msra.mxu0 0.0
    %4009 = vmatprep.subr.mxu0 0.0
    %4010 = vmatpush1.msra.mxu0 0.0
    %4011 = vmatprep.subr.mxu0 0.0
    %4012 = vmatpush1.msra.mxu0 0.0
    %4013 = vmatprep.subr.mxu0 0.0
    %4014 = vmatpush1.msra.mxu0 0.0
    %4015 = vmatprep.subr.mxu0 0.0
    %4016 = vmatpush1.msra.mxu0 0.0
    %4017 = vmatprep.subr.mxu0 0.0
    %4018 = vmatpush1.msra.mxu0 0.0
    %4019 = vmatprep.subr.mxu0 0.0
    %4020 = vmatpush1.msra.mxu0 0.0
    %4021 = vmatprep.subr.mxu0 0.0
    %4022 = vmatpush1.msra.mxu0 0.0
    %4023 = vmatprep.subr.mxu0 0.0
    %4024 = vmatpush1.msra.mxu0 0.0
    %4025 = vmatprep.subr.mxu0 0.0
    %4026 = vmatpush1.msra.mxu0 0.0
    %4027 = vmatprep.subr.mxu0 0.0
    %4028 = vmatpush1.msra.mxu0 0.0
    %4029 = vmatprep.subr.mxu0 0.0
    %4030 = vmatpush1.msra.mxu0 0.0
    %4031 = vmatprep.subr.mxu0 0.0
    %4032 = vmatpush1.msra.mxu0 0.0
    %4033 = vmatprep.subr.mxu0 0.0
    %4034 = vmatpush1.msra.mxu0 0.0
    %4035 = vmatprep.subr.mxu0 0.0
    %4036 = vmatpush1.msra.mxu0 0.0
    %4037 = vmatprep.subr.mxu0 0.0
    %4038 = vmatpush1.msra.mxu0 0.0
    %4039 = vmatprep.subr.mxu0 0.0
    %4040 = vmatpush1.msra.mxu0 0.0
    %4041 = vmatprep.subr.mxu0 0.0
    %4042 = vmatpush1.msra.mxu0 0.0
    %4043 = vmatprep.subr.mxu0 0.0
    %4044 = vmatpush1.msra.mxu0 0.0
    %4045 = vmatprep.subr.mxu0 0.0
    %4046 = vmatpush1.msra.mxu0 0.0
    %4047 = vmatprep.subr.mxu0 0.0
    %4048 = vmatpush1.msra.mxu0 0.0
    %4049 = vmatprep.subr.mxu0 0.0
    %4050 = vmatpush1.msra.mxu0 0.0
    %4051 = vmatprep.mubr.f32.mxu0 0.0
    %4052 = vmatmul.mubr.f32.gmra.mrb[0].mxu0 %v3422
    %v4053 = vpop.f32.mrb[0].mxu0
    %v4054 = vadd.f32 %v3985, %v4053
    %v4055 = vpop.f32.mrb[0].mxu0
    %4056 = vmatprep.mubr.f32.mxu0 0.0
    %4057 = vmatmul.mubr.f32.gmra.mrb[0].mxu0 %v3425
    %v4058 = vpop.f32.mrb[0].mxu0
    %v4059 = vadd.f32 %v3985, %v4058
    %v4060 = vpop.f32.mrb[0].mxu0
    %4061 = vmatprep.mubr.f32.mxu0 0.0
    %4062 = vmatmul.mubr.f32.gmra.mrb[0].mxu0 %v3428
    %v4063 = vpop.f32.mrb[0].mxu0
    %v4064 = vadd.f32 %v3985, %v4063
    %v4065 = vpop.f32.mrb[0].mxu0
    %4066 = vmatprep.mubr.f32.mxu0 0.0
    %4067 = vmatmul.mubr.f32.gmra.mrb[0].mxu0 %v3431
    %v4068 = vpop.f32.mrb[0].mxu0
    %v4069 = vadd.f32 %v3985, %v4068
    %v4070 = vpop.f32.mrb[0].mxu0
    %4071 = vdwg.mxu0
    %v4073 = vsel %vm711, %v3882, 0
    %v4076 = vsel %vm711, %v3887, 0
    %v4079 = vsel %vm711, %v3963, 0
    %v4082 = vsel %vm711, %v3968, 0
    %v4085 = vsel %vm711, %v3973, 0
    %v4088 = vsel %vm711, %v3978, 0
    %4090 = vmatprep.subr.mxu0 0.0
    %4091 = vmatpush1.xpose.msra.mxu0 %v4079
    %4092 = vmatprep.subr.mxu0 0.0
    %4093 = vmatpush1.xpose.msra.mxu0 %v4082
    %4094 = vmatprep.subr.mxu0 0.0
    %4095 = vmatpush1.xpose.msra.mxu0 %v4085
    %4096 = vmatprep.subr.mxu0 0.0
    %4097 = vmatpush1.xpose.msra.mxu0 %v4088
    %4098 = vmatprep.subr.mxu0 0.0
    %4099 = vmatpush1.xpose.msra.mxu0 0.0
    %4100 = vmatprep.subr.mxu0 0.0
    %4101 = vmatpush1.xpose.msra.mxu0 0.0
    %4102 = vmatprep.subr.mxu0 0.0
    %4103 = vmatpush1.xpose.msra.mxu0 0.0
    %4104 = vmatprep.subr.mxu0 0.0
    %4105 = vmatpush1.xpose.msra.mxu0 0.0
    %4106 = vmatprep.subr.mxu0 0.0
    %4107 = vmatpush1.xpose.msra.mxu0 0.0
    %4108 = vmatprep.subr.mxu0 0.0
    %4109 = vmatpush1.xpose.msra.mxu0 0.0
    %4110 = vmatprep.subr.mxu0 0.0
    %4111 = vmatpush1.xpose.msra.mxu0 0.0
    %4112 = vmatprep.subr.mxu0 0.0
    %4113 = vmatpush1.xpose.msra.mxu0 0.0
    %4114 = vmatprep.subr.mxu0 0.0
    %4115 = vmatpush1.xpose.msra.mxu0 0.0
    %4116 = vmatprep.subr.mxu0 0.0
    %4117 = vmatpush1.xpose.msra.mxu0 0.0
    %4118 = vmatprep.subr.mxu0 0.0
    %4119 = vmatpush1.xpose.msra.mxu0 0.0
    %4120 = vmatprep.subr.mxu0 0.0
    %4121 = vmatpush1.xpose.msra.mxu0 0.0
    %4122 = vmatprep.subr.mxu0 0.0
    %4123 = vmatpush1.xpose.msra.mxu0 0.0
    %4124 = vmatprep.subr.mxu0 0.0
    %4125 = vmatpush1.xpose.msra.mxu0 0.0
    %4126 = vmatprep.subr.mxu0 0.0
    %4127 = vmatpush1.xpose.msra.mxu0 0.0
    %4128 = vmatprep.subr.mxu0 0.0
    %4129 = vmatpush1.xpose.msra.mxu0 0.0
    %4130 = vmatprep.subr.mxu0 0.0
    %4131 = vmatpush1.xpose.msra.mxu0 0.0
    %4132 = vmatprep.subr.mxu0 0.0
    %4133 = vmatpush1.xpose.msra.mxu0 0.0
    %4134 = vmatprep.subr.mxu0 0.0
    %4135 = vmatpush1.xpose.msra.mxu0 0.0
    %4136 = vmatprep.subr.mxu0 0.0
    %4137 = vmatpush1.xpose.msra.mxu0 0.0
    %4138 = vmatprep.subr.mxu0 0.0
    %4139 = vmatpush1.xpose.msra.mxu0 0.0
    %4140 = vmatprep.subr.mxu0 0.0
    %4141 = vmatpush1.xpose.msra.mxu0 0.0
    %4142 = vmatprep.subr.mxu0 0.0
    %4143 = vmatpush1.xpose.msra.mxu0 0.0
    %4144 = vmatprep.subr.mxu0 0.0
    %4145 = vmatpush1.xpose.msra.mxu0 0.0
    %4146 = vmatprep.subr.mxu0 0.0
    %4147 = vmatpush1.xpose.msra.mxu0 0.0
    %4148 = vmatprep.subr.mxu0 0.0
    %4149 = vmatpush1.xpose.msra.mxu0 0.0
    %4150 = vmatprep.subr.mxu0 0.0
    %4151 = vmatpush1.xpose.msra.mxu0 0.0
    %4152 = vmatprep.subr.mxu0 0.0
    %4153 = vmatpush1.xpose.msra.mxu0 0.0
    %4154 = vmatprep.mubr.f32.mxu0 0.0
    %4155 = vmatmul.mubr.f32.gmra.mrb[0].mxu0 %v4073
    %v4156 = vpop.f32.mrb[0].mxu0
    %v4157 = vadd.f32 0.0, %v4156
    %v4158 = vpop.f32.mrb[0].mxu0
    %4159 = vmatprep.mubr.f32.mxu0 0.0
    %4160 = vmatmul.mubr.f32.gmra.mrb[0].mxu0 %v4076
    %v4161 = vpop.f32.mrb[0].mxu0
    %v4162 = vadd.f32 0.0, %v4161
    %v4163 = vpop.f32.mrb[0].mxu0
    %4164 = vdwg.mxu0
    %v4165 = vmul.f32 %v4157, 0.25
    %v4166 = vmul.f32 %v4162, 0.25
    %v4167 = vadd.f32 %v4165, %v257
    %v4168 = vadd.f32 %v4166, %v258
    %v4169 = vsel %vm431, %v4167, -inf
    %4170 = vmax.xlane.f32.xlu0 %v4169
    %v4171 = vpop.xlane.xlu0 %4170
    %v4172 = vsel %vm431, %v4168, -inf
    %4173 = vmax.xlane.f32.xlu0 %v4172
    %v4174 = vpop.xlane.xlu0 %4173
    %v4175 = vsub.f32 %v4167, %v4171
    %v4176 = vsub.f32 %v4168, %v4174
    %v4177 = vmul.f32 %v4175, 1.442695
    %v4178 = vpow.pop %v4177
    %v4179 = vmul.f32 %v4176, 1.442695
    %v4180 = vpow.pop %v4179
    %v4181 = vsel %vm431, %v4178, 0.0
    %4182 = vadd.xlane.f32.xlu0 %v4181
    %v4183 = vpop.xlane.xlu0 %4182
    %v4184 = vsel %vm431, %v4180, 0.0
    %4185 = vadd.xlane.f32.xlu0 %v4184
    %v4186 = vpop.xlane.xlu0 %4185
    %v4187 = vrcp.pop %v4183
    %v4188 = vrcp.pop %v4186
    %v4189 = vmul.f32 %v4178, %v4187
    %v4190 = vmul.f32 %v4180, %v4188
    %v4192 = vsel %vm431, %v4189, 0
    %v4195 = vsel %vm431, %v4190, 0
    %4197 = vmatprep.subr.mxu0 0.0
    %4198 = vmatpush1.msra.mxu0 %v4054
    %4199 = vmatprep.subr.mxu0 0.0
    %4200 = vmatpush1.msra.mxu0 %v4059
    %4201 = vmatprep.subr.mxu0 0.0
    %4202 = vmatpush1.msra.mxu0 %v4064
    %4203 = vmatprep.subr.mxu0 0.0
    %4204 = vmatpush1.msra.mxu0 %v4069
    %4205 = vmatprep.subr.mxu0 0.0
    %4206 = vmatpush1.msra.mxu0 0.0
    %4207 = vmatprep.subr.mxu0 0.0
    %4208 = vmatpush1.msra.mxu0 0.0
    %4209 = vmatprep.subr.mxu0 0.0
    %4210 = vmatpush1.msra.mxu0 0.0
    %4211 = vmatprep.subr.mxu0 0.0
    %4212 = vmatpush1.msra.mxu0 0.0
    %4213 = vmatprep.subr.mxu0 0.0
    %4214 = vmatpush1.msra.mxu0 0.0
    %4215 = vmatprep.subr.mxu0 0.0
    %4216 = vmatpush1.msra.mxu0 0.0
    %4217 = vmatprep.subr.mxu0 0.0
    %4218 = vmatpush1.msra.mxu0 0.0
    %4219 = vmatprep.subr.mxu0 0.0
    %4220 = vmatpush1.msra.mxu0 0.0
    %4221 = vmatprep.subr.mxu0 0.0
    %4222 = vmatpush1.msra.mxu0 0.0
    %4223 = vmatprep.subr.mxu0 0.0
    %4224 = vmatpush1.msra.mxu0 0.0
    %4225 = vmatprep.subr.mxu0 0.0
    %4226 = vmatpush1.msra.mxu0 0.0
    %4227 = vmatprep.subr.mxu0 0.0
    %4228 = vmatpush1.msra.mxu0 0.0
    %4229 = vmatprep.subr.mxu0 0.0
    %4230 = vmatpush1.msra.mxu0 0.0
    %4231 = vmatprep.subr.mxu0 0.0
    %4232 = vmatpush1.msra.mxu0 0.0
    %4233 = vmatprep.subr.mxu0 0.0
    %4234 = vmatpush1.msra.mxu0 0.0
    %4235 = vmatprep.subr.mxu0 0.0
    %4236 = vmatpush1.msra.mxu0 0.0
    %4237 = vmatprep.subr.mxu0 0.0
    %4238 = vmatpush1.msra.mxu0 0.0
    %4239 = vmatprep.subr.mxu0 0.0
    %4240 = vmatpush1.msra.mxu0 0.0
    %4241 = vmatprep.subr.mxu0 0.0
    %4242 = vmatpush1.msra.mxu0 0.0
    %4243 = vmatprep.subr.mxu0 0.0
    %4244 = vmatpush1.msra.mxu0 0.0
    %4245 = vmatprep.subr.mxu0 0.0
    %4246 = vmatpush1.msra.mxu0 0.0
    %4247 = vmatprep.subr.mxu0 0.0
    %4248 = vmatpush1.msra.mxu0 0.0
    %4249 = vmatprep.subr.mxu0 0.0
    %4250 = vmatpush1.msra.mxu0 0.0
    %4251 = vmatprep.subr.mxu0 0.0
    %4252 = vmatpush1.msra.mxu0 0.0
    %4253 = vmatprep.subr.mxu0 0.0
    %4254 = vmatpush1.msra.mxu0 0.0
    %4255 = vmatprep.subr.mxu0 0.0
    %4256 = vmatpush1.msra.mxu0 0.0
    %4257 = vmatprep.subr.mxu0 0.0
    %4258 = vmatpush1.msra.mxu0 0.0
    %4259 = vmatprep.subr.mxu0 0.0
    %4260 = vmatpush1.msra.mxu0 0.0
    %4261 = vmatprep.mubr.f32.mxu0 0.0
    %4262 = vmatmul.mubr.f32.gmra.mrb[0].mxu0 %v4192
    %v4263 = vpop.f32.mrb[0].mxu0
    %v4264 = vadd.f32 0.0, %v4263
    %v4265 = vpop.f32.mrb[0].mxu0
    %4266 = vmatprep.mubr.f32.mxu0 0.0
    %4267 = vmatmul.mubr.f32.gmra.mrb[0].mxu0 %v4195
    %v4268 = vpop.f32.mrb[0].mxu0
    %v4269 = vadd.f32 0.0, %v4268
    %v4270 = vpop.f32.mrb[0].mxu0
    %4271 = vdwg.mxu0
    %v4273 = vsel %vm711, %v4264, 0
    %v4276 = vsel %vm711, %v4269, 0
    %4278 = vmatprep.subr.mxu0 0.0
    %4279 = vmatpush1.msra.mxu0 %v3325
    %4280 = vmatprep.subr.mxu0 0.0
    %4281 = vmatpush1.msra.mxu0 %v3326
    %4282 = vmatprep.subr.mxu0 0.0
    %4283 = vmatpush1.msra.mxu0 0.0
    %4284 = vmatprep.subr.mxu0 0.0
    %4285 = vmatpush1.msra.mxu0 0.0
    %4286 = vmatprep.subr.mxu0 0.0
    %4287 = vmatpush1.msra.mxu0 0.0
    %4288 = vmatprep.subr.mxu0 0.0
    %4289 = vmatpush1.msra.mxu0 0.0
    %4290 = vmatprep.subr.mxu0 0.0
    %4291 = vmatpush1.msra.mxu0 0.0
    %4292 = vmatprep.subr.mxu0 0.0
    %4293 = vmatpush1.msra.mxu0 0.0
    %4294 = vmatprep.subr.mxu0 0.0
    %4295 = vmatpush1.msra.mxu0 0.0
    %4296 = vmatprep.subr.mxu0 0.0
    %4297 = vmatpush1.msra.mxu0 0.0
    %4298 = vmatprep.subr.mxu0 0.0
    %4299 = vmatpush1.msra.mxu0 0.0
    %4300 = vmatprep.subr.mxu0 0.0
    %4301 = vmatpush1.msra.mxu0 0.0
    %4302 = vmatprep.subr.mxu0 0.0
    %4303 = vmatpush1.msra.mxu0 0.0
    %4304 = vmatprep.subr.mxu0 0.0
    %4305 = vmatpush1.msra.mxu0 0.0
    %4306 = vmatprep.subr.mxu0 0.0
    %4307 = vmatpush1.msra.mxu0 0.0
    %4308 = vmatprep.subr.mxu0 0.0
    %4309 = vmatpush1.msra.mxu0 0.0
    %4310 = vmatprep.subr.mxu0 0.0
    %4311 = vmatpush1.msra.mxu0 0.0
    %4312 = vmatprep.subr.mxu0 0.0
    %4313 = vmatpush1.msra.mxu0 0.0
    %4314 = vmatprep.subr.mxu0 0.0
    %4315 = vmatpush1.msra.mxu0 0.0
    %4316 = vmatprep.subr.mxu0 0.0
    %4317 = vmatpush1.msra.mxu0 0.0
    %4318 = vmatprep.subr.mxu0 0.0
    %4319 = vmatpush1.msra.mxu0 0.0
    %4320 = vmatprep.subr.mxu0 0.0
    %4321 = vmatpush1.msra.mxu0 0.0
    %4322 = vmatprep.subr.mxu0 0.0
    %4323 = vmatpush1.msra.mxu0 0.0
    %4324 = vmatprep.subr.mxu0 0.0
    %4325 = vmatpush1.msra.mxu0 0.0
    %4326 = vmatprep.subr.mxu0 0.0
    %4327 = vmatpush1.msra.mxu0 0.0
    %4328 = vmatprep.subr.mxu0 0.0
    %4329 = vmatpush1.msra.mxu0 0.0
    %4330 = vmatprep.subr.mxu0 0.0
    %4331 = vmatpush1.msra.mxu0 0.0
    %4332 = vmatprep.subr.mxu0 0.0
    %4333 = vmatpush1.msra.mxu0 0.0
    %4334 = vmatprep.subr.mxu0 0.0
    %4335 = vmatpush1.msra.mxu0 0.0
    %4336 = vmatprep.subr.mxu0 0.0
    %4337 = vmatpush1.msra.mxu0 0.0
    %4338 = vmatprep.subr.mxu0 0.0
    %4339 = vmatpush1.msra.mxu0 0.0
    %4340 = vmatprep.subr.mxu0 0.0
    %4341 = vmatpush1.msra.mxu0 0.0
    %4342 = vmatprep.mubr.f32.mxu0 0.0
    %4343 = vmatmul.mubr.f32.gmra.mrb[0].mxu0 %v4273
    %v4344 = vpop.f32.mrb[0].mxu0
    %v4345 = vadd.f32 0.0, %v4344
    %v4346 = vpop.f32.mrb[0].mxu0
    %4347 = vmatprep.mubr.f32.mxu0 0.0
    %4348 = vmatmul.mubr.f32.gmra.mrb[0].mxu0 %v4276
    %v4349 = vpop.f32.mrb[0].mxu0
    %v4350 = vadd.f32 0.0, %v4349
    %v4351 = vpop.f32.mrb[0].mxu0
    %4352 = vdwg.mxu0
    %v4354 = vsel %vm711, %v3801, 0
    %v4357 = vsel %vm711, %v3806, 0
    %4359 = vmatprep.subr.mxu0 0.0
    %4360 = vmatpush1.msra.mxu0 %v3323
    %4361 = vmatprep.subr.mxu0 0.0
    %4362 = vmatpush1.msra.mxu0 %v3324
    %4363 = vmatprep.subr.mxu0 0.0
    %4364 = vmatpush1.msra.mxu0 0.0
    %4365 = vmatprep.subr.mxu0 0.0
    %4366 = vmatpush1.msra.mxu0 0.0
    %4367 = vmatprep.subr.mxu0 0.0
    %4368 = vmatpush1.msra.mxu0 0.0
    %4369 = vmatprep.subr.mxu0 0.0
    %4370 = vmatpush1.msra.mxu0 0.0
    %4371 = vmatprep.subr.mxu0 0.0
    %4372 = vmatpush1.msra.mxu0 0.0
    %4373 = vmatprep.subr.mxu0 0.0
    %4374 = vmatpush1.msra.mxu0 0.0
    %4375 = vmatprep.subr.mxu0 0.0
    %4376 = vmatpush1.msra.mxu0 0.0
    %4377 = vmatprep.subr.mxu0 0.0
    %4378 = vmatpush1.msra.mxu0 0.0
    %4379 = vmatprep.subr.mxu0 0.0
    %4380 = vmatpush1.msra.mxu0 0.0
    %4381 = vmatprep.subr.mxu0 0.0
    %4382 = vmatpush1.msra.mxu0 0.0
    %4383 = vmatprep.subr.mxu0 0.0
    %4384 = vmatpush1.msra.mxu0 0.0
    %4385 = vmatprep.subr.mxu0 0.0
    %4386 = vmatpush1.msra.mxu0 0.0
    %4387 = vmatprep.subr.mxu0 0.0
    %4388 = vmatpush1.msra.mxu0 0.0
    %4389 = vmatprep.subr.mxu0 0.0
    %4390 = vmatpush1.msra.mxu0 0.0
    %4391 = vmatprep.subr.mxu0 0.0
    %4392 = vmatpush1.msra.mxu0 0.0
    %4393 = vmatprep.subr.mxu0 0.0
    %4394 = vmatpush1.msra.mxu0 0.0
    %4395 = vmatprep.subr.mxu0 0.0
    %4396 = vmatpush1.msra.mxu0 0.0
    %4397 = vmatprep.subr.mxu0 0.0
    %4398 = vmatpush1.msra.mxu0 0.0
    %4399 = vmatprep.subr.mxu0 0.0
    %4400 = vmatpush1.msra.mxu0 0.0
    %4401 = vmatprep.subr.mxu0 0.0
    %4402 = vmatpush1.msra.mxu0 0.0
    %4403 = vmatprep.subr.mxu0 0.0
    %4404 = vmatpush1.msra.mxu0 0.0
    %4405 = vmatprep.subr.mxu0 0.0
    %4406 = vmatpush1.msra.mxu0 0.0
    %4407 = vmatprep.subr.mxu0 0.0
    %4408 = vmatpush1.msra.mxu0 0.0
    %4409 = vmatprep.subr.mxu0 0.0
    %4410 = vmatpush1.msra.mxu0 0.0
    %4411 = vmatprep.subr.mxu0 0.0
    %4412 = vmatpush1.msra.mxu0 0.0
    %4413 = vmatprep.subr.mxu0 0.0
    %4414 = vmatpush1.msra.mxu0 0.0
    %4415 = vmatprep.subr.mxu0 0.0
    %4416 = vmatpush1.msra.mxu0 0.0
    %4417 = vmatprep.subr.mxu0 0.0
    %4418 = vmatpush1.msra.mxu0 0.0
    %4419 = vmatprep.subr.mxu0 0.0
    %4420 = vmatpush1.msra.mxu0 0.0
    %4421 = vmatprep.subr.mxu0 0.0
    %4422 = vmatpush1.msra.mxu0 0.0
    %4423 = vmatprep.mubr.f32.mxu0 0.0
    %4424 = vmatmul.mubr.f32.gmra.mrb[0].mxu0 %v4354
    %v4425 = vpop.f32.mrb[0].mxu0
    %v4426 = vadd.f32 %v4345, %v4425
    %v4427 = vpop.f32.mrb[0].mxu0
    %4428 = vmatprep.mubr.f32.mxu0 0.0
    %4429 = vmatmul.mubr.f32.gmra.mrb[0].mxu0 %v4357
    %v4430 = vpop.f32.mrb[0].mxu0
    %v4431 = vadd.f32 %v4350, %v4430
    %v4432 = vpop.f32.mrb[0].mxu0
    %4433 = vdwg.mxu0
    %v4435 = vlaneseq
    %v4436 = vshrl.u32 %v4435, 7
    %v4437 = vsub.s32 0, %v4436
    %v4438 = vrot.slane %v3327, %v4437
    %v4440 = vadd.f32 %v4426, %v4438
    %v4441 = vadd.f32 %v4431, %v4438
    %v4442 = vadd.f32 %v3291, %v4440
    %v4443 = vadd.f32 %v3292, %v4441
    %v4444 = vsel %vm431, %v4442, 0.0
    %4445 = vadd.xlane.f32.xlu0 %v4444
    %v4446 = vpop.xlane.xlu0 %4445
    %v4447 = vsel %vm431, %v4443, 0.0
    %4448 = vadd.xlane.f32.xlu0 %v4447
    %v4449 = vpop.xlane.xlu0 %4448
    %v4450 = vmul.f32 %v4446, %v1721
    %v4451 = vmul.f32 %v4449, %v1721
    %v4452 = vsub.f32 %v4442, %v4450
    %v4453 = vsub.f32 %v4443, %v4451
    %v4454 = vmul.f32 %v4452, %v4452
    %v4455 = vmul.f32 %v4453, %v4453
    %v4456 = vsel %vm431, %v4454, 0.0
    %4457 = vadd.xlane.f32.xlu0 %v4456
    %v4458 = vpop.xlane.xlu0 %4457
    %v4459 = vsel %vm431, %v4455, 0.0
    %4460 = vadd.xlane.f32.xlu0 %v4459
    %v4461 = vpop.xlane.xlu0 %4460
    %v4462 = vmul.f32 %v4458, %v1721
    %v4463 = vmul.f32 %v4461, %v1721
    %v4464 = vadd.f32 %v4462, 1e-05
    %v4465 = vadd.f32 %v4463, 1e-05
    %v4466 = vrsqrt.pop %v4464
    %v4467 = vrsqrt.pop %v4465
    %v4468 = vmul.f32 %v4452, %v4466
    %v4469 = vmul.f32 %v4453, %v4467
    %v4471 = vlaneseq
    %v4472 = vshrl.u32 %v4471, 7
    %v4473 = vsub.s32 0, %v4472
    %v4474 = vrot.slane %v2157, %v4473
    %v4476 = vmul.f32 %v4468, %v4474
    %v4477 = vmul.f32 %v4469, %v4474
    %v4479 = vlaneseq
    %v4480 = vshrl.u32 %v4479, 7
    %v4481 = vsub.s32 0, %v4480
    %v4482 = vrot.slane %v2161, %v4481
    %v4484 = vadd.f32 %v4476, %v4482
    %v4485 = vadd.f32 %v4477, %v4482
    %v4486 = vld [vmem:[%s49] sm:$0xff]
    %v4487 = vld [vmem:[%s49 + $0x8] sm:$0xff]
    %v4488 = vld [vmem:[%s49 + $0x10] sm:$0xff]
    %v4489 = vld [vmem:[%s49 + $0x18] sm:$0xff]
    %v4490 = vld [vmem:[%s51] sm:$0x1]
    %v4491 = vld [vmem:[%s53] sm:$0xff]
    %v4492 = vld [vmem:[%s53 + $0x8] sm:$0xff]
    %v4493 = vld [vmem:[%s53 + $0x10] sm:$0xff]
    %v4494 = vld [vmem:[%s53 + $0x18] sm:$0xff]
    %v4495 = vld [vmem:[%s53 + $0x20] sm:$0xff]
    %v4496 = vld [vmem:[%s53 + $0x28] sm:$0xff]
    %v4497 = vld [vmem:[%s53 + $0x30] sm:$0xff]
    %v4498 = vld [vmem:[%s53 + $0x38] sm:$0xff]
    %v4499 = vld [vmem:[%s55] sm:$0x1]
    %v4501 = vlaneseq
    %v4502 = vshrl.u32 %v4501, 7
    %v4503 = vsub.s32 0, %v4502
    %v4504 = vrot.slane %v4490, %v4503
    %v4507 = vsel %vm431, %v4484, 0
    %v4510 = vsel %vm431, %v4485, 0
    %4512 = vmatprep.subr.mxu0 0.0
    %4513 = vmatpush1.msra.mxu0 %v4486
    %4514 = vmatprep.subr.mxu0 0.0
    %4515 = vmatpush1.msra.mxu0 %v4487
    %4516 = vmatprep.subr.mxu0 0.0
    %4517 = vmatpush1.msra.mxu0 %v4488
    %4518 = vmatprep.subr.mxu0 0.0
    %4519 = vmatpush1.msra.mxu0 %v4489
    %4520 = vmatprep.subr.mxu0 0.0
    %4521 = vmatpush1.msra.mxu0 0.0
    %4522 = vmatprep.subr.mxu0 0.0
    %4523 = vmatpush1.msra.mxu0 0.0
    %4524 = vmatprep.subr.mxu0 0.0
    %4525 = vmatpush1.msra.mxu0 0.0
    %4526 = vmatprep.subr.mxu0 0.0
    %4527 = vmatpush1.msra.mxu0 0.0
    %4528 = vmatprep.subr.mxu0 0.0
    %4529 = vmatpush1.msra.mxu0 0.0
    %4530 = vmatprep.subr.mxu0 0.0
    %4531 = vmatpush1.msra.mxu0 0.0
    %4532 = vmatprep.subr.mxu0 0.0
    %4533 = vmatpush1.msra.mxu0 0.0
    %4534 = vmatprep.subr.mxu0 0.0
    %4535 = vmatpush1.msra.mxu0 0.0
    %4536 = vmatprep.subr.mxu0 0.0
    %4537 = vmatpush1.msra.mxu0 0.0
    %4538 = vmatprep.subr.mxu0 0.0
    %4539 = vmatpush1.msra.mxu0 0.0
    %4540 = vmatprep.subr.mxu0 0.0
    %4541 = vmatpush1.msra.mxu0 0.0
    %4542 = vmatprep.subr.mxu0 0.0
    %4543 = vmatpush1.msra.mxu0 0.0
    %4544 = vmatprep.subr.mxu0 0.0
    %4545 = vmatpush1.msra.mxu0 0.0
    %4546 = vmatprep.subr.mxu0 0.0
    %4547 = vmatpush1.msra.mxu0 0.0
    %4548 = vmatprep.subr.mxu0 0.0
    %4549 = vmatpush1.msra.mxu0 0.0
    %4550 = vmatprep.subr.mxu0 0.0
    %4551 = vmatpush1.msra.mxu0 0.0
    %4552 = vmatprep.subr.mxu0 0.0
    %4553 = vmatpush1.msra.mxu0 0.0
    %4554 = vmatprep.subr.mxu0 0.0
    %4555 = vmatpush1.msra.mxu0 0.0
    %4556 = vmatprep.subr.mxu0 0.0
    %4557 = vmatpush1.msra.mxu0 0.0
    %4558 = vmatprep.subr.mxu0 0.0
    %4559 = vmatpush1.msra.mxu0 0.0
    %4560 = vmatprep.subr.mxu0 0.0
    %4561 = vmatpush1.msra.mxu0 0.0
    %4562 = vmatprep.subr.mxu0 0.0
    %4563 = vmatpush1.msra.mxu0 0.0
    %4564 = vmatprep.subr.mxu0 0.0
    %4565 = vmatpush1.msra.mxu0 0.0
    %4566 = vmatprep.subr.mxu0 0.0
    %4567 = vmatpush1.msra.mxu0 0.0
    %4568 = vmatprep.subr.mxu0 0.0
    %4569 = vmatpush1.msra.mxu0 0.0
    %4570 = vmatprep.subr.mxu0 0.0
    %4571 = vmatpush1.msra.mxu0 0.0
    %4572 = vmatprep.subr.mxu0 0.0
    %4573 = vmatpush1.msra.mxu0 0.0
    %4574 = vmatprep.subr.mxu0 0.0
    %4575 = vmatpush1.msra.mxu0 0.0
    %4576 = vmatprep.mubr.f32.mxu0 0.0
    %4577 = vmatmul.mubr.f32.gmra.mrb[0].mxu0 %v4507
    %v4578 = vpop.f32.mrb[0].mxu0
    %v4579 = vadd.f32 %v4504, %v4578
    %v4580 = vpop.f32.mrb[0].mxu0
    %4581 = vmatprep.mubr.f32.mxu0 0.0
    %4582 = vmatmul.mubr.f32.gmra.mrb[0].mxu0 %v4510
    %v4583 = vpop.f32.mrb[0].mxu0
    %v4584 = vadd.f32 %v4504, %v4583
    %v4585 = vpop.f32.mrb[0].mxu0
    %4586 = vdwg.mxu0
    %v4587 = vmax.f32 %v4579, 0.0
    %v4588 = vmax.f32 %v4584, 0.0
    %v4590 = vlaneseq
    %v4591 = vshrl.u32 %v4590, 7
    %v4592 = vsub.s32 0, %v4591
    %v4593 = vrot.slane %v4499, %v4592
    %v4596 = vsel %vm278, %v4587, 0
    %v4599 = vsel %vm278, %v4588, 0
    %4601 = vmatprep.subr.mxu0 0.0
    %4602 = vmatpush1.msra.mxu0 %v4491
    %4603 = vmatprep.subr.mxu0 0.0
    %4604 = vmatpush1.msra.mxu0 %v4492
    %4605 = vmatprep.subr.mxu0 0.0
    %4606 = vmatpush1.msra.mxu0 %v4493
    %4607 = vmatprep.subr.mxu0 0.0
    %4608 = vmatpush1.msra.mxu0 %v4494
    %4609 = vmatprep.subr.mxu0 0.0
    %4610 = vmatpush1.msra.mxu0 %v4495
    %4611 = vmatprep.subr.mxu0 0.0
    %4612 = vmatpush1.msra.mxu0 %v4496
    %4613 = vmatprep.subr.mxu0 0.0
    %4614 = vmatpush1.msra.mxu0 %v4497
    %4615 = vmatprep.subr.mxu0 0.0
    %4616 = vmatpush1.msra.mxu0 %v4498
    %4617 = vmatprep.subr.mxu0 0.0
    %4618 = vmatpush1.msra.mxu0 0.0
    %4619 = vmatprep.subr.mxu0 0.0
    %4620 = vmatpush1.msra.mxu0 0.0
    %4621 = vmatprep.subr.mxu0 0.0
    %4622 = vmatpush1.msra.mxu0 0.0
    %4623 = vmatprep.subr.mxu0 0.0
    %4624 = vmatpush1.msra.mxu0 0.0
    %4625 = vmatprep.subr.mxu0 0.0
    %4626 = vmatpush1.msra.mxu0 0.0
    %4627 = vmatprep.subr.mxu0 0.0
    %4628 = vmatpush1.msra.mxu0 0.0
    %4629 = vmatprep.subr.mxu0 0.0
    %4630 = vmatpush1.msra.mxu0 0.0
    %4631 = vmatprep.subr.mxu0 0.0
    %4632 = vmatpush1.msra.mxu0 0.0
    %4633 = vmatprep.subr.mxu0 0.0
    %4634 = vmatpush1.msra.mxu0 0.0
    %4635 = vmatprep.subr.mxu0 0.0
    %4636 = vmatpush1.msra.mxu0 0.0
    %4637 = vmatprep.subr.mxu0 0.0
    %4638 = vmatpush1.msra.mxu0 0.0
    %4639 = vmatprep.subr.mxu0 0.0
    %4640 = vmatpush1.msra.mxu0 0.0
    %4641 = vmatprep.subr.mxu0 0.0
    %4642 = vmatpush1.msra.mxu0 0.0
    %4643 = vmatprep.subr.mxu0 0.0
    %4644 = vmatpush1.msra.mxu0 0.0
    %4645 = vmatprep.subr.mxu0 0.0
    %4646 = vmatpush1.msra.mxu0 0.0
    %4647 = vmatprep.subr.mxu0 0.0
    %4648 = vmatpush1.msra.mxu0 0.0
    %4649 = vmatprep.subr.mxu0 0.0
    %4650 = vmatpush1.msra.mxu0 0.0
    %4651 = vmatprep.subr.mxu0 0.0
    %4652 = vmatpush1.msra.mxu0 0.0
    %4653 = vmatprep.subr.mxu0 0.0
    %4654 = vmatpush1.msra.mxu0 0.0
    %4655 = vmatprep.subr.mxu0 0.0
    %4656 = vmatpush1.msra.mxu0 0.0
    %4657 = vmatprep.subr.mxu0 0.0
    %4658 = vmatpush1.msra.mxu0 0.0
    %4659 = vmatprep.subr.mxu0 0.0
    %4660 = vmatpush1.msra.mxu0 0.0
    %4661 = vmatprep.subr.mxu0 0.0
    %4662 = vmatpush1.msra.mxu0 0.0
    %4663 = vmatprep.subr.mxu0 0.0
    %4664 = vmatpush1.msra.mxu0 0.0
    %4665 = vmatprep.mubr.f32.mxu0 0.0
    %4666 = vmatmul.mubr.f32.gmra.mrb[0].mxu0 %v4596
    %v4667 = vpop.f32.mrb[0].mxu0
    %v4668 = vadd.f32 %v4593, %v4667
    %v4669 = vpop.f32.mrb[0].mxu0
    %4670 = vmatprep.mubr.f32.mxu0 0.0
    %4671 = vmatmul.mubr.f32.gmra.mrb[0].mxu0 %v4599
    %v4672 = vpop.f32.mrb[0].mxu0
    %v4673 = vadd.f32 %v4593, %v4672
    %v4674 = vpop.f32.mrb[0].mxu0
    %4675 = vdwg.mxu0
    %v4676 = vadd.f32 %v4484, %v4668
    %v4677 = vadd.f32 %v4485, %v4673
    %v4678 = vsel %vm431, %v4676, 0.0
    %4679 = vadd.xlane.f32.xlu0 %v4678
    %v4680 = vpop.xlane.xlu0 %4679
    %v4681 = vsel %vm431, %v4677, 0.0
    %4682 = vadd.xlane.f32.xlu0 %v4681
    %v4683 = vpop.xlane.xlu0 %4682
    %v4684 = vmul.f32 %v4680, %v1721
    %v4685 = vmul.f32 %v4683, %v1721
    %v4686 = vsub.f32 %v4676, %v4684
    %v4687 = vsub.f32 %v4677, %v4685
    %v4688 = vmul.f32 %v4686, %v4686
    %v4689 = vmul.f32 %v4687, %v4687
    %v4690 = vsel %vm431, %v4688, 0.0
    %4691 = vadd.xlane.f32.xlu0 %v4690
    %v4692 = vpop.xlane.xlu0 %4691
    %v4693 = vsel %vm431, %v4689, 0.0
    %4694 = vadd.xlane.f32.xlu0 %v4693
    %v4695 = vpop.xlane.xlu0 %4694
    %v4696 = vmul.f32 %v4692, %v1721
    %v4697 = vmul.f32 %v4695, %v1721
    %v4698 = vadd.f32 %v4696, 1e-05
    %v4699 = vadd.f32 %v4697, 1e-05
    %v4700 = vrsqrt.pop %v4698
    %v4701 = vrsqrt.pop %v4699
    %v4702 = vmul.f32 %v4686, %v4700
    %v4703 = vmul.f32 %v4687, %v4701
    %v4705 = vlaneseq
    %v4706 = vshrl.u32 %v4705, 7
    %v4707 = vsub.s32 0, %v4706
    %v4708 = vrot.slane %v2158, %v4707
    %v4710 = vmul.f32 %v4702, %v4708
    %v4711 = vmul.f32 %v4703, %v4708
    %v4713 = vlaneseq
    %v4714 = vshrl.u32 %v4713, 7
    %v4715 = vsub.s32 0, %v4714
    %v4716 = vrot.slane %v2162, %v4715
    %v4718 = vadd.f32 %v4710, %v4716
    %v4719 = vadd.f32 %v4711, %v4716
    %v4720 = vsel %vm431, %v4718, 0.0
    %4721 = vadd.xlane.f32.xlu0 %v4720
    %v4722 = vpop.xlane.xlu0 %4721
    %v4723 = vsel %vm431, %v4719, 0.0
    %4724 = vadd.xlane.f32.xlu0 %v4723
    %v4725 = vpop.xlane.xlu0 %4724
    %v4726 = vmul.f32 %v4722, %v1721
    %v4727 = vmul.f32 %v4725, %v1721
    %v4728 = vsub.f32 %v4718, %v4726
    %v4729 = vsub.f32 %v4719, %v4727
    %v4730 = vmul.f32 %v4728, %v4728
    %v4731 = vmul.f32 %v4729, %v4729
    %v4732 = vsel %vm431, %v4730, 0.0
    %4733 = vadd.xlane.f32.xlu0 %v4732
    %v4734 = vpop.xlane.xlu0 %4733
    %v4735 = vsel %vm431, %v4731, 0.0
    %4736 = vadd.xlane.f32.xlu0 %v4735
    %v4737 = vpop.xlane.xlu0 %4736
    %v4738 = vmul.f32 %v4734, %v1721
    %v4739 = vmul.f32 %v4737, %v1721
    %v4740 = vadd.f32 %v4738, 1e-05
    %v4741 = vadd.f32 %v4739, 1e-05
    %v4742 = vrsqrt.pop %v4740
    %v4743 = vrsqrt.pop %v4741
    %v4744 = vmul.f32 %v4728, %v4742
    %v4745 = vmul.f32 %v4729, %v4743
    %v4747 = vlaneseq
    %v4748 = vshrl.u32 %v4747, 7
    %v4749 = vsub.s32 0, %v4748
    %v4750 = vrot.slane %v2159, %v4749
    %v4752 = vmul.f32 %v4744, %v4750
    %v4753 = vmul.f32 %v4745, %v4750
    %v4755 = vlaneseq
    %v4756 = vshrl.u32 %v4755, 7
    %v4757 = vsub.s32 0, %v4756
    %v4758 = vrot.slane %v2163, %v4757
    %v4760 = vadd.f32 %v4752, %v4758
    %v4761 = vadd.f32 %v4753, %v4758
    %v4762 = vld [vmem:[%s61] sm:$0xff]
    %v4763 = vld [vmem:[%s61 + $0x8] sm:$0xff]
    %v4764 = vld [vmem:[%s61 + $0x10] sm:$0xff]
    %v4765 = vld [vmem:[%s61 + $0x18] sm:$0xff]
    %v4766 = vld [vmem:[%s63] sm:$0x1]
    %v4768 = vlaneseq
    %v4769 = vshrl.u32 %v4768, 7
    %v4770 = vsub.s32 0, %v4769
    %v4771 = vrot.slane %v4766, %v4770
    %v4774 = vsel %vm431, %v4760, 0
    %v4777 = vsel %vm431, %v4761, 0
    %4779 = vmatprep.subr.mxu0 0.0
    %4780 = vmatpush1.msra.mxu0 %v4762
    %4781 = vmatprep.subr.mxu0 0.0
    %4782 = vmatpush1.msra.mxu0 %v4763
    %4783 = vmatprep.subr.mxu0 0.0
    %4784 = vmatpush1.msra.mxu0 %v4764
    %4785 = vmatprep.subr.mxu0 0.0
    %4786 = vmatpush1.msra.mxu0 %v4765
    %4787 = vmatprep.subr.mxu0 0.0
    %4788 = vmatpush1.msra.mxu0 0.0
    %4789 = vmatprep.subr.mxu0 0.0
    %4790 = vmatpush1.msra.mxu0 0.0
    %4791 = vmatprep.subr.mxu0 0.0
    %4792 = vmatpush1.msra.mxu0 0.0
    %4793 = vmatprep.subr.mxu0 0.0
    %4794 = vmatpush1.msra.mxu0 0.0
    %4795 = vmatprep.subr.mxu0 0.0
    %4796 = vmatpush1.msra.mxu0 0.0
    %4797 = vmatprep.subr.mxu0 0.0
    %4798 = vmatpush1.msra.mxu0 0.0
    %4799 = vmatprep.subr.mxu0 0.0
    %4800 = vmatpush1.msra.mxu0 0.0
    %4801 = vmatprep.subr.mxu0 0.0
    %4802 = vmatpush1.msra.mxu0 0.0
    %4803 = vmatprep.subr.mxu0 0.0
    %4804 = vmatpush1.msra.mxu0 0.0
    %4805 = vmatprep.subr.mxu0 0.0
    %4806 = vmatpush1.msra.mxu0 0.0
    %4807 = vmatprep.subr.mxu0 0.0
    %4808 = vmatpush1.msra.mxu0 0.0
    %4809 = vmatprep.subr.mxu0 0.0
    %4810 = vmatpush1.msra.mxu0 0.0
    %4811 = vmatprep.subr.mxu0 0.0
    %4812 = vmatpush1.msra.mxu0 0.0
    %4813 = vmatprep.subr.mxu0 0.0
    %4814 = vmatpush1.msra.mxu0 0.0
    %4815 = vmatprep.subr.mxu0 0.0
    %4816 = vmatpush1.msra.mxu0 0.0
    %4817 = vmatprep.subr.mxu0 0.0
    %4818 = vmatpush1.msra.mxu0 0.0
    %4819 = vmatprep.subr.mxu0 0.0
    %4820 = vmatpush1.msra.mxu0 0.0
    %4821 = vmatprep.subr.mxu0 0.0
    %4822 = vmatpush1.msra.mxu0 0.0
    %4823 = vmatprep.subr.mxu0 0.0
    %4824 = vmatpush1.msra.mxu0 0.0
    %4825 = vmatprep.subr.mxu0 0.0
    %4826 = vmatpush1.msra.mxu0 0.0
    %4827 = vmatprep.subr.mxu0 0.0
    %4828 = vmatpush1.msra.mxu0 0.0
    %4829 = vmatprep.subr.mxu0 0.0
    %4830 = vmatpush1.msra.mxu0 0.0
    %4831 = vmatprep.subr.mxu0 0.0
    %4832 = vmatpush1.msra.mxu0 0.0
    %4833 = vmatprep.subr.mxu0 0.0
    %4834 = vmatpush1.msra.mxu0 0.0
    %4835 = vmatprep.subr.mxu0 0.0
    %4836 = vmatpush1.msra.mxu0 0.0
    %4837 = vmatprep.subr.mxu0 0.0
    %4838 = vmatpush1.msra.mxu0 0.0
    %4839 = vmatprep.subr.mxu0 0.0
    %4840 = vmatpush1.msra.mxu0 0.0
    %4841 = vmatprep.subr.mxu0 0.0
    %4842 = vmatpush1.msra.mxu0 0.0
    %4843 = vmatprep.mubr.f32.mxu0 0.0
    %4844 = vmatmul.mubr.f32.gmra.mrb[0].mxu0 %v4774
    %v4845 = vpop.f32.mrb[0].mxu0
    %v4846 = vadd.f32 %v4771, %v4845
    %v4847 = vpop.f32.mrb[0].mxu0
    %4848 = vmatprep.mubr.f32.mxu0 0.0
    %4849 = vmatmul.mubr.f32.gmra.mrb[0].mxu0 %v4777
    %v4850 = vpop.f32.mrb[0].mxu0
    %v4851 = vadd.f32 %v4771, %v4850
    %v4852 = vpop.f32.mrb[0].mxu0
    %4853 = vdwg.mxu0
    %vm4854 = vcmask 162816
    %4855 = vst.msk [vmem:[#allocation5] sm:$0xff] %vm4854, %v4846
    %4856 = vst.msk [vmem:[#allocation5 + $0x8] sm:$0xff] %vm4854, %v4851
    // Predicated region
    $region134: #{tpu_custom_call.1} parent=1 // pred_check
      _
    $region135: #{tpu_custom_call.1} parent=1 // pred_check_branch
      %4858 = sbr.rel (0) target = $region137
    $region136: #{tpu_custom_call.1} parent=1 // pred_region
      %s4860 = ssub.s32 256, 256
      %4861 = vsyncadd [#allocation3], %s4860
      %s4862 = sshll.u32 [#allocation5], 4
      %s4863 = int_to_ptr.vmem [resolvable:$true] %s4862
      %4868 = dma.vmem_to_hbm [thread:$0]  %s4863, 256, %s65, [#allocation3], 128, 128, 8
    $region137: #{tpu_custom_call.1} parent=1 // pred_fallthru
      _
    // Predicated region
    $region138: #{tpu_custom_call.1} parent=1 // pred_check
      _
    $region139: #{tpu_custom_call.1} parent=1 // pred_check_branch
      %4870 = sbr.rel (0) target = $region141
    $region140: #{tpu_custom_call.1} parent=1 // pred_region
      %4871 = dma.done [#allocation3], 256
    $region141: #{tpu_custom_call.1} parent=1 // pred_fallthru
      _
    %4872 = vsyncpa [#allocation3], 1
    %4873 = vsyncpa [#allocation4], 1

</llo_original>
